<compile_context>
chip_gen: v5e
topology: v5e:2x2
jax: 0.10.0
libtpu: 0.0.40
codegen_flags: <defaults>
</compile_context>

<pallas_src>
import functools
import math

import jax
import jax.numpy as jnp
from jax import lax
from jax.experimental import pallas as pl
from jax.experimental.pallas import tpu as pltpu

LN_EPS = 1e-5


def _layernorm(x, w, b):
    # x: (R, C) float32, w/b: (1, C) float32
    mu = jnp.mean(x, axis=-1, keepdims=True)
    var = jnp.mean((x - mu) ** 2, axis=-1, keepdims=True)
    return (x - mu) * lax.rsqrt(var + LN_EPS) * w + b


def _gelu_exact(x):
    # torch.nn.GELU() default (erf-based, exact), in f32.
    return 0.5 * x * (1.0 + lax.erf(x / math.sqrt(2.0)))


def attention_block_kernel(
    x_ref,
    ln1_w_ref, ln1_b_ref,
    wqkv_ref, bqkv_ref,
    wprojh_ref, bproj_ref,
    ln2_w_ref, ln2_b_ref,
    w1_ref, b1_ref,
    w2_ref, b2_ref,
    o_ref,
    *, block_b, seq_len, num_heads, head_dim, scale, kv_chunk, compute_dtype,
):
    Bb, T, H, d = block_b, seq_len, num_heads, head_dim
    C = H * d
    R = Bb * T
    G = H * Bb
    cdt = compute_dtype  # MXU operand dtype (bf16); accumulation stays f32

    x = x_ref[...].astype(jnp.float32)                                   # (R, C)

    # ---------------- Attention sub-block ----------------
    h = _layernorm(x, ln1_w_ref[...], ln1_b_ref[...])                    # (R, C) f32
    qkv = jnp.dot(h.astype(cdt), wqkv_ref[...],
                  preferred_element_type=jnp.float32) + bqkv_ref[...]    # (R, 3C) f32

    q = qkv[:, 0 * C:1 * C] * scale     # fold softmax scale into q once (f32)
    k = qkv[:, 1 * C:2 * C]
    v = qkv[:, 2 * C:3 * C]

    def split_heads(z):
        # (R, C) -> (H*Bb, T, d), group index g = h*Bb + b (head-major).
        # TODO(synk): for production d >= 64 use a lane-aligned reshape/einshape;
        # at d=8 static lane slices are the reliably-lowering path.
        heads = [z[:, hh * d:(hh + 1) * d].reshape(Bb, T, d) for hh in range(H)]
        return jnp.stack(heads, axis=0).reshape(G, T, d)

    qh = split_heads(q).astype(cdt)
    kh = split_heads(k).astype(cdt)
    vh = split_heads(v).astype(cdt)

    # Flash-style online softmax over KV chunks: score tile capped at (G, T, kv_chunk).
    m_i = jnp.full((G, T, 1), -jnp.inf, jnp.float32)
    l_i = jnp.zeros((G, T, 1), jnp.float32)
    acc = jnp.zeros((G, T, d), jnp.float32)
    num_chunks = T // kv_chunk
    for ci in range(num_chunks):                     # static unroll (1 chunk at demo T)
        k_c = kh[:, ci * kv_chunk:(ci + 1) * kv_chunk, :]
        v_c = vh[:, ci * kv_chunk:(ci + 1) * kv_chunk, :]
        s = jnp.einsum('gqd,gkd->gqk', qh, k_c,
                       preferred_element_type=jnp.float32)       # (G, T, kv_chunk) f32
        m_new = jnp.maximum(m_i, jnp.max(s, axis=-1, keepdims=True))
        alpha = jnp.exp(m_i - m_new)
        p = jnp.exp(s - m_new)
        l_i = alpha * l_i + jnp.sum(p, axis=-1, keepdims=True)
        acc = alpha * acc + jnp.einsum('gqk,gkd->gqd', p.astype(cdt), v_c,
                                       preferred_element_type=jnp.float32)
        m_i = m_new
    # approx=True would put the divide on the EUP slot; kept exact for the tight check.
    a = acc * pl.reciprocal(l_i, approx=False)                   # (G, T, d) f32

    # Head merge folded into the output projection: one batched per-head matmul on
    # the MXU + a leading-axis sum (no lane-dim concatenation / copies).
    a = a.reshape(H, R, d).astype(cdt)                           # (H, R, d)
    proj = jnp.einsum('hrd,hdc->hrc', a, wprojh_ref[...],
                      preferred_element_type=jnp.float32)        # (H, R, C) f32
    attn = jnp.sum(proj, axis=0) + bproj_ref[...]                # (R, C) f32
    x1 = x + attn                                                # residual

    # ---------------- MLP sub-block ----------------
    h2 = _layernorm(x1, ln2_w_ref[...], ln2_b_ref[...])
    m = jnp.dot(h2.astype(cdt), w1_ref[...],
                preferred_element_type=jnp.float32) + b1_ref[...]
    m = _gelu_exact(m)
    m = jnp.dot(m.astype(cdt), w2_ref[...],
                preferred_element_type=jnp.float32) + b2_ref[...]

    o_ref[...] = (x1 + m).astype(o_ref.dtype)


def attention_block(x, params, *, num_heads, head_dim, attn_temp=1.0,
                    block_b=None, compute_dtype=jnp.bfloat16):
    """x: (B, T, C) float32. params: weights pre-transposed to (in, out) layout."""
    B, T, C = x.shape
    assert C == num_heads * head_dim
    scale = (head_dim ** -0.5) / attn_temp

    # Rows per grid step: ~512 keeps MXU/VPU tiles full (sweet spot 512-1024 on
    # v5e/v6e, 256-512 on v7x), but force >= 2 grid steps whenever B >= 2 so the
    # "parallel" axis can shard across v7x's two TensorCores.
    if block_b is None:
        block_b = max(1, min(B, 512 // max(T, 1)))
        if B >= 2:
            block_b = max(1, min(block_b, B // 2))
    while B % block_b:
        block_b -= 1
    rows = block_b * T
    num_blocks = B // block_b

    kv_chunk = min(T, 512)
    while T % kv_chunk:
        kv_chunk -= 1

    wd = compute_dtype
    # Matmul weights pre-cast to bf16 in the wrapper (halves weight VMEM/HBM bytes,
    # MXU-native); LayerNorm params and biases stay f32 (added to f32 accumulators).
    weight_args = (
        params["ln1_w"], params["ln1_b"],
        params["wqkv"].astype(wd), params["bqkv"],
        params["wproj"].reshape(num_heads, head_dim, C).astype(wd), params["bproj"],
        params["ln2_w"], params["ln2_b"],
        params["w1"].astype(wd), params["b1"],
        params["w2"].astype(wd), params["b2"],
    )

    kernel = functools.partial(
        attention_block_kernel,
        block_b=block_b, seq_len=T, num_heads=num_heads, head_dim=head_dim,
        scale=scale, kv_chunk=kv_chunk, compute_dtype=wd,
    )

    x_flat = x.reshape(B * T, C)     # row-flatten in the wrapper (free in XLA)

    # Explicit scoped-VMEM budget sized from the chosen block (generous margin),
    # clamped to stay inside every generation's physical VMEM (v7x: 64 MiB).
    weight_bytes = sum(int(w.size) * w.dtype.itemsize for w in weight_args)
    act_bytes = rows * C * 4 * 16
    score_bytes = num_heads * block_b * T * kv_chunk * 4 * 2
    vmem_limit = int(min(64 * 1024 * 1024,
                         max(16 * 1024 * 1024,
                             2 * (weight_bytes + act_bytes + score_bytes))))

    def make_call(single_buffer_weights):
        def wspec(shape):
            index_map = lambda i: (0,) * len(shape)
            if single_buffer_weights and hasattr(pl, "Buffered"):
                try:
                    # Constant index map -> the block never changes; Buffered(1)
                    # halves weight VMEM vs. the default double-buffering.
                    return pl.BlockSpec(shape, index_map, pipeline_mode=pl.Buffered(1))
                except TypeError:
                    pass
            return pl.BlockSpec(shape, index_map)

        in_specs = [pl.BlockSpec((rows, C), lambda i: (i, 0))]
        in_specs += [wspec(w.shape) for w in weight_args]
        return pl.pallas_call(
            kernel,
            out_shape=jax.ShapeDtypeStruct((B * T, C), x.dtype),
            grid=(num_blocks,),
            in_specs=in_specs,
            out_specs=pl.BlockSpec((rows, C), lambda i: (i, 0)),
            compiler_params=pltpu.CompilerParams(
                dimension_semantics=("parallel",),
                vmem_limit_bytes=vmem_limit),
        )

    try:
        out_flat = make_call(single_buffer_weights=True)(x_flat, *weight_args)
    except Exception:
        # Fallback for jax builds that reject pipeline_mode / Buffered(1): identical
        # semantics, default double-buffered weights.
        out_flat = make_call(single_buffer_weights=False)(x_flat, *weight_args)

    return out_flat.reshape(B, T, C)


# ----------------------------- reference (pure JAX) -----------------------------
def attention_block_ref(x, params, *, num_heads, head_dim, attn_temp=1.0,
                        compute_dtype=jnp.float32):
    """Pure-JAX reference. With compute_dtype=bf16 it mirrors the kernel's
    bf16-operand / f32-accumulate dot sites; with f32 it is the exact module math."""
    B, T, C = x.shape
    H, d = num_heads, head_dim
    scale = (head_dim ** -0.5) / attn_temp
    wd = compute_dtype

    def ln(z, w, b):
        mu = jnp.mean(z, axis=-1, keepdims=True)
        var = jnp.mean((z - mu) ** 2, axis=-1, keepdims=True)
        return (z - mu) * lax.rsqrt(var + LN_EPS) * w + b

    def mm(a, w):
        return jnp.dot(a.astype(wd), w.astype(wd), preferred_element_type=jnp.float32)

    h = ln(x, params["ln1_w"], params["ln1_b"])
    qkv = mm(h, params["wqkv"]) + params["bqkv"]                        # (B, T, 3C) f32
    qkv = qkv.reshape(B, T, 3 * H, d).transpose(0, 2, 1, 3)             # (B, 3H, T, d)
    q, k, v = jnp.split(qkv, 3, axis=1)                                 # (B, H, T, d)
    s = jnp.einsum("bhtd,bhsd->bhts", (q * scale).astype(wd), k.astype(wd),
                   preferred_element_type=jnp.float32)
    m = jnp.max(s, axis=-1, keepdims=True)
    p_un = jnp.exp(s - m)
    l = jnp.sum(p_un, axis=-1, keepdims=True)
    a = jnp.einsum("bhts,bhsd->bhtd", p_un.astype(wd), v.astype(wd),
                   preferred_element_type=jnp.float32) / l
    a = a.transpose(0, 2, 1, 3).reshape(B, T, C)
    a = mm(a, params["wproj"]) + params["bproj"]
    x1 = x + a
    h2 = ln(x1, params["ln2_w"], params["ln2_b"])
    mlp = mm(h2, params["w1"]) + params["b1"]
    mlp = 0.5 * mlp * (1.0 + lax.erf(mlp / math.sqrt(2.0)))
    mlp = mm(mlp, params["w2"]) + params["b2"]
    return x1 + mlp


# --------------------------------- main ---------------------------------------
if __name__ == "__main__":
    B, T = 2, 8
    channels = 32          # C
    head_channels = 8      # d
    expansion = 4
    num_heads = channels // head_channels

    key = jax.random.PRNGKey(0)
    ks = jax.random.split(key, 8)

    def init_w(k, shape, fan_in):
        return jax.random.normal(k, shape, jnp.float32) / math.sqrt(fan_in)

    # Parameters (weights stored already transposed to (in, out); biases as (1, out)).
    params = {
        "ln1_w": jnp.ones((1, channels), jnp.float32),
        "ln1_b": jnp.zeros((1, channels), jnp.float32),
        "wqkv": init_w(ks[0], (channels, 3 * channels), channels),
        "bqkv": 0.01 * jax.random.normal(ks[1], (1, 3 * channels), jnp.float32),
        "wproj": init_w(ks[2], (channels, channels), channels),
        "bproj": 0.01 * jax.random.normal(ks[3], (1, channels), jnp.float32),
        "ln2_w": jnp.ones((1, channels), jnp.float32),
        "ln2_b": jnp.zeros((1, channels), jnp.float32),
        "w1": init_w(ks[4], (channels, channels * expansion), channels),
        "b1": 0.01 * jax.random.normal(ks[5], (1, channels * expansion), jnp.float32),
        "w2": init_w(ks[6], (channels * expansion, channels), channels * expansion),
        "b2": 0.01 * jax.random.normal(ks[7], (1, channels), jnp.float32),
    }

    x = jax.random.normal(jax.random.PRNGKey(42), (B, T, channels), jnp.float32)

    out = attention_block(x, params, num_heads=num_heads, head_dim=head_channels)
    out = jax.block_until_ready(out)
    assert out.shape == (B, T, channels)

    # Tight check against a reference with matching bf16 dot operands / f32 accumulation.
    ref_bf16 = attention_block_ref(x, params, num_heads=num_heads,
                                   head_dim=head_channels, compute_dtype=jnp.bfloat16)
    assert jnp.allclose(out, ref_bf16, atol=5e-3, rtol=5e-3), \
        float(jnp.max(jnp.abs(out - ref_bf16)))

    # Loose sanity check against the pure-f32 module math (bf16 operand rounding only).
    ref_f32 = attention_block_ref(x, params, num_heads=num_heads,
                                  head_dim=head_channels, compute_dtype=jnp.float32)
    assert jnp.allclose(out, ref_f32, atol=1e-1, rtol=1e-1), \
        float(jnp.max(jnp.abs(out - ref_f32)))

    print("KERNEL_OK")
</pallas_src>

<mosaic_0001>
module attributes {stable_mosaic.version = 11 : i64} {
  func.func @attention_block_kernel(%arg0: i32, %arg1: memref<8x32xf32, #tpu.memory_space<vmem>>, %arg2: memref<1x32xf32, #tpu.memory_space<vmem>>, %arg3: memref<1x32xf32, #tpu.memory_space<vmem>>, %arg4: memref<32x96xbf16, #tpu.memory_space<vmem>>, %arg5: memref<1x96xf32, #tpu.memory_space<vmem>>, %arg6: memref<4x8x32xbf16, #tpu.memory_space<vmem>>, %arg7: memref<1x32xf32, #tpu.memory_space<vmem>>, %arg8: memref<1x32xf32, #tpu.memory_space<vmem>>, %arg9: memref<1x32xf32, #tpu.memory_space<vmem>>, %arg10: memref<32x128xbf16, #tpu.memory_space<vmem>>, %arg11: memref<1x128xf32, #tpu.memory_space<vmem>>, %arg12: memref<128x32xbf16, #tpu.memory_space<vmem>>, %arg13: memref<1x32xf32, #tpu.memory_space<vmem>>, %arg14: memref<8x32xf32, #tpu.memory_space<vmem>>) attributes {dimension_semantics = [#tpu.dimension_semantics<parallel>], iteration_bounds = array<i64: 2>, scalar_prefetch = 0 : i64, scratch_operands = 0 : i64, tpu.core_type = #tpu.core_type<tc>, window_params = [{transform_indices = @transform_0, window_bounds = array<i64: 8, 32>}, {pipeline_mode = #tpu.pipeline_mode<synchronous>, transform_indices = @transform_1, window_bounds = array<i64: 1, 32>}, {pipeline_mode = #tpu.pipeline_mode<synchronous>, transform_indices = @transform_2, window_bounds = array<i64: 1, 32>}, {pipeline_mode = #tpu.pipeline_mode<synchronous>, transform_indices = @transform_3, window_bounds = array<i64: 32, 96>}, {pipeline_mode = #tpu.pipeline_mode<synchronous>, transform_indices = @transform_4, window_bounds = array<i64: 1, 96>}, {pipeline_mode = #tpu.pipeline_mode<synchronous>, transform_indices = @transform_5, window_bounds = array<i64: 4, 8, 32>}, {pipeline_mode = #tpu.pipeline_mode<synchronous>, transform_indices = @transform_6, window_bounds = array<i64: 1, 32>}, {pipeline_mode = #tpu.pipeline_mode<synchronous>, transform_indices = @transform_7, window_bounds = array<i64: 1, 32>}, {pipeline_mode = #tpu.pipeline_mode<synchronous>, transform_indices = @transform_8, window_bounds = array<i64: 1, 32>}, {pipeline_mode = #tpu.pipeline_mode<synchronous>, transform_indices = @transform_9, window_bounds = array<i64: 32, 128>}, {pipeline_mode = #tpu.pipeline_mode<synchronous>, transform_indices = @transform_10, window_bounds = array<i64: 1, 128>}, {pipeline_mode = #tpu.pipeline_mode<synchronous>, transform_indices = @transform_11, window_bounds = array<i64: 128, 32>}, {pipeline_mode = #tpu.pipeline_mode<synchronous>, transform_indices = @transform_12, window_bounds = array<i64: 1, 32>}, {transform_indices = @transform_13, window_bounds = array<i64: 8, 32>}]} {
    %c0 = arith.constant 0 : index
    %c0_0 = arith.constant 0 : index
    %0 = vector.load %arg1[%c0, %c0_0] : memref<8x32xf32, #tpu.memory_space<vmem>>, vector<8x32xf32>
    %c0_1 = arith.constant 0 : index
    %c0_2 = arith.constant 0 : index
    %1 = vector.load %arg2[%c0_1, %c0_2] : memref<1x32xf32, #tpu.memory_space<vmem>>, vector<1x32xf32>
    %c0_3 = arith.constant 0 : index
    %c0_4 = arith.constant 0 : index
    %2 = vector.load %arg3[%c0_3, %c0_4] : memref<1x32xf32, #tpu.memory_space<vmem>>, vector<1x32xf32>
    %cst = arith.constant dense<0.000000e+00> : vector<8xf32>
    %3 = vector.multi_reduction <add>, %0, %cst [1] : vector<8x32xf32> to vector<8xf32>
    %4 = vector.shape_cast %3 : vector<8xf32> to vector<8x1xf32>
    %cst_5 = arith.constant 3.200000e+01 : f32
    %5 = vector.broadcast %cst_5 : f32 to vector<8x1xf32>
    %6 = arith.divf %4, %5 : vector<8x1xf32>
    %7 = vector.broadcast %6 : vector<8x1xf32> to vector<8x32xf32>
    %8 = arith.subf %0, %7 : vector<8x32xf32>
    %9 = arith.mulf %8, %8 : vector<8x32xf32>
    %cst_6 = arith.constant dense<0.000000e+00> : vector<8xf32>
    %10 = vector.multi_reduction <add>, %9, %cst_6 [1] : vector<8x32xf32> to vector<8xf32>
    %11 = vector.shape_cast %10 : vector<8xf32> to vector<8x1xf32>
    %cst_7 = arith.constant 3.200000e+01 : f32
    %12 = vector.broadcast %cst_7 : f32 to vector<8x1xf32>
    %13 = arith.divf %11, %12 : vector<8x1xf32>
    %14 = vector.broadcast %6 : vector<8x1xf32> to vector<8x32xf32>
    %15 = arith.subf %0, %14 : vector<8x32xf32>
    %cst_8 = arith.constant 9.99999974E-6 : f32
    %16 = vector.broadcast %cst_8 : f32 to vector<8x1xf32>
    %17 = arith.addf %13, %16 : vector<8x1xf32>
    %18 = math.rsqrt %17 : vector<8x1xf32>
    %19 = vector.broadcast %18 : vector<8x1xf32> to vector<8x32xf32>
    %20 = arith.mulf %15, %19 : vector<8x32xf32>
    %21 = vector.broadcast %1 : vector<1x32xf32> to vector<8x32xf32>
    %22 = arith.mulf %20, %21 : vector<8x32xf32>
    %23 = vector.broadcast %2 : vector<1x32xf32> to vector<8x32xf32>
    %24 = arith.addf %22, %23 : vector<8x32xf32>
    %25 = arith.truncf %24 : vector<8x32xf32> to vector<8x32xbf16>
    %c0_9 = arith.constant 0 : index
    %c0_10 = arith.constant 0 : index
    %26 = vector.load %arg4[%c0_9, %c0_10] : memref<32x96xbf16, #tpu.memory_space<vmem>>, vector<32x96xbf16>
    %cst_11 = arith.constant dense<0.000000e+00> : vector<8x96xf32>
    %27 = tpu.matmul %25, %26, %cst_11 {dimension_numbers = #tpu.dot_dimension_numbers<[1], [0], [0], [1], [0, 0, 1, 1], [], []>} : vector<8x32xbf16>, vector<32x96xbf16>, vector<8x96xf32> -> vector<8x96xf32>
    %c0_12 = arith.constant 0 : index
    %c0_13 = arith.constant 0 : index
    %28 = vector.load %arg5[%c0_12, %c0_13] : memref<1x96xf32, #tpu.memory_space<vmem>>, vector<1x96xf32>
    %29 = vector.broadcast %28 : vector<1x96xf32> to vector<8x96xf32>
    %30 = arith.addf %27, %29 : vector<8x96xf32>
    %31 = vector.extract_strided_slice %30 {offsets = [0, 0], sizes = [8, 32], strides = [1, 1]} : vector<8x96xf32> to vector<8x32xf32>
    %cst_14 = arith.constant 0.353553385 : f32
    %32 = vector.broadcast %cst_14 : f32 to vector<8x32xf32>
    %33 = arith.mulf %31, %32 : vector<8x32xf32>
    %34 = vector.extract_strided_slice %30 {offsets = [0, 32], sizes = [8, 32], strides = [1, 1]} : vector<8x96xf32> to vector<8x32xf32>
    %35 = vector.extract_strided_slice %30 {offsets = [0, 64], sizes = [8, 32], strides = [1, 1]} : vector<8x96xf32> to vector<8x32xf32>
    %36 = vector.extract_strided_slice %33 {offsets = [0, 0], sizes = [8, 8], strides = [1, 1]} : vector<8x32xf32> to vector<8x8xf32>
    %37 = vector.shape_cast %36 : vector<8x8xf32> to vector<1x8x8xf32>
    %38 = vector.extract_strided_slice %33 {offsets = [0, 8], sizes = [8, 8], strides = [1, 1]} : vector<8x32xf32> to vector<8x8xf32>
    %39 = vector.shape_cast %38 : vector<8x8xf32> to vector<1x8x8xf32>
    %40 = vector.extract_strided_slice %33 {offsets = [0, 16], sizes = [8, 8], strides = [1, 1]} : vector<8x32xf32> to vector<8x8xf32>
    %41 = vector.shape_cast %40 : vector<8x8xf32> to vector<1x8x8xf32>
    %42 = vector.extract_strided_slice %33 {offsets = [0, 24], sizes = [8, 8], strides = [1, 1]} : vector<8x32xf32> to vector<8x8xf32>
    %43 = vector.shape_cast %42 : vector<8x8xf32> to vector<1x8x8xf32>
    %44 = vector.shape_cast %37 : vector<1x8x8xf32> to vector<1x1x8x8xf32>
    %45 = vector.shape_cast %39 : vector<1x8x8xf32> to vector<1x1x8x8xf32>
    %46 = vector.shape_cast %41 : vector<1x8x8xf32> to vector<1x1x8x8xf32>
    %47 = vector.shape_cast %43 : vector<1x8x8xf32> to vector<1x1x8x8xf32>
    %48 = tpu.concatenate %44, %45, %46, %47 in 0 : vector<1x1x8x8xf32>, vector<1x1x8x8xf32>, vector<1x1x8x8xf32>, vector<1x1x8x8xf32> -> vector<4x1x8x8xf32>
    %49 = vector.shape_cast %48 : vector<4x1x8x8xf32> to vector<4x8x8xf32>
    %50 = arith.truncf %49 : vector<4x8x8xf32> to vector<4x8x8xbf16>
    %51 = vector.extract_strided_slice %34 {offsets = [0, 0], sizes = [8, 8], strides = [1, 1]} : vector<8x32xf32> to vector<8x8xf32>
    %52 = vector.shape_cast %51 : vector<8x8xf32> to vector<1x8x8xf32>
    %53 = vector.extract_strided_slice %34 {offsets = [0, 8], sizes = [8, 8], strides = [1, 1]} : vector<8x32xf32> to vector<8x8xf32>
    %54 = vector.shape_cast %53 : vector<8x8xf32> to vector<1x8x8xf32>
    %55 = vector.extract_strided_slice %34 {offsets = [0, 16], sizes = [8, 8], strides = [1, 1]} : vector<8x32xf32> to vector<8x8xf32>
    %56 = vector.shape_cast %55 : vector<8x8xf32> to vector<1x8x8xf32>
    %57 = vector.extract_strided_slice %34 {offsets = [0, 24], sizes = [8, 8], strides = [1, 1]} : vector<8x32xf32> to vector<8x8xf32>
    %58 = vector.shape_cast %57 : vector<8x8xf32> to vector<1x8x8xf32>
    %59 = vector.shape_cast %52 : vector<1x8x8xf32> to vector<1x1x8x8xf32>
    %60 = vector.shape_cast %54 : vector<1x8x8xf32> to vector<1x1x8x8xf32>
    %61 = vector.shape_cast %56 : vector<1x8x8xf32> to vector<1x1x8x8xf32>
    %62 = vector.shape_cast %58 : vector<1x8x8xf32> to vector<1x1x8x8xf32>
    %63 = tpu.concatenate %59, %60, %61, %62 in 0 : vector<1x1x8x8xf32>, vector<1x1x8x8xf32>, vector<1x1x8x8xf32>, vector<1x1x8x8xf32> -> vector<4x1x8x8xf32>
    %64 = vector.shape_cast %63 : vector<4x1x8x8xf32> to vector<4x8x8xf32>
    %65 = arith.truncf %64 : vector<4x8x8xf32> to vector<4x8x8xbf16>
    %66 = vector.extract_strided_slice %35 {offsets = [0, 0], sizes = [8, 8], strides = [1, 1]} : vector<8x32xf32> to vector<8x8xf32>
    %67 = vector.shape_cast %66 : vector<8x8xf32> to vector<1x8x8xf32>
    %68 = vector.extract_strided_slice %35 {offsets = [0, 8], sizes = [8, 8], strides = [1, 1]} : vector<8x32xf32> to vector<8x8xf32>
    %69 = vector.shape_cast %68 : vector<8x8xf32> to vector<1x8x8xf32>
    %70 = vector.extract_strided_slice %35 {offsets = [0, 16], sizes = [8, 8], strides = [1, 1]} : vector<8x32xf32> to vector<8x8xf32>
    %71 = vector.shape_cast %70 : vector<8x8xf32> to vector<1x8x8xf32>
    %72 = vector.extract_strided_slice %35 {offsets = [0, 24], sizes = [8, 8], strides = [1, 1]} : vector<8x32xf32> to vector<8x8xf32>
    %73 = vector.shape_cast %72 : vector<8x8xf32> to vector<1x8x8xf32>
    %74 = vector.shape_cast %67 : vector<1x8x8xf32> to vector<1x1x8x8xf32>
    %75 = vector.shape_cast %69 : vector<1x8x8xf32> to vector<1x1x8x8xf32>
    %76 = vector.shape_cast %71 : vector<1x8x8xf32> to vector<1x1x8x8xf32>
    %77 = vector.shape_cast %73 : vector<1x8x8xf32> to vector<1x1x8x8xf32>
    %78 = tpu.concatenate %74, %75, %76, %77 in 0 : vector<1x1x8x8xf32>, vector<1x1x8x8xf32>, vector<1x1x8x8xf32>, vector<1x1x8x8xf32> -> vector<4x1x8x8xf32>
    %79 = vector.shape_cast %78 : vector<4x1x8x8xf32> to vector<4x8x8xf32>
    %80 = arith.truncf %79 : vector<4x8x8xf32> to vector<4x8x8xbf16>
    %cst_15 = arith.constant 0xFF800000 : f32
    %81 = vector.broadcast %cst_15 : f32 to vector<4x8x1xf32>
    %cst_16 = arith.constant 0.000000e+00 : f32
    %82 = vector.broadcast %cst_16 : f32 to vector<4x8x1xf32>
    %cst_17 = arith.constant 0.000000e+00 : f32
    %83 = vector.broadcast %cst_17 : f32 to vector<4x8x8xf32>
    "tpu.trace_start"() <{level = 10 : i32, message = "gqd,gkd->gqk"}> : () -> ()
    %cst_18 = arith.constant dense<0.000000e+00> : vector<4x8x8xf32>
    %84 = tpu.matmul %50, %65, %cst_18 {dimension_numbers = #tpu.dot_dimension_numbers<[2], [2], [1], [1], [0, 0, 0, 1, 1, 1], [0], [0]>} : vector<4x8x8xbf16>, vector<4x8x8xbf16>, vector<4x8x8xf32> -> vector<4x8x8xf32>
    "tpu.trace_stop"() : () -> ()
    %cst_19 = arith.constant dense<0xFF800000> : vector<4x8xf32>
    %85 = vector.multi_reduction <maximumf>, %84, %cst_19 [2] : vector<4x8x8xf32> to vector<4x8xf32>
    %86 = vector.shape_cast %85 : vector<4x8xf32> to vector<4x8x1xf32>
    %87 = arith.maximumf %81, %86 : vector<4x8x1xf32>
    %88 = arith.subf %81, %87 : vector<4x8x1xf32>
    %89 = math.exp %88 : vector<4x8x1xf32>
    %90 = vector.broadcast %87 : vector<4x8x1xf32> to vector<4x8x8xf32>
    %91 = arith.subf %84, %90 : vector<4x8x8xf32>
    %92 = math.exp %91 : vector<4x8x8xf32>
    %93 = arith.mulf %89, %82 : vector<4x8x1xf32>
    %cst_20 = arith.constant dense<0.000000e+00> : vector<4x8xf32>
    %94 = vector.multi_reduction <add>, %92, %cst_20 [2] : vector<4x8x8xf32> to vector<4x8xf32>
    %95 = vector.shape_cast %94 : vector<4x8xf32> to vector<4x8x1xf32>
    %96 = arith.addf %93, %95 : vector<4x8x1xf32>
    %97 = vector.broadcast %89 : vector<4x8x1xf32> to vector<4x8x8xf32>
    %98 = arith.mulf %97, %83 : vector<4x8x8xf32>
    %99 = arith.truncf %92 : vector<4x8x8xf32> to vector<4x8x8xbf16>
    "tpu.trace_start"() <{level = 10 : i32, message = "gqk,gkd->gqd"}> : () -> ()
    %cst_21 = arith.constant dense<0.000000e+00> : vector<4x8x8xf32>
    %100 = tpu.matmul %99, %80, %cst_21 {dimension_numbers = #tpu.dot_dimension_numbers<[2], [1], [1], [2], [0, 0, 0, 1, 1, 2], [0], [0]>} : vector<4x8x8xbf16>, vector<4x8x8xbf16>, vector<4x8x8xf32> -> vector<4x8x8xf32>
    "tpu.trace_stop"() : () -> ()
    %101 = arith.addf %98, %100 : vector<4x8x8xf32>
    %102 = tpu.reciprocal %96 : vector<4x8x1xf32> -> vector<4x8x1xf32>
    %103 = vector.broadcast %102 : vector<4x8x1xf32> to vector<4x8x8xf32>
    %104 = arith.mulf %101, %103 : vector<4x8x8xf32>
    %105 = arith.truncf %104 : vector<4x8x8xf32> to vector<4x8x8xbf16>
    %c0_22 = arith.constant 0 : index
    %c0_23 = arith.constant 0 : index
    %c0_24 = arith.constant 0 : index
    %106 = vector.load %arg6[%c0_22, %c0_23, %c0_24] : memref<4x8x32xbf16, #tpu.memory_space<vmem>>, vector<4x8x32xbf16>
    "tpu.trace_start"() <{level = 10 : i32, message = "hrd,hdc->hrc"}> : () -> ()
    %cst_25 = arith.constant dense<0.000000e+00> : vector<4x8x32xf32>
    %107 = tpu.matmul %105, %106, %cst_25 {dimension_numbers = #tpu.dot_dimension_numbers<[2], [1], [1], [2], [0, 0, 0, 1, 1, 2], [0], [0]>} : vector<4x8x8xbf16>, vector<4x8x32xbf16>, vector<4x8x32xf32> -> vector<4x8x32xf32>
    "tpu.trace_stop"() : () -> ()
    %cst_26 = arith.constant dense<0.000000e+00> : vector<8x32xf32>
    %108 = vector.multi_reduction <add>, %107, %cst_26 [0] : vector<4x8x32xf32> to vector<8x32xf32>
    %c0_27 = arith.constant 0 : index
    %c0_28 = arith.constant 0 : index
    %109 = vector.load %arg7[%c0_27, %c0_28] : memref<1x32xf32, #tpu.memory_space<vmem>>, vector<1x32xf32>
    %110 = vector.broadcast %109 : vector<1x32xf32> to vector<8x32xf32>
    %111 = arith.addf %108, %110 : vector<8x32xf32>
    %112 = arith.addf %0, %111 : vector<8x32xf32>
    %c0_29 = arith.constant 0 : index
    %c0_30 = arith.constant 0 : index
    %113 = vector.load %arg8[%c0_29, %c0_30] : memref<1x32xf32, #tpu.memory_space<vmem>>, vector<1x32xf32>
    %c0_31 = arith.constant 0 : index
    %c0_32 = arith.constant 0 : index
    %114 = vector.load %arg9[%c0_31, %c0_32] : memref<1x32xf32, #tpu.memory_space<vmem>>, vector<1x32xf32>
    %cst_33 = arith.constant dense<0.000000e+00> : vector<8xf32>
    %115 = vector.multi_reduction <add>, %112, %cst_33 [1] : vector<8x32xf32> to vector<8xf32>
    %116 = vector.shape_cast %115 : vector<8xf32> to vector<8x1xf32>
    %cst_34 = arith.constant 3.200000e+01 : f32
    %117 = vector.broadcast %cst_34 : f32 to vector<8x1xf32>
    %118 = arith.divf %116, %117 : vector<8x1xf32>
    %119 = vector.broadcast %118 : vector<8x1xf32> to vector<8x32xf32>
    %120 = arith.subf %112, %119 : vector<8x32xf32>
    %121 = arith.mulf %120, %120 : vector<8x32xf32>
    %cst_35 = arith.constant dense<0.000000e+00> : vector<8xf32>
    %122 = vector.multi_reduction <add>, %121, %cst_35 [1] : vector<8x32xf32> to vector<8xf32>
    %123 = vector.shape_cast %122 : vector<8xf32> to vector<8x1xf32>
    %cst_36 = arith.constant 3.200000e+01 : f32
    %124 = vector.broadcast %cst_36 : f32 to vector<8x1xf32>
    %125 = arith.divf %123, %124 : vector<8x1xf32>
    %126 = vector.broadcast %118 : vector<8x1xf32> to vector<8x32xf32>
    %127 = arith.subf %112, %126 : vector<8x32xf32>
    %cst_37 = arith.constant 9.99999974E-6 : f32
    %128 = vector.broadcast %cst_37 : f32 to vector<8x1xf32>
    %129 = arith.addf %125, %128 : vector<8x1xf32>
    %130 = math.rsqrt %129 : vector<8x1xf32>
    %131 = vector.broadcast %130 : vector<8x1xf32> to vector<8x32xf32>
    %132 = arith.mulf %127, %131 : vector<8x32xf32>
    %133 = vector.broadcast %113 : vector<1x32xf32> to vector<8x32xf32>
    %134 = arith.mulf %132, %133 : vector<8x32xf32>
    %135 = vector.broadcast %114 : vector<1x32xf32> to vector<8x32xf32>
    %136 = arith.addf %134, %135 : vector<8x32xf32>
    %137 = arith.truncf %136 : vector<8x32xf32> to vector<8x32xbf16>
    %c0_38 = arith.constant 0 : index
    %c0_39 = arith.constant 0 : index
    %138 = vector.load %arg10[%c0_38, %c0_39] : memref<32x128xbf16, #tpu.memory_space<vmem>>, vector<32x128xbf16>
    %cst_40 = arith.constant dense<0.000000e+00> : vector<8x128xf32>
    %139 = tpu.matmul %137, %138, %cst_40 {dimension_numbers = #tpu.dot_dimension_numbers<[1], [0], [0], [1], [0, 0, 1, 1], [], []>} : vector<8x32xbf16>, vector<32x128xbf16>, vector<8x128xf32> -> vector<8x128xf32>
    %c0_41 = arith.constant 0 : index
    %c0_42 = arith.constant 0 : index
    %140 = vector.load %arg11[%c0_41, %c0_42] : memref<1x128xf32, #tpu.memory_space<vmem>>, vector<1x128xf32>
    %141 = vector.broadcast %140 : vector<1x128xf32> to vector<8x128xf32>
    %142 = arith.addf %139, %141 : vector<8x128xf32>
    %cst_43 = arith.constant 5.000000e-01 : f32
    %143 = vector.broadcast %cst_43 : f32 to vector<8x128xf32>
    %144 = arith.mulf %143, %142 : vector<8x128xf32>
    %cst_44 = arith.constant 1.41421354 : f32
    %145 = vector.broadcast %cst_44 : f32 to vector<8x128xf32>
    %146 = arith.divf %142, %145 : vector<8x128xf32>
    %147 = math.erf %146 : vector<8x128xf32>
    %cst_45 = arith.constant 1.000000e+00 : f32
    %148 = vector.broadcast %cst_45 : f32 to vector<8x128xf32>
    %149 = arith.addf %148, %147 : vector<8x128xf32>
    %150 = arith.mulf %144, %149 : vector<8x128xf32>
    %151 = arith.truncf %150 : vector<8x128xf32> to vector<8x128xbf16>
    %c0_46 = arith.constant 0 : index
    %c0_47 = arith.constant 0 : index
    %152 = vector.load %arg12[%c0_46, %c0_47] : memref<128x32xbf16, #tpu.memory_space<vmem>>, vector<128x32xbf16>
    %cst_48 = arith.constant dense<0.000000e+00> : vector<8x32xf32>
    %153 = tpu.matmul %151, %152, %cst_48 {dimension_numbers = #tpu.dot_dimension_numbers<[1], [0], [0], [1], [0, 0, 1, 1], [], []>} : vector<8x128xbf16>, vector<128x32xbf16>, vector<8x32xf32> -> vector<8x32xf32>
    %c0_49 = arith.constant 0 : index
    %c0_50 = arith.constant 0 : index
    %154 = vector.load %arg13[%c0_49, %c0_50] : memref<1x32xf32, #tpu.memory_space<vmem>>, vector<1x32xf32>
    %155 = vector.broadcast %154 : vector<1x32xf32> to vector<8x32xf32>
    %156 = arith.addf %153, %155 : vector<8x32xf32>
    %157 = arith.addf %112, %156 : vector<8x32xf32>
    %c0_51 = arith.constant 0 : index
    %c0_52 = arith.constant 0 : index
    %158 = vector.load %arg14[%c0_51, %c0_52] : memref<8x32xf32, #tpu.memory_space<vmem>>, vector<8x32xf32>
    tpu.vector_store %arg14[%c0_51, %c0_52], %157 {strides = array<i32>} : memref<8x32xf32, #tpu.memory_space<vmem>>, vector<8x32xf32>,
    return
  }
  func.func @transform_0(%arg0: i32) -> (i32, i32) {
    %c0_i32 = arith.constant 0 : i32
    %c0_i32_0 = arith.constant 0 : i32
    return %arg0, %c0_i32 : i32, i32
  }
  func.func @transform_1(%arg0: i32) -> (i32, i32) {
    %c0_i32 = arith.constant 0 : i32
    %c0_i32_0 = arith.constant 0 : i32
    %c0_i32_1 = arith.constant 0 : i32
    return %c0_i32, %c0_i32_0 : i32, i32
  }
  func.func @transform_2(%arg0: i32) -> (i32, i32) {
    %c0_i32 = arith.constant 0 : i32
    %c0_i32_0 = arith.constant 0 : i32
    %c0_i32_1 = arith.constant 0 : i32
    return %c0_i32, %c0_i32_0 : i32, i32
  }
  func.func @transform_3(%arg0: i32) -> (i32, i32) {
    %c0_i32 = arith.constant 0 : i32
    %c0_i32_0 = arith.constant 0 : i32
    %c0_i32_1 = arith.constant 0 : i32
    return %c0_i32, %c0_i32_0 : i32, i32
  }
  func.func @transform_4(%arg0: i32) -> (i32, i32) {
    %c0_i32 = arith.constant 0 : i32
    %c0_i32_0 = arith.constant 0 : i32
    %c0_i32_1 = arith.constant 0 : i32
    return %c0_i32, %c0_i32_0 : i32, i32
  }
  func.func @transform_5(%arg0: i32) -> (i32, i32, i32) {
    %c0_i32 = arith.constant 0 : i32
    %c0_i32_0 = arith.constant 0 : i32
    %c0_i32_1 = arith.constant 0 : i32
    %c0_i32_2 = arith.constant 0 : i32
    return %c0_i32, %c0_i32_0, %c0_i32_1 : i32, i32, i32
  }
  func.func @transform_6(%arg0: i32) -> (i32, i32) {
    %c0_i32 = arith.constant 0 : i32
    %c0_i32_0 = arith.constant 0 : i32
    %c0_i32_1 = arith.constant 0 : i32
    return %c0_i32, %c0_i32_0 : i32, i32
  }
  func.func @transform_7(%arg0: i32) -> (i32, i32) {
    %c0_i32 = arith.constant 0 : i32
    %c0_i32_0 = arith.constant 0 : i32
    %c0_i32_1 = arith.constant 0 : i32
    return %c0_i32, %c0_i32_0 : i32, i32
  }
  func.func @transform_8(%arg0: i32) -> (i32, i32) {
    %c0_i32 = arith.constant 0 : i32
    %c0_i32_0 = arith.constant 0 : i32
    %c0_i32_1 = arith.constant 0 : i32
    return %c0_i32, %c0_i32_0 : i32, i32
  }
  func.func @transform_9(%arg0: i32) -> (i32, i32) {
    %c0_i32 = arith.constant 0 : i32
    %c0_i32_0 = arith.constant 0 : i32
    %c0_i32_1 = arith.constant 0 : i32
    return %c0_i32, %c0_i32_0 : i32, i32
  }
  func.func @transform_10(%arg0: i32) -> (i32, i32) {
    %c0_i32 = arith.constant 0 : i32
    %c0_i32_0 = arith.constant 0 : i32
    %c0_i32_1 = arith.constant 0 : i32
    return %c0_i32, %c0_i32_0 : i32, i32
  }
  func.func @transform_11(%arg0: i32) -> (i32, i32) {
    %c0_i32 = arith.constant 0 : i32
    %c0_i32_0 = arith.constant 0 : i32
    %c0_i32_1 = arith.constant 0 : i32
    return %c0_i32, %c0_i32_0 : i32, i32
  }
  func.func @transform_12(%arg0: i32) -> (i32, i32) {
    %c0_i32 = arith.constant 0 : i32
    %c0_i32_0 = arith.constant 0 : i32
    %c0_i32_1 = arith.constant 0 : i32
    return %c0_i32, %c0_i32_0 : i32, i32
  }
  func.func @transform_13(%arg0: i32) -> (i32, i32) {
    %c0_i32 = arith.constant 0 : i32
    %c0_i32_0 = arith.constant 0 : i32
    return %arg0, %c0_i32 : i32, i32
  }
}

module attributes {stable_mosaic.version = 11 : i64} {
  func.func @attention_block_kernel(%arg0: i32, %arg1: memref<8x32xf32, #tpu.memory_space<vmem>>, %arg2: memref<1x32xf32, #tpu.memory_space<vmem>>, %arg3: memref<1x32xf32, #tpu.memory_space<vmem>>, %arg4: memref<32x96xbf16, #tpu.memory_space<vmem>>, %arg5: memref<1x96xf32, #tpu.memory_space<vmem>>, %arg6: memref<4x8x32xbf16, #tpu.memory_space<vmem>>, %arg7: memref<1x32xf32, #tpu.memory_space<vmem>>, %arg8: memref<1x32xf32, #tpu.memory_space<vmem>>, %arg9: memref<1x32xf32, #tpu.memory_space<vmem>>, %arg10: memref<32x128xbf16, #tpu.memory_space<vmem>>, %arg11: memref<1x128xf32, #tpu.memory_space<vmem>>, %arg12: memref<128x32xbf16, #tpu.memory_space<vmem>>, %arg13: memref<1x32xf32, #tpu.memory_space<vmem>>, %arg14: memref<8x32xf32, #tpu.memory_space<vmem>>) attributes {dimension_semantics = [#tpu.dimension_semantics<parallel>], iteration_bounds = array<i64: 2>, scalar_prefetch = 0 : i64, scratch_operands = 0 : i64, tpu.core_type = #tpu.core_type<tc>, window_params = [{transform_indices = @transform_0, window_bounds = array<i64: 8, 32>}, {pipeline_mode = #tpu.pipeline_mode<synchronous>, transform_indices = @transform_1, window_bounds = array<i64: 1, 32>}, {pipeline_mode = #tpu.pipeline_mode<synchronous>, transform_indices = @transform_2, window_bounds = array<i64: 1, 32>}, {pipeline_mode = #tpu.pipeline_mode<synchronous>, transform_indices = @transform_3, window_bounds = array<i64: 32, 96>}, {pipeline_mode = #tpu.pipeline_mode<synchronous>, transform_indices = @transform_4, window_bounds = array<i64: 1, 96>}, {pipeline_mode = #tpu.pipeline_mode<synchronous>, transform_indices = @transform_5, window_bounds = array<i64: 4, 8, 32>}, {pipeline_mode = #tpu.pipeline_mode<synchronous>, transform_indices = @transform_6, window_bounds = array<i64: 1, 32>}, {pipeline_mode = #tpu.pipeline_mode<synchronous>, transform_indices = @transform_7, window_bounds = array<i64: 1, 32>}, {pipeline_mode = #tpu.pipeline_mode<synchronous>, transform_indices = @transform_8, window_bounds = array<i64: 1, 32>}, {pipeline_mode = #tpu.pipeline_mode<synchronous>, transform_indices = @transform_9, window_bounds = array<i64: 32, 128>}, {pipeline_mode = #tpu.pipeline_mode<synchronous>, transform_indices = @transform_10, window_bounds = array<i64: 1, 128>}, {pipeline_mode = #tpu.pipeline_mode<synchronous>, transform_indices = @transform_11, window_bounds = array<i64: 128, 32>}, {pipeline_mode = #tpu.pipeline_mode<synchronous>, transform_indices = @transform_12, window_bounds = array<i64: 1, 32>}, {transform_indices = @transform_13, window_bounds = array<i64: 8, 32>}]} {
    %c0 = arith.constant 0 : index
    %c0_0 = arith.constant 0 : index
    %0 = vector.load %arg1[%c0, %c0_0] : memref<8x32xf32, #tpu.memory_space<vmem>>, vector<8x32xf32>
    %c0_1 = arith.constant 0 : index
    %c0_2 = arith.constant 0 : index
    %1 = vector.load %arg2[%c0_1, %c0_2] : memref<1x32xf32, #tpu.memory_space<vmem>>, vector<1x32xf32>
    %c0_3 = arith.constant 0 : index
    %c0_4 = arith.constant 0 : index
    %2 = vector.load %arg3[%c0_3, %c0_4] : memref<1x32xf32, #tpu.memory_space<vmem>>, vector<1x32xf32>
    %cst = arith.constant dense<0.000000e+00> : vector<8xf32>
    %3 = vector.multi_reduction <add>, %0, %cst [1] : vector<8x32xf32> to vector<8xf32>
    %4 = vector.shape_cast %3 : vector<8xf32> to vector<8x1xf32>
    %cst_5 = arith.constant 3.200000e+01 : f32
    %5 = vector.broadcast %cst_5 : f32 to vector<8x1xf32>
    %6 = arith.divf %4, %5 : vector<8x1xf32>
    %7 = vector.broadcast %6 : vector<8x1xf32> to vector<8x32xf32>
    %8 = arith.subf %0, %7 : vector<8x32xf32>
    %9 = arith.mulf %8, %8 : vector<8x32xf32>
    %cst_6 = arith.constant dense<0.000000e+00> : vector<8xf32>
    %10 = vector.multi_reduction <add>, %9, %cst_6 [1] : vector<8x32xf32> to vector<8xf32>
    %11 = vector.shape_cast %10 : vector<8xf32> to vector<8x1xf32>
    %cst_7 = arith.constant 3.200000e+01 : f32
    %12 = vector.broadcast %cst_7 : f32 to vector<8x1xf32>
    %13 = arith.divf %11, %12 : vector<8x1xf32>
    %14 = vector.broadcast %6 : vector<8x1xf32> to vector<8x32xf32>
    %15 = arith.subf %0, %14 : vector<8x32xf32>
    %cst_8 = arith.constant 9.99999974E-6 : f32
    %16 = vector.broadcast %cst_8 : f32 to vector<8x1xf32>
    %17 = arith.addf %13, %16 : vector<8x1xf32>
    %18 = math.rsqrt %17 : vector<8x1xf32>
    %19 = vector.broadcast %18 : vector<8x1xf32> to vector<8x32xf32>
    %20 = arith.mulf %15, %19 : vector<8x32xf32>
    %21 = vector.broadcast %1 : vector<1x32xf32> to vector<8x32xf32>
    %22 = arith.mulf %20, %21 : vector<8x32xf32>
    %23 = vector.broadcast %2 : vector<1x32xf32> to vector<8x32xf32>
    %24 = arith.addf %22, %23 : vector<8x32xf32>
    %25 = arith.truncf %24 : vector<8x32xf32> to vector<8x32xbf16>
    %c0_9 = arith.constant 0 : index
    %c0_10 = arith.constant 0 : index
    %26 = vector.load %arg4[%c0_9, %c0_10] : memref<32x96xbf16, #tpu.memory_space<vmem>>, vector<32x96xbf16>
    %cst_11 = arith.constant dense<0.000000e+00> : vector<8x96xf32>
    %27 = tpu.matmul %25, %26, %cst_11 {dimension_numbers = #tpu.dot_dimension_numbers<[1], [0], [0], [1], [0, 0, 1, 1], [], []>} : vector<8x32xbf16>, vector<32x96xbf16>, vector<8x96xf32> -> vector<8x96xf32>
    %c0_12 = arith.constant 0 : index
    %c0_13 = arith.constant 0 : index
    %28 = vector.load %arg5[%c0_12, %c0_13] : memref<1x96xf32, #tpu.memory_space<vmem>>, vector<1x96xf32>
    %29 = vector.broadcast %28 : vector<1x96xf32> to vector<8x96xf32>
    %30 = arith.addf %27, %29 : vector<8x96xf32>
    %31 = vector.extract_strided_slice %30 {offsets = [0, 0], sizes = [8, 32], strides = [1, 1]} : vector<8x96xf32> to vector<8x32xf32>
    %cst_14 = arith.constant 0.353553385 : f32
    %32 = vector.broadcast %cst_14 : f32 to vector<8x32xf32>
    %33 = arith.mulf %31, %32 : vector<8x32xf32>
    %34 = vector.extract_strided_slice %30 {offsets = [0, 32], sizes = [8, 32], strides = [1, 1]} : vector<8x96xf32> to vector<8x32xf32>
    %35 = vector.extract_strided_slice %30 {offsets = [0, 64], sizes = [8, 32], strides = [1, 1]} : vector<8x96xf32> to vector<8x32xf32>
    %36 = vector.extract_strided_slice %33 {offsets = [0, 0], sizes = [8, 8], strides = [1, 1]} : vector<8x32xf32> to vector<8x8xf32>
    %37 = vector.shape_cast %36 : vector<8x8xf32> to vector<1x8x8xf32>
    %38 = vector.extract_strided_slice %33 {offsets = [0, 8], sizes = [8, 8], strides = [1, 1]} : vector<8x32xf32> to vector<8x8xf32>
    %39 = vector.shape_cast %38 : vector<8x8xf32> to vector<1x8x8xf32>
    %40 = vector.extract_strided_slice %33 {offsets = [0, 16], sizes = [8, 8], strides = [1, 1]} : vector<8x32xf32> to vector<8x8xf32>
    %41 = vector.shape_cast %40 : vector<8x8xf32> to vector<1x8x8xf32>
    %42 = vector.extract_strided_slice %33 {offsets = [0, 24], sizes = [8, 8], strides = [1, 1]} : vector<8x32xf32> to vector<8x8xf32>
    %43 = vector.shape_cast %42 : vector<8x8xf32> to vector<1x8x8xf32>
    %44 = vector.shape_cast %37 : vector<1x8x8xf32> to vector<1x1x8x8xf32>
    %45 = vector.shape_cast %39 : vector<1x8x8xf32> to vector<1x1x8x8xf32>
    %46 = vector.shape_cast %41 : vector<1x8x8xf32> to vector<1x1x8x8xf32>
    %47 = vector.shape_cast %43 : vector<1x8x8xf32> to vector<1x1x8x8xf32>
    %48 = tpu.concatenate %44, %45, %46, %47 in 0 : vector<1x1x8x8xf32>, vector<1x1x8x8xf32>, vector<1x1x8x8xf32>, vector<1x1x8x8xf32> -> vector<4x1x8x8xf32>
    %49 = vector.shape_cast %48 : vector<4x1x8x8xf32> to vector<4x8x8xf32>
    %50 = arith.truncf %49 : vector<4x8x8xf32> to vector<4x8x8xbf16>
    %51 = vector.extract_strided_slice %34 {offsets = [0, 0], sizes = [8, 8], strides = [1, 1]} : vector<8x32xf32> to vector<8x8xf32>
    %52 = vector.shape_cast %51 : vector<8x8xf32> to vector<1x8x8xf32>
    %53 = vector.extract_strided_slice %34 {offsets = [0, 8], sizes = [8, 8], strides = [1, 1]} : vector<8x32xf32> to vector<8x8xf32>
    %54 = vector.shape_cast %53 : vector<8x8xf32> to vector<1x8x8xf32>
    %55 = vector.extract_strided_slice %34 {offsets = [0, 16], sizes = [8, 8], strides = [1, 1]} : vector<8x32xf32> to vector<8x8xf32>
    %56 = vector.shape_cast %55 : vector<8x8xf32> to vector<1x8x8xf32>
    %57 = vector.extract_strided_slice %34 {offsets = [0, 24], sizes = [8, 8], strides = [1, 1]} : vector<8x32xf32> to vector<8x8xf32>
    %58 = vector.shape_cast %57 : vector<8x8xf32> to vector<1x8x8xf32>
    %59 = vector.shape_cast %52 : vector<1x8x8xf32> to vector<1x1x8x8xf32>
    %60 = vector.shape_cast %54 : vector<1x8x8xf32> to vector<1x1x8x8xf32>
    %61 = vector.shape_cast %56 : vector<1x8x8xf32> to vector<1x1x8x8xf32>
    %62 = vector.shape_cast %58 : vector<1x8x8xf32> to vector<1x1x8x8xf32>
    %63 = tpu.concatenate %59, %60, %61, %62 in 0 : vector<1x1x8x8xf32>, vector<1x1x8x8xf32>, vector<1x1x8x8xf32>, vector<1x1x8x8xf32> -> vector<4x1x8x8xf32>
    %64 = vector.shape_cast %63 : vector<4x1x8x8xf32> to vector<4x8x8xf32>
    %65 = arith.truncf %64 : vector<4x8x8xf32> to vector<4x8x8xbf16>
    %66 = vector.extract_strided_slice %35 {offsets = [0, 0], sizes = [8, 8], strides = [1, 1]} : vector<8x32xf32> to vector<8x8xf32>
    %67 = vector.shape_cast %66 : vector<8x8xf32> to vector<1x8x8xf32>
    %68 = vector.extract_strided_slice %35 {offsets = [0, 8], sizes = [8, 8], strides = [1, 1]} : vector<8x32xf32> to vector<8x8xf32>
    %69 = vector.shape_cast %68 : vector<8x8xf32> to vector<1x8x8xf32>
    %70 = vector.extract_strided_slice %35 {offsets = [0, 16], sizes = [8, 8], strides = [1, 1]} : vector<8x32xf32> to vector<8x8xf32>
    %71 = vector.shape_cast %70 : vector<8x8xf32> to vector<1x8x8xf32>
    %72 = vector.extract_strided_slice %35 {offsets = [0, 24], sizes = [8, 8], strides = [1, 1]} : vector<8x32xf32> to vector<8x8xf32>
    %73 = vector.shape_cast %72 : vector<8x8xf32> to vector<1x8x8xf32>
    %74 = vector.shape_cast %67 : vector<1x8x8xf32> to vector<1x1x8x8xf32>
    %75 = vector.shape_cast %69 : vector<1x8x8xf32> to vector<1x1x8x8xf32>
    %76 = vector.shape_cast %71 : vector<1x8x8xf32> to vector<1x1x8x8xf32>
    %77 = vector.shape_cast %73 : vector<1x8x8xf32> to vector<1x1x8x8xf32>
    %78 = tpu.concatenate %74, %75, %76, %77 in 0 : vector<1x1x8x8xf32>, vector<1x1x8x8xf32>, vector<1x1x8x8xf32>, vector<1x1x8x8xf32> -> vector<4x1x8x8xf32>
    %79 = vector.shape_cast %78 : vector<4x1x8x8xf32> to vector<4x8x8xf32>
    %80 = arith.truncf %79 : vector<4x8x8xf32> to vector<4x8x8xbf16>
    %cst_15 = arith.constant 0xFF800000 : f32
    %81 = vector.broadcast %cst_15 : f32 to vector<4x8x1xf32>
    %cst_16 = arith.constant 0.000000e+00 : f32
    %82 = vector.broadcast %cst_16 : f32 to vector<4x8x1xf32>
    %cst_17 = arith.constant 0.000000e+00 : f32
    %83 = vector.broadcast %cst_17 : f32 to vector<4x8x8xf32>
    "tpu.trace_start"() <{level = 10 : i32, message = "gqd,gkd->gqk"}> : () -> ()
    %cst_18 = arith.constant dense<0.000000e+00> : vector<4x8x8xf32>
    %84 = tpu.matmul %50, %65, %cst_18 {dimension_numbers = #tpu.dot_dimension_numbers<[2], [2], [1], [1], [0, 0, 0, 1, 1, 1], [0], [0]>} : vector<4x8x8xbf16>, vector<4x8x8xbf16>, vector<4x8x8xf32> -> vector<4x8x8xf32>
    "tpu.trace_stop"() : () -> ()
    %cst_19 = arith.constant dense<0xFF800000> : vector<4x8xf32>
    %85 = vector.multi_reduction <maximumf>, %84, %cst_19 [2] : vector<4x8x8xf32> to vector<4x8xf32>
    %86 = vector.shape_cast %85 : vector<4x8xf32> to vector<4x8x1xf32>
    %87 = arith.maximumf %81, %86 : vector<4x8x1xf32>
    %88 = arith.subf %81, %87 : vector<4x8x1xf32>
    %89 = math.exp %88 : vector<4x8x1xf32>
    %90 = vector.broadcast %87 : vector<4x8x1xf32> to vector<4x8x8xf32>
    %91 = arith.subf %84, %90 : vector<4x8x8xf32>
    %92 = math.exp %91 : vector<4x8x8xf32>
    %93 = arith.mulf %89, %82 : vector<4x8x1xf32>
    %cst_20 = arith.constant dense<0.000000e+00> : vector<4x8xf32>
    %94 = vector.multi_reduction <add>, %92, %cst_20 [2] : vector<4x8x8xf32> to vector<4x8xf32>
    %95 = vector.shape_cast %94 : vector<4x8xf32> to vector<4x8x1xf32>
    %96 = arith.addf %93, %95 : vector<4x8x1xf32>
    %97 = vector.broadcast %89 : vector<4x8x1xf32> to vector<4x8x8xf32>
    %98 = arith.mulf %97, %83 : vector<4x8x8xf32>
    %99 = arith.truncf %92 : vector<4x8x8xf32> to vector<4x8x8xbf16>
    "tpu.trace_start"() <{level = 10 : i32, message = "gqk,gkd->gqd"}> : () -> ()
    %cst_21 = arith.constant dense<0.000000e+00> : vector<4x8x8xf32>
    %100 = tpu.matmul %99, %80, %cst_21 {dimension_numbers = #tpu.dot_dimension_numbers<[2], [1], [1], [2], [0, 0, 0, 1, 1, 2], [0], [0]>} : vector<4x8x8xbf16>, vector<4x8x8xbf16>, vector<4x8x8xf32> -> vector<4x8x8xf32>
    "tpu.trace_stop"() : () -> ()
    %101 = arith.addf %98, %100 : vector<4x8x8xf32>
    %102 = tpu.reciprocal %96 : vector<4x8x1xf32> -> vector<4x8x1xf32>
    %103 = vector.broadcast %102 : vector<4x8x1xf32> to vector<4x8x8xf32>
    %104 = arith.mulf %101, %103 : vector<4x8x8xf32>
    %105 = arith.truncf %104 : vector<4x8x8xf32> to vector<4x8x8xbf16>
    %c0_22 = arith.constant 0 : index
    %c0_23 = arith.constant 0 : index
    %c0_24 = arith.constant 0 : index
    %106 = vector.load %arg6[%c0_22, %c0_23, %c0_24] : memref<4x8x32xbf16, #tpu.memory_space<vmem>>, vector<4x8x32xbf16>
    "tpu.trace_start"() <{level = 10 : i32, message = "hrd,hdc->hrc"}> : () -> ()
    %cst_25 = arith.constant dense<0.000000e+00> : vector<4x8x32xf32>
    %107 = tpu.matmul %105, %106, %cst_25 {dimension_numbers = #tpu.dot_dimension_numbers<[2], [1], [1], [2], [0, 0, 0, 1, 1, 2], [0], [0]>} : vector<4x8x8xbf16>, vector<4x8x32xbf16>, vector<4x8x32xf32> -> vector<4x8x32xf32>
    "tpu.trace_stop"() : () -> ()
    %cst_26 = arith.constant dense<0.000000e+00> : vector<8x32xf32>
    %108 = vector.multi_reduction <add>, %107, %cst_26 [0] : vector<4x8x32xf32> to vector<8x32xf32>
    %c0_27 = arith.constant 0 : index
    %c0_28 = arith.constant 0 : index
    %109 = vector.load %arg7[%c0_27, %c0_28] : memref<1x32xf32, #tpu.memory_space<vmem>>, vector<1x32xf32>
    %110 = vector.broadcast %109 : vector<1x32xf32> to vector<8x32xf32>
    %111 = arith.addf %108, %110 : vector<8x32xf32>
    %112 = arith.addf %0, %111 : vector<8x32xf32>
    %c0_29 = arith.constant 0 : index
    %c0_30 = arith.constant 0 : index
    %113 = vector.load %arg8[%c0_29, %c0_30] : memref<1x32xf32, #tpu.memory_space<vmem>>, vector<1x32xf32>
    %c0_31 = arith.constant 0 : index
    %c0_32 = arith.constant 0 : index
    %114 = vector.load %arg9[%c0_31, %c0_32] : memref<1x32xf32, #tpu.memory_space<vmem>>, vector<1x32xf32>
    %cst_33 = arith.constant dense<0.000000e+00> : vector<8xf32>
    %115 = vector.multi_reduction <add>, %112, %cst_33 [1] : vector<8x32xf32> to vector<8xf32>
    %116 = vector.shape_cast %115 : vector<8xf32> to vector<8x1xf32>
    %cst_34 = arith.constant 3.200000e+01 : f32
    %117 = vector.broadcast %cst_34 : f32 to vector<8x1xf32>
    %118 = arith.divf %116, %117 : vector<8x1xf32>
    %119 = vector.broadcast %118 : vector<8x1xf32> to vector<8x32xf32>
    %120 = arith.subf %112, %119 : vector<8x32xf32>
    %121 = arith.mulf %120, %120 : vector<8x32xf32>
    %cst_35 = arith.constant dense<0.000000e+00> : vector<8xf32>
    %122 = vector.multi_reduction <add>, %121, %cst_35 [1] : vector<8x32xf32> to vector<8xf32>
    %123 = vector.shape_cast %122 : vector<8xf32> to vector<8x1xf32>
    %cst_36 = arith.constant 3.200000e+01 : f32
    %124 = vector.broadcast %cst_36 : f32 to vector<8x1xf32>
    %125 = arith.divf %123, %124 : vector<8x1xf32>
    %126 = vector.broadcast %118 : vector<8x1xf32> to vector<8x32xf32>
    %127 = arith.subf %112, %126 : vector<8x32xf32>
    %cst_37 = arith.constant 9.99999974E-6 : f32
    %128 = vector.broadcast %cst_37 : f32 to vector<8x1xf32>
    %129 = arith.addf %125, %128 : vector<8x1xf32>
    %130 = math.rsqrt %129 : vector<8x1xf32>
    %131 = vector.broadcast %130 : vector<8x1xf32> to vector<8x32xf32>
    %132 = arith.mulf %127, %131 : vector<8x32xf32>
    %133 = vector.broadcast %113 : vector<1x32xf32> to vector<8x32xf32>
    %134 = arith.mulf %132, %133 : vector<8x32xf32>
    %135 = vector.broadcast %114 : vector<1x32xf32> to vector<8x32xf32>
    %136 = arith.addf %134, %135 : vector<8x32xf32>
    %137 = arith.truncf %136 : vector<8x32xf32> to vector<8x32xbf16>
    %c0_38 = arith.constant 0 : index
    %c0_39 = arith.constant 0 : index
    %138 = vector.load %arg10[%c0_38, %c0_39] : memref<32x128xbf16, #tpu.memory_space<vmem>>, vector<32x128xbf16>
    %cst_40 = arith.constant dense<0.000000e+00> : vector<8x128xf32>
    %139 = tpu.matmul %137, %138, %cst_40 {dimension_numbers = #tpu.dot_dimension_numbers<[1], [0], [0], [1], [0, 0, 1, 1], [], []>} : vector<8x32xbf16>, vector<32x128xbf16>, vector<8x128xf32> -> vector<8x128xf32>
    %c0_41 = arith.constant 0 : index
    %c0_42 = arith.constant 0 : index
    %140 = vector.load %arg11[%c0_41, %c0_42] : memref<1x128xf32, #tpu.memory_space<vmem>>, vector<1x128xf32>
    %141 = vector.broadcast %140 : vector<1x128xf32> to vector<8x128xf32>
    %142 = arith.addf %139, %141 : vector<8x128xf32>
    %cst_43 = arith.constant 5.000000e-01 : f32
    %143 = vector.broadcast %cst_43 : f32 to vector<8x128xf32>
    %144 = arith.mulf %143, %142 : vector<8x128xf32>
    %cst_44 = arith.constant 1.41421354 : f32
    %145 = vector.broadcast %cst_44 : f32 to vector<8x128xf32>
    %146 = arith.divf %142, %145 : vector<8x128xf32>
    %147 = math.erf %146 : vector<8x128xf32>
    %cst_45 = arith.constant 1.000000e+00 : f32
    %148 = vector.broadcast %cst_45 : f32 to vector<8x128xf32>
    %149 = arith.addf %148, %147 : vector<8x128xf32>
    %150 = arith.mulf %144, %149 : vector<8x128xf32>
    %151 = arith.truncf %150 : vector<8x128xf32> to vector<8x128xbf16>
    %c0_46 = arith.constant 0 : index
    %c0_47 = arith.constant 0 : index
    %152 = vector.load %arg12[%c0_46, %c0_47] : memref<128x32xbf16, #tpu.memory_space<vmem>>, vector<128x32xbf16>
    %cst_48 = arith.constant dense<0.000000e+00> : vector<8x32xf32>
    %153 = tpu.matmul %151, %152, %cst_48 {dimension_numbers = #tpu.dot_dimension_numbers<[1], [0], [0], [1], [0, 0, 1, 1], [], []>} : vector<8x128xbf16>, vector<128x32xbf16>, vector<8x32xf32> -> vector<8x32xf32>
    %c0_49 = arith.constant 0 : index
    %c0_50 = arith.constant 0 : index
    %154 = vector.load %arg13[%c0_49, %c0_50] : memref<1x32xf32, #tpu.memory_space<vmem>>, vector<1x32xf32>
    %155 = vector.broadcast %154 : vector<1x32xf32> to vector<8x32xf32>
    %156 = arith.addf %153, %155 : vector<8x32xf32>
    %157 = arith.addf %112, %156 : vector<8x32xf32>
    %c0_51 = arith.constant 0 : index
    %c0_52 = arith.constant 0 : index
    %158 = vector.load %arg14[%c0_51, %c0_52] : memref<8x32xf32, #tpu.memory_space<vmem>>, vector<8x32xf32>
    tpu.vector_store %arg14[%c0_51, %c0_52], %157 {strides = array<i32>} : memref<8x32xf32, #tpu.memory_space<vmem>>, vector<8x32xf32>,
    return
  }
  func.func @transform_0(%arg0: i32) -> (i32, i32) {
    %c0_i32 = arith.constant 0 : i32
    %c0_i32_0 = arith.constant 0 : i32
    return %arg0, %c0_i32 : i32, i32
  }
  func.func @transform_1(%arg0: i32) -> (i32, i32) {
    %c0_i32 = arith.constant 0 : i32
    %c0_i32_0 = arith.constant 0 : i32
    %c0_i32_1 = arith.constant 0 : i32
    return %c0_i32, %c0_i32_0 : i32, i32
  }
  func.func @transform_2(%arg0: i32) -> (i32, i32) {
    %c0_i32 = arith.constant 0 : i32
    %c0_i32_0 = arith.constant 0 : i32
    %c0_i32_1 = arith.constant 0 : i32
    return %c0_i32, %c0_i32_0 : i32, i32
  }
  func.func @transform_3(%arg0: i32) -> (i32, i32) {
    %c0_i32 = arith.constant 0 : i32
    %c0_i32_0 = arith.constant 0 : i32
    %c0_i32_1 = arith.constant 0 : i32
    return %c0_i32, %c0_i32_0 : i32, i32
  }
  func.func @transform_4(%arg0: i32) -> (i32, i32) {
    %c0_i32 = arith.constant 0 : i32
    %c0_i32_0 = arith.constant 0 : i32
    %c0_i32_1 = arith.constant 0 : i32
    return %c0_i32, %c0_i32_0 : i32, i32
  }
  func.func @transform_5(%arg0: i32) -> (i32, i32, i32) {
    %c0_i32 = arith.constant 0 : i32
    %c0_i32_0 = arith.constant 0 : i32
    %c0_i32_1 = arith.constant 0 : i32
    %c0_i32_2 = arith.constant 0 : i32
    return %c0_i32, %c0_i32_0, %c0_i32_1 : i32, i32, i32
  }
  func.func @transform_6(%arg0: i32) -> (i32, i32) {
    %c0_i32 = arith.constant 0 : i32
    %c0_i32_0 = arith.constant 0 : i32
    %c0_i32_1 = arith.constant 0 : i32
    return %c0_i32, %c0_i32_0 : i32, i32
  }
  func.func @transform_7(%arg0: i32) -> (i32, i32) {
    %c0_i32 = arith.constant 0 : i32
    %c0_i32_0 = arith.constant 0 : i32
    %c0_i32_1 = arith.constant 0 : i32
    return %c0_i32, %c0_i32_0 : i32, i32
  }
  func.func @transform_8(%arg0: i32) -> (i32, i32) {
    %c0_i32 = arith.constant 0 : i32
    %c0_i32_0 = arith.constant 0 : i32
    %c0_i32_1 = arith.constant 0 : i32
    return %c0_i32, %c0_i32_0 : i32, i32
  }
  func.func @transform_9(%arg0: i32) -> (i32, i32) {
    %c0_i32 = arith.constant 0 : i32
    %c0_i32_0 = arith.constant 0 : i32
    %c0_i32_1 = arith.constant 0 : i32
    return %c0_i32, %c0_i32_0 : i32, i32
  }
  func.func @transform_10(%arg0: i32) -> (i32, i32) {
    %c0_i32 = arith.constant 0 : i32
    %c0_i32_0 = arith.constant 0 : i32
    %c0_i32_1 = arith.constant 0 : i32
    return %c0_i32, %c0_i32_0 : i32, i32
  }
  func.func @transform_11(%arg0: i32) -> (i32, i32) {
    %c0_i32 = arith.constant 0 : i32
    %c0_i32_0 = arith.constant 0 : i32
    %c0_i32_1 = arith.constant 0 : i32
    return %c0_i32, %c0_i32_0 : i32, i32
  }
  func.func @transform_12(%arg0: i32) -> (i32, i32) {
    %c0_i32 = arith.constant 0 : i32
    %c0_i32_0 = arith.constant 0 : i32
    %c0_i32_1 = arith.constant 0 : i32
    return %c0_i32, %c0_i32_0 : i32, i32
  }
  func.func @transform_13(%arg0: i32) -> (i32, i32) {
    %c0_i32 = arith.constant 0 : i32
    %c0_i32_0 = arith.constant 0 : i32
    return %arg0, %c0_i32 : i32, i32
  }
}

</mosaic_0001>

<llo_original>
// kernel: tpu_custom_call.1
$region0: #{tpu_custom_call.1}
  #allocation0 [shape = 'u32[]', space=smem, size = 0x4, offset = 0x4, fixed_abs, tag = 'smem constant byte address 0x4 - core index']
  #allocation1 [shape = 'u32[72,128]{1,0:T(1,128)}', space=vmem, size = 0x9000, scoped, tag = 'internal scratch']
  %s0 = inlined_call_operand.vmem [shape: f32[16,32], index: 0, kind: input, shape index: {}]
  %s1 = inlined_call_operand.vmem [shape: f32[1,32], index: 1, kind: input, shape index: {}]
  %s2 = inlined_call_operand.vmem [shape: f32[1,32], index: 2, kind: input, shape index: {}]
  %s3 = inlined_call_operand.vmem [shape: bf16[32,96], index: 3, kind: input, shape index: {}]
  %s4 = inlined_call_operand.vmem [shape: f32[1,96], index: 4, kind: input, shape index: {}]
  %s5 = inlined_call_operand.vmem [shape: bf16[4,8,32], index: 5, kind: input, shape index: {}]
  %s6 = inlined_call_operand.vmem [shape: f32[1,32], index: 6, kind: input, shape index: {}]
  %s7 = inlined_call_operand.vmem [shape: f32[1,32], index: 7, kind: input, shape index: {}]
  %s8 = inlined_call_operand.vmem [shape: f32[1,32], index: 8, kind: input, shape index: {}]
  %s9 = inlined_call_operand.vmem [shape: bf16[32,128], index: 9, kind: input, shape index: {}]
  %s10 = inlined_call_operand.vmem [shape: f32[1,128], index: 10, kind: input, shape index: {}]
  %s11 = inlined_call_operand.vmem [shape: bf16[128,32], index: 11, kind: input, shape index: {}]
  %s12 = inlined_call_operand.vmem [shape: f32[1,32], index: 12, kind: input, shape index: {}]
  %s13 = inlined_call_operand.hbm [shape: f32[16,32], index: 13, kind: output, shape index: {}]
  %s14 = sld [smem:[#allocation0]]
  $region85: #{tpu_custom_call.1} parent=0
    _
  %s16 = ssub.s32 1, %s14
  %s17 = scalar_select 0, %s16, %s14
  $region1: #{tpu_custom_call.1} parent=0
    #allocation2 [shape = 'u8[8192]{0}', space=vmem, size = 0x2000, scoped, tag = 'output window, operand 0']
    #allocation3 [shape = 's32[2]{0}', space=sflag, size = 0x8, scoped, tag = 'scoped memory for tpu_custom_call.1']
    %18 = vsyncpa [#allocation3], 0
    %s19 = scalar_lea.sflag [#allocation3], 1
    %20 = vsyncpa %s19, 0
    loop: start=0, step=1, limit=4
    $region2: #{tpu_custom_call.1} parent=1 // loop_pre_header
      _
    $region3: #{tpu_custom_call.1} parent=1 // loop_header
      %s22 = sphi 0, %s26
      %p23 = scmp.ge.s32.totalorder %s22, 4
      %s32 = sphi 0, %s34
      %s35 = sphi 0, %s32
      %s36 = sphi 0, %s35
      %s52 = sphi 0, %s36
      %s56 = sphi 0, %s56
      %s58 = sphi 0, %s56
      %s59 = sphi 0, %s58
      %s73 = sphi 0, %s59
      %s77 = sphi 0, %s77
      %s79 = sphi 0, %s77
      %s80 = sphi 0, %s79
      %s94 = sphi 0, %s80
      %s98 = sphi 0, %s98
      %s100 = sphi 0, %s98
      %s101 = sphi 0, %s100
      %s115 = sphi 0, %s101
      %s119 = sphi 0, %s119
      %s121 = sphi 0, %s119
      %s122 = sphi 0, %s121
      %s136 = sphi 0, %s122
      %s140 = sphi 0, %s140
      %s142 = sphi 0, %s140
      %s143 = sphi 0, %s142
      %s157 = sphi 0, %s143
      %s161 = sphi 0, %s161
      %s163 = sphi 0, %s161
      %s164 = sphi 0, %s163
      %s178 = sphi 0, %s164
      %s182 = sphi 0, %s182
      %s184 = sphi 0, %s182
      %s185 = sphi 0, %s184
      %s199 = sphi 0, %s185
      %s203 = sphi 0, %s203
      %s205 = sphi 0, %s203
      %s206 = sphi 0, %s205
      %s220 = sphi 0, %s206
      %s224 = sphi 0, %s224
      %s226 = sphi 0, %s224
      %s227 = sphi 0, %s226
      %s241 = sphi 0, %s227
      %s245 = sphi 0, %s245
      %s247 = sphi 0, %s245
      %s248 = sphi 0, %s247
      %s262 = sphi 0, %s248
      %s266 = sphi 0, %s266
      %s268 = sphi 0, %s266
      %s269 = sphi 0, %s268
      %s283 = sphi 0, %s269
      %s287 = sphi 0, %s287
      %s289 = sphi 0, %s287
      %s290 = sphi 0, %s289
      %s304 = sphi 0, %s290
      %s310 = sphi 0, %s312
      %s313 = sphi 0, %s310
      %s314 = sphi 0, %s313
      %s330 = sphi 0, %s314
    $region4: #{tpu_custom_call.1} parent=1 // loop_header_branch
      %25 = sbr.rel (%p23) target = $region8
    $region5: #{tpu_custom_call.1} parent=1 // loop_body
      %s27 = ssub.s32 %s22, 1
      %s28 = ssub.s32 %s22, 2
      %s29 = sadd.s32 %s22, 1
      %s30 = ssub.s32 %s22, %s29
      %p31 = scmp.eq.s32.totalorder %s30, 0
      %s33 = sadd.s32 %s32, 1
      %s34 = scalar_select %p31, %s32, %s33
      %p37 = pneg %p31
      %p38 = scmp.eq.s32.totalorder %s22, 1
      %p39 = por %p37, %p38
      %p40 = scmp.ne.s32.totalorder %s32, %s35
      %p41 = scmp.eq.s32.totalorder %s22, 0
      %p42 = por %p40, %p41
      %p43 = scmp.ne.s32.totalorder %s32, %s35
      %p44 = scmp.eq.s32.totalorder %s27, 1
      %p45 = por %p43, %p44
      %p46 = scmp.ne.s32.totalorder %s35, %s36
      %p47 = scmp.eq.s32.totalorder %s27, 0
      %p48 = por %p46, %p47
      %p49 = scmp.ne.s32.totalorder %s35, %s36
      %p50 = scmp.eq.s32.totalorder %s28, 1
      %p51 = por %p49, %p50
      %p53 = scmp.ne.s32.totalorder %s36, %s52
      %p54 = scmp.eq.s32.totalorder %s28, 0
      %p55 = por %p53, %p54
      %s57 = sadd.s32 %s56, 1
      %p60 = scmp.eq.s32.totalorder %s22, 1
      %p61 = scmp.ne.s32.totalorder %s56, %s58
      %p62 = scmp.eq.s32.totalorder %s22, 0
      %p63 = por %p61, %p62
      %p64 = scmp.ne.s32.totalorder %s56, %s58
      %p65 = scmp.eq.s32.totalorder %s27, 1
      %p66 = por %p64, %p65
      %p67 = scmp.ne.s32.totalorder %s58, %s59
      %p68 = scmp.eq.s32.totalorder %s27, 0
      %p69 = por %p67, %p68
      %p70 = scmp.ne.s32.totalorder %s58, %s59
      %p71 = scmp.eq.s32.totalorder %s28, 1
      %p72 = por %p70, %p71
      %p74 = scmp.ne.s32.totalorder %s59, %s73
      %p75 = scmp.eq.s32.totalorder %s28, 0
      %p76 = por %p74, %p75
      %s78 = sadd.s32 %s77, 1
      %p81 = scmp.eq.s32.totalorder %s22, 1
      %p82 = scmp.ne.s32.totalorder %s77, %s79
      %p83 = scmp.eq.s32.totalorder %s22, 0
      %p84 = por %p82, %p83
      %p85 = scmp.ne.s32.totalorder %s77, %s79
      %p86 = scmp.eq.s32.totalorder %s27, 1
      %p87 = por %p85, %p86
      %p88 = scmp.ne.s32.totalorder %s79, %s80
      %p89 = scmp.eq.s32.totalorder %s27, 0
      %p90 = por %p88, %p89
      %p91 = scmp.ne.s32.totalorder %s79, %s80
      %p92 = scmp.eq.s32.totalorder %s28, 1
      %p93 = por %p91, %p92
      %p95 = scmp.ne.s32.totalorder %s80, %s94
      %p96 = scmp.eq.s32.totalorder %s28, 0
      %p97 = por %p95, %p96
      %s99 = sadd.s32 %s98, 1
      %p102 = scmp.eq.s32.totalorder %s22, 1
      %p103 = scmp.ne.s32.totalorder %s98, %s100
      %p104 = scmp.eq.s32.totalorder %s22, 0
      %p105 = por %p103, %p104
      %p106 = scmp.ne.s32.totalorder %s98, %s100
      %p107 = scmp.eq.s32.totalorder %s27, 1
      %p108 = por %p106, %p107
      %p109 = scmp.ne.s32.totalorder %s100, %s101
      %p110 = scmp.eq.s32.totalorder %s27, 0
      %p111 = por %p109, %p110
      %p112 = scmp.ne.s32.totalorder %s100, %s101
      %p113 = scmp.eq.s32.totalorder %s28, 1
      %p114 = por %p112, %p113
      %p116 = scmp.ne.s32.totalorder %s101, %s115
      %p117 = scmp.eq.s32.totalorder %s28, 0
      %p118 = por %p116, %p117
      %s120 = sadd.s32 %s119, 1
      %p123 = scmp.eq.s32.totalorder %s22, 1
      %p124 = scmp.ne.s32.totalorder %s119, %s121
      %p125 = scmp.eq.s32.totalorder %s22, 0
      %p126 = por %p124, %p125
      %p127 = scmp.ne.s32.totalorder %s119, %s121
      %p128 = scmp.eq.s32.totalorder %s27, 1
      %p129 = por %p127, %p128
      %p130 = scmp.ne.s32.totalorder %s121, %s122
      %p131 = scmp.eq.s32.totalorder %s27, 0
      %p132 = por %p130, %p131
      %p133 = scmp.ne.s32.totalorder %s121, %s122
      %p134 = scmp.eq.s32.totalorder %s28, 1
      %p135 = por %p133, %p134
      %p137 = scmp.ne.s32.totalorder %s122, %s136
      %p138 = scmp.eq.s32.totalorder %s28, 0
      %p139 = por %p137, %p138
      %s141 = sadd.s32 %s140, 1
      %p144 = scmp.eq.s32.totalorder %s22, 1
      %p145 = scmp.ne.s32.totalorder %s140, %s142
      %p146 = scmp.eq.s32.totalorder %s22, 0
      %p147 = por %p145, %p146
      %p148 = scmp.ne.s32.totalorder %s140, %s142
      %p149 = scmp.eq.s32.totalorder %s27, 1
      %p150 = por %p148, %p149
      %p151 = scmp.ne.s32.totalorder %s142, %s143
      %p152 = scmp.eq.s32.totalorder %s27, 0
      %p153 = por %p151, %p152
      %p154 = scmp.ne.s32.totalorder %s142, %s143
      %p155 = scmp.eq.s32.totalorder %s28, 1
      %p156 = por %p154, %p155
      %p158 = scmp.ne.s32.totalorder %s143, %s157
      %p159 = scmp.eq.s32.totalorder %s28, 0
      %p160 = por %p158, %p159
      %s162 = sadd.s32 %s161, 1
      %p165 = scmp.eq.s32.totalorder %s22, 1
      %p166 = scmp.ne.s32.totalorder %s161, %s163
      %p167 = scmp.eq.s32.totalorder %s22, 0
      %p168 = por %p166, %p167
      %p169 = scmp.ne.s32.totalorder %s161, %s163
      %p170 = scmp.eq.s32.totalorder %s27, 1
      %p171 = por %p169, %p170
      %p172 = scmp.ne.s32.totalorder %s163, %s164
      %p173 = scmp.eq.s32.totalorder %s27, 0
      %p174 = por %p172, %p173
      %p175 = scmp.ne.s32.totalorder %s163, %s164
      %p176 = scmp.eq.s32.totalorder %s28, 1
      %p177 = por %p175, %p176
      %p179 = scmp.ne.s32.totalorder %s164, %s178
      %p180 = scmp.eq.s32.totalorder %s28, 0
      %p181 = por %p179, %p180
      %s183 = sadd.s32 %s182, 1
      %p186 = scmp.eq.s32.totalorder %s22, 1
      %p187 = scmp.ne.s32.totalorder %s182, %s184
      %p188 = scmp.eq.s32.totalorder %s22, 0
      %p189 = por %p187, %p188
      %p190 = scmp.ne.s32.totalorder %s182, %s184
      %p191 = scmp.eq.s32.totalorder %s27, 1
      %p192 = por %p190, %p191
      %p193 = scmp.ne.s32.totalorder %s184, %s185
      %p194 = scmp.eq.s32.totalorder %s27, 0
      %p195 = por %p193, %p194
      %p196 = scmp.ne.s32.totalorder %s184, %s185
      %p197 = scmp.eq.s32.totalorder %s28, 1
      %p198 = por %p196, %p197
      %p200 = scmp.ne.s32.totalorder %s185, %s199
      %p201 = scmp.eq.s32.totalorder %s28, 0
      %p202 = por %p200, %p201
      %s204 = sadd.s32 %s203, 1
      %p207 = scmp.eq.s32.totalorder %s22, 1
      %p208 = scmp.ne.s32.totalorder %s203, %s205
      %p209 = scmp.eq.s32.totalorder %s22, 0
      %p210 = por %p208, %p209
      %p211 = scmp.ne.s32.totalorder %s203, %s205
      %p212 = scmp.eq.s32.totalorder %s27, 1
      %p213 = por %p211, %p212
      %p214 = scmp.ne.s32.totalorder %s205, %s206
      %p215 = scmp.eq.s32.totalorder %s27, 0
      %p216 = por %p214, %p215
      %p217 = scmp.ne.s32.totalorder %s205, %s206
      %p218 = scmp.eq.s32.totalorder %s28, 1
      %p219 = por %p217, %p218
      %p221 = scmp.ne.s32.totalorder %s206, %s220
      %p222 = scmp.eq.s32.totalorder %s28, 0
      %p223 = por %p221, %p222
      %s225 = sadd.s32 %s224, 1
      %p228 = scmp.eq.s32.totalorder %s22, 1
      %p229 = scmp.ne.s32.totalorder %s224, %s226
      %p230 = scmp.eq.s32.totalorder %s22, 0
      %p231 = por %p229, %p230
      %p232 = scmp.ne.s32.totalorder %s224, %s226
      %p233 = scmp.eq.s32.totalorder %s27, 1
      %p234 = por %p232, %p233
      %p235 = scmp.ne.s32.totalorder %s226, %s227
      %p236 = scmp.eq.s32.totalorder %s27, 0
      %p237 = por %p235, %p236
      %p238 = scmp.ne.s32.totalorder %s226, %s227
      %p239 = scmp.eq.s32.totalorder %s28, 1
      %p240 = por %p238, %p239
      %p242 = scmp.ne.s32.totalorder %s227, %s241
      %p243 = scmp.eq.s32.totalorder %s28, 0
      %p244 = por %p242, %p243
      %s246 = sadd.s32 %s245, 1
      %p249 = scmp.eq.s32.totalorder %s22, 1
      %p250 = scmp.ne.s32.totalorder %s245, %s247
      %p251 = scmp.eq.s32.totalorder %s22, 0
      %p252 = por %p250, %p251
      %p253 = scmp.ne.s32.totalorder %s245, %s247
      %p254 = scmp.eq.s32.totalorder %s27, 1
      %p255 = por %p253, %p254
      %p256 = scmp.ne.s32.totalorder %s247, %s248
      %p257 = scmp.eq.s32.totalorder %s27, 0
      %p258 = por %p256, %p257
      %p259 = scmp.ne.s32.totalorder %s247, %s248
      %p260 = scmp.eq.s32.totalorder %s28, 1
      %p261 = por %p259, %p260
      %p263 = scmp.ne.s32.totalorder %s248, %s262
      %p264 = scmp.eq.s32.totalorder %s28, 0
      %p265 = por %p263, %p264
      %s267 = sadd.s32 %s266, 1
      %p270 = scmp.eq.s32.totalorder %s22, 1
      %p271 = scmp.ne.s32.totalorder %s266, %s268
      %p272 = scmp.eq.s32.totalorder %s22, 0
      %p273 = por %p271, %p272
      %p274 = scmp.ne.s32.totalorder %s266, %s268
      %p275 = scmp.eq.s32.totalorder %s27, 1
      %p276 = por %p274, %p275
      %p277 = scmp.ne.s32.totalorder %s268, %s269
      %p278 = scmp.eq.s32.totalorder %s27, 0
      %p279 = por %p277, %p278
      %p280 = scmp.ne.s32.totalorder %s268, %s269
      %p281 = scmp.eq.s32.totalorder %s28, 1
      %p282 = por %p280, %p281
      %p284 = scmp.ne.s32.totalorder %s269, %s283
      %p285 = scmp.eq.s32.totalorder %s28, 0
      %p286 = por %p284, %p285
      %s288 = sadd.s32 %s287, 1
      %p291 = scmp.eq.s32.totalorder %s22, 1
      %p292 = scmp.ne.s32.totalorder %s287, %s289
      %p293 = scmp.eq.s32.totalorder %s22, 0
      %p294 = por %p292, %p293
      %p295 = scmp.ne.s32.totalorder %s287, %s289
      %p296 = scmp.eq.s32.totalorder %s27, 1
      %p297 = por %p295, %p296
      %p298 = scmp.ne.s32.totalorder %s289, %s290
      %p299 = scmp.eq.s32.totalorder %s27, 0
      %p300 = por %p298, %p299
      %p301 = scmp.ne.s32.totalorder %s289, %s290
      %p302 = scmp.eq.s32.totalorder %s28, 1
      %p303 = por %p301, %p302
      %p305 = scmp.ne.s32.totalorder %s290, %s304
      %p306 = scmp.eq.s32.totalorder %s28, 0
      %p307 = por %p305, %p306
      %s308 = ssub.s32 %s22, %s29
      %p309 = scmp.eq.s32.totalorder %s308, 0
      %s311 = sadd.s32 %s310, 1
      %s312 = scalar_select %p309, %s310, %s311
      %p315 = pneg %p309
      %p316 = scmp.eq.s32.totalorder %s22, 1
      %p317 = por %p315, %p316
      %p318 = scmp.ne.s32.totalorder %s310, %s313
      %p319 = scmp.eq.s32.totalorder %s22, 0
      %p320 = por %p318, %p319
      %p321 = scmp.ne.s32.totalorder %s310, %s313
      %p322 = scmp.eq.s32.totalorder %s27, 1
      %p323 = por %p321, %p322
      %p324 = scmp.ne.s32.totalorder %s313, %s314
      %p325 = scmp.eq.s32.totalorder %s27, 0
      %p326 = por %p324, %p325
      %p327 = scmp.ne.s32.totalorder %s313, %s314
      %p328 = scmp.eq.s32.totalorder %s28, 1
      %p329 = por %p327, %p328
      %p331 = scmp.ne.s32.totalorder %s314, %s330
      %p332 = scmp.eq.s32.totalorder %s28, 0
      %p333 = por %p331, %p332
      %p334 = scmp.le.s32.totalorder 1, %s22
      %p335 = scmp.lt.s32.totalorder %s22, 3
      %p336 = pnand %p334, %p335
      %p337 = pneg %p336
      // Predicated region
      $region9: #{tpu_custom_call.1} parent=5 // pred_check
        _
      $region10: #{tpu_custom_call.1} parent=5 // pred_check_branch
        %339 = sbr.rel (%p336) target = $region12
      $region11: #{tpu_custom_call.1} parent=5 // pred_region
        %s340 = ssub.s32 %s22, 1
        // Predicated region
        $region13: #{tpu_custom_call.1} parent=11 // pred_check
          %p341 = pneg %p69
        $region14: #{tpu_custom_call.1} parent=11 // pred_check_branch
          %343 = sbr.rel (%p341) target = $region16
        $region15: #{tpu_custom_call.1} parent=11 // pred_region
          _
        $region16: #{tpu_custom_call.1} parent=11 // pred_fallthru
          _
        // Predicated region
        $region17: #{tpu_custom_call.1} parent=11 // pred_check
          %p344 = pneg %p90
        $region18: #{tpu_custom_call.1} parent=11 // pred_check_branch
          %346 = sbr.rel (%p344) target = $region20
        $region19: #{tpu_custom_call.1} parent=11 // pred_region
          _
        $region20: #{tpu_custom_call.1} parent=11 // pred_fallthru
          _
        // Predicated region
        $region21: #{tpu_custom_call.1} parent=11 // pred_check
          %p347 = pneg %p111
        $region22: #{tpu_custom_call.1} parent=11 // pred_check_branch
          %349 = sbr.rel (%p347) target = $region24
        $region23: #{tpu_custom_call.1} parent=11 // pred_region
          _
        $region24: #{tpu_custom_call.1} parent=11 // pred_fallthru
          _
        // Predicated region
        $region25: #{tpu_custom_call.1} parent=11 // pred_check
          %p350 = pneg %p132
        $region26: #{tpu_custom_call.1} parent=11 // pred_check_branch
          %352 = sbr.rel (%p350) target = $region28
        $region27: #{tpu_custom_call.1} parent=11 // pred_region
          _
        $region28: #{tpu_custom_call.1} parent=11 // pred_fallthru
          _
        // Predicated region
        $region29: #{tpu_custom_call.1} parent=11 // pred_check
          %p353 = pneg %p153
        $region30: #{tpu_custom_call.1} parent=11 // pred_check_branch
          %355 = sbr.rel (%p353) target = $region32
        $region31: #{tpu_custom_call.1} parent=11 // pred_region
          _
        $region32: #{tpu_custom_call.1} parent=11 // pred_fallthru
          _
        // Predicated region
        $region33: #{tpu_custom_call.1} parent=11 // pred_check
          %p356 = pneg %p174
        $region34: #{tpu_custom_call.1} parent=11 // pred_check_branch
          %358 = sbr.rel (%p356) target = $region36
        $region35: #{tpu_custom_call.1} parent=11 // pred_region
          _
        $region36: #{tpu_custom_call.1} parent=11 // pred_fallthru
          _
        // Predicated region
        $region37: #{tpu_custom_call.1} parent=11 // pred_check
          %p359 = pneg %p195
        $region38: #{tpu_custom_call.1} parent=11 // pred_check_branch
          %361 = sbr.rel (%p359) target = $region40
        $region39: #{tpu_custom_call.1} parent=11 // pred_region
          _
        $region40: #{tpu_custom_call.1} parent=11 // pred_fallthru
          _
        // Predicated region
        $region41: #{tpu_custom_call.1} parent=11 // pred_check
          %p362 = pneg %p216
        $region42: #{tpu_custom_call.1} parent=11 // pred_check_branch
          %364 = sbr.rel (%p362) target = $region44
        $region43: #{tpu_custom_call.1} parent=11 // pred_region
          _
        $region44: #{tpu_custom_call.1} parent=11 // pred_fallthru
          _
        // Predicated region
        $region45: #{tpu_custom_call.1} parent=11 // pred_check
          %p365 = pneg %p237
        $region46: #{tpu_custom_call.1} parent=11 // pred_check_branch
          %367 = sbr.rel (%p365) target = $region48
        $region47: #{tpu_custom_call.1} parent=11 // pred_region
          _
        $region48: #{tpu_custom_call.1} parent=11 // pred_fallthru
          _
        // Predicated region
        $region49: #{tpu_custom_call.1} parent=11 // pred_check
          %p368 = pneg %p258
        $region50: #{tpu_custom_call.1} parent=11 // pred_check_branch
          %370 = sbr.rel (%p368) target = $region52
        $region51: #{tpu_custom_call.1} parent=11 // pred_region
          _
        $region52: #{tpu_custom_call.1} parent=11 // pred_fallthru
          _
        // Predicated region
        $region53: #{tpu_custom_call.1} parent=11 // pred_check
          %p371 = pneg %p279
        $region54: #{tpu_custom_call.1} parent=11 // pred_check_branch
          %373 = sbr.rel (%p371) target = $region56
        $region55: #{tpu_custom_call.1} parent=11 // pred_region
          _
        $region56: #{tpu_custom_call.1} parent=11 // pred_fallthru
          _
        // Predicated region
        $region57: #{tpu_custom_call.1} parent=11 // pred_check
          %p374 = pneg %p300
        $region58: #{tpu_custom_call.1} parent=11 // pred_check_branch
          %376 = sbr.rel (%p374) target = $region60
        $region59: #{tpu_custom_call.1} parent=11 // pred_region
          _
        $region60: #{tpu_custom_call.1} parent=11 // pred_fallthru
          _
      $region12: #{tpu_custom_call.1} parent=5 // pred_fallthru
        _
      %p377 = scmp.lt.s32.totalorder %s22, 2
      // Predicated region
      $region61: #{tpu_custom_call.1} parent=5 // pred_check
        %p378 = pneg %p377
      $region62: #{tpu_custom_call.1} parent=5 // pred_check_branch
        %380 = sbr.rel (%p378) target = $region64
      $region63: #{tpu_custom_call.1} parent=5 // pred_region
        // Predicated region
        $region65: #{tpu_custom_call.1} parent=63 // pred_check
          %p381 = pneg %p42
        $region66: #{tpu_custom_call.1} parent=63 // pred_check_branch
          %383 = sbr.rel (%p381) target = $region68
        $region67: #{tpu_custom_call.1} parent=63 // pred_region
          %p384 = scmp.lt.s32.totalorder %s22, 1
          %s385 = scalar_select %p384, %s22, 1
          %s386 = smul.addr %s385, 8
          %s387 = scalar_lea.vmem %s0, %s386
        $region68: #{tpu_custom_call.1} parent=63 // pred_fallthru
          _
      $region64: #{tpu_custom_call.1} parent=5 // pred_fallthru
        _
      %p388 = scmp.le.s32.totalorder 1, %s22
      %p389 = scmp.lt.s32.totalorder %s22, 3
      %p390 = pnand %p388, %p389
      %p391 = pneg %p390
      // Predicated region
      $region69: #{tpu_custom_call.1} parent=5 // pred_check
        _
      $region70: #{tpu_custom_call.1} parent=5 // pred_check_branch
        %393 = sbr.rel (%p390) target = $region72
      $region71: #{tpu_custom_call.1} parent=5 // pred_region
        %s394 = ssub.s32 %s22, 1
        %p395 = scmp.lt.s32.totalorder %s27, 1
        %s396 = scalar_select %p395, %s27, 1
        %s397 = smul.addr %s396, 8
        %s398 = scalar_lea.vmem %s0, %s397
        %p399 = pneg %p48
        %p400 = pneg %p45
        %p401 = pneg %p69
        %p402 = pneg %p66
        %p403 = pneg %p90
        %p404 = pneg %p87
        %p405 = pneg %p111
        %p406 = pneg %p108
        %p407 = pneg %p132
        %p408 = pneg %p129
        %p409 = pneg %p153
        %p410 = pneg %p150
        %p411 = pneg %p174
        %p412 = pneg %p171
        %p413 = pneg %p195
        %p414 = pneg %p192
        %p415 = pneg %p216
        %p416 = pneg %p213
        %p417 = pneg %p237
        %p418 = pneg %p234
        %p419 = pneg %p258
        %p420 = pneg %p255
        %p421 = pneg %p279
        %p422 = pneg %p276
        %p423 = pneg %p300
        %p424 = pneg %p297
        %p425 = pneg %p326
        %p426 = pneg %p323
        %s427 = sand.u32 %s313, 1
        %s428 = scalar_lea.sflag [#allocation3], %s427
        %s429 = sand.u32 %s313, 1
        %s430 = smul.addr %s429, 8
        %s431 = scalar_lea.vmem [#allocation2], %s430
        %p432 = scmp.lt.s32.totalorder %s27, 1
        %s433 = scalar_select %p432, %s27, 1
        %s434 = smul.addr %s433, 8
        %s435 = scalar_lea.vmem %s0, %s434
        %v437 = vld [vmem:[%s435] sm:$0xff]
        %v438 = vld [vmem:[%s1] sm:$0x1]
        %v439 = vld [vmem:[%s2] sm:$0x1]
        %vm440 = vcmask 261120
        %v441 = vsel %vm440, %v437, 0.0
        %442 = vadd.xlane.f32.xlu0 %v441
        %v443 = vpop.xlane.xlu0 %442
        %v444 = vrcp.pop 32.0
        %v445 = vmul.f32 32.0, %v444
        %v446 = vsub.f32 1.0, %v445
        %v447 = vmul.f32 %v444, %v446
        %v448 = vadd.f32 %v444, %v447
        %vm449 = vweird.f32 %v444
        %v450 = vsel %vm449, %v444, %v448
        %v451 = vmul.f32 %v443, %v450
        %v452 = vsub.f32 %v437, %v451
        %v453 = vmul.f32 %v452, %v452
        %v454 = vsel %vm440, %v453, 0.0
        %455 = vadd.xlane.f32.xlu0 %v454
        %v456 = vpop.xlane.xlu0 %455
        %v457 = vmul.f32 %v456, %v450
        %v458 = vadd.f32 %v457, 1e-05
        %v459 = vrsqrt.pop %v458
        %v460 = vmul.f32 %v459, %v458
        %v461 = vmul.f32 %v460, %v459
        %v462 = vmul.f32 0.5, %v461
        %v463 = vsub.f32 1.5, %v462
        %v464 = vmul.f32 %v459, %v463
        %vm465 = vweird.f32 %v458
        %vm466 = vweird.f32 %v459
        %vm467 = vmor %vm465, %vm466
        %v468 = vsel %vm467, %v459, %v464
        %v469 = vmul.f32 %v452, %v468
        %v471 = vperm.slane %v438, 0
        %v473 = vmul.f32 %v469, %v471
        %v475 = vperm.slane %v439, 0
        %v477 = vadd.f32 %v473, %v475
        %v478 = vpack.c.bf16 %v477, %v477
        %v479 = vld [vmem:[%s3] sm:$0xf]
        %v480 = vld [vmem:[%s3 + $0x4] sm:$0xf]
        %v481 = vld [vmem:[%s3 + $0x8] sm:$0xf]
        %v482 = vld [vmem:[%s3 + $0xc] sm:$0xf]
        %v483 = vld [vmem:[%s4] sm:$0x1]
        %v485 = vperm.slane %v483, 0
        %v491 = vunpack.c.l.b16 %v479
        %v492 = vunpack.c.l.b16 %v480
        %v493 = vunpack.c.l.b16 %v481
        %v494 = vunpack.c.l.b16 %v482
        %v495 = vpack.c.b16 %v492, %v491
        %v496 = vpack.c.b16 %v494, %v493
        %v500 = vsel %vm440, %v478, 0
        %502 = vmatpush.bf16.msra.mxu0 0
        %503 = vmatpush.bf16.msra.mxu0 0
        %504 = vmatpush.bf16.msra.mxu0 0
        %505 = vmatpush.bf16.msra.mxu0 0
        %506 = vmatpush.bf16.msra.mxu0 0
        %507 = vmatpush.bf16.msra.mxu0 0
        %508 = vmatpush.bf16.msra.mxu0 %v496
        %509 = vmatpush.bf16.msra.mxu0 %v495
        %510 = vmatmul.bf16.gmra.mxu0 %v500
        %v511 = vpop.f32.mrf.mxu0
        %v512 = vadd.f32 %v485, %v511
        %v513 = vpop.f32.mrf.mxu0
        %514 = vdwg.mxu0
        %v515 = vmul.f32 %v512, 0.35355338
        %517 = vrot.lane.b32.xlu0 %v515, 120
        %v518 = vpop.permute.xlu0 %517
        %520 = vrot.lane.b32.xlu0 %v515, 112
        %v521 = vpop.permute.xlu0 %520
        %523 = vrot.lane.b32.xlu0 %v515, 104
        %v524 = vpop.permute.xlu0 %523
        %v526 = vpack.c.bf16 %v515, %v515
        %v527 = vpack.c.bf16 %v518, %v518
        %v528 = vpack.c.bf16 %v521, %v521
        %v529 = vpack.c.bf16 %v524, %v524
        %531 = vrot.lane.b32.xlu0 %v512, 120
        %v532 = vpop.permute.xlu0 %531
        %534 = vrot.lane.b32.xlu0 %v512, 112
        %v535 = vpop.permute.xlu0 %534
        %537 = vrot.lane.b32.xlu0 %v512, 104
        %v538 = vpop.permute.xlu0 %537
        %v540 = vpack.c.bf16 %v512, %v512
        %v541 = vpack.c.bf16 %v532, %v532
        %v542 = vpack.c.bf16 %v535, %v535
        %v543 = vpack.c.bf16 %v538, %v538
        %v545 = vunpack.c.l.b16 %v540
        %v546 = vpack.c.b16 %v545, %v545
        %547 = vrot.lane.b32.xlu0 %v546, 96
        %v548 = vpop.permute.xlu0 %547
        %vm549 = vcmask 64512
        %v551 = vsel %vm549, %v526, 0
        %v554 = vsel %vm549, %v548, 0
        %556 = vmatpush.bf16.xpose.msra.mxu0 0
        %557 = vmatpush.bf16.xpose.msra.mxu0 0
        %558 = vmatpush.bf16.xpose.msra.mxu0 0
        %559 = vmatpush.bf16.xpose.msra.mxu0 0
        %560 = vmatpush.bf16.xpose.msra.mxu0 0
        %561 = vmatpush.bf16.xpose.msra.mxu0 0
        %562 = vmatpush.bf16.xpose.msra.mxu0 0
        %563 = vmatpush.bf16.xpose.msra.mxu0 %v554
        %564 = vmatmul.bf16.gmra.mxu0 %v551
        %v565 = vpop.f32.mrf.mxu0
        %v566 = vadd.f32 0.0, %v565
        %v567 = vpop.f32.mrf.mxu0
        %568 = vdwg.mxu0
        %v570 = vunpack.c.l.b16 %v541
        %v571 = vpack.c.b16 %v570, %v570
        %572 = vrot.lane.b32.xlu0 %v571, 96
        %v573 = vpop.permute.xlu0 %572
        %v575 = vsel %vm549, %v527, 0
        %v578 = vsel %vm549, %v573, 0
        %580 = vmatpush.bf16.xpose.msra.mxu0 0
        %581 = vmatpush.bf16.xpose.msra.mxu0 0
        %582 = vmatpush.bf16.xpose.msra.mxu0 0
        %583 = vmatpush.bf16.xpose.msra.mxu0 0
        %584 = vmatpush.bf16.xpose.msra.mxu0 0
        %585 = vmatpush.bf16.xpose.msra.mxu0 0
        %586 = vmatpush.bf16.xpose.msra.mxu0 0
        %587 = vmatpush.bf16.xpose.msra.mxu0 %v578
        %588 = vmatmul.bf16.gmra.mxu0 %v575
        %v589 = vpop.f32.mrf.mxu0
        %v590 = vadd.f32 0.0, %v589
        %v591 = vpop.f32.mrf.mxu0
        %592 = vdwg.mxu0
        %v594 = vunpack.c.l.b16 %v542
        %v595 = vpack.c.b16 %v594, %v594
        %596 = vrot.lane.b32.xlu0 %v595, 96
        %v597 = vpop.permute.xlu0 %596
        %v599 = vsel %vm549, %v528, 0
        %v602 = vsel %vm549, %v597, 0
        %604 = vmatpush.bf16.xpose.msra.mxu0 0
        %605 = vmatpush.bf16.xpose.msra.mxu0 0
        %606 = vmatpush.bf16.xpose.msra.mxu0 0
        %607 = vmatpush.bf16.xpose.msra.mxu0 0
        %608 = vmatpush.bf16.xpose.msra.mxu0 0
        %609 = vmatpush.bf16.xpose.msra.mxu0 0
        %610 = vmatpush.bf16.xpose.msra.mxu0 0
        %611 = vmatpush.bf16.xpose.msra.mxu0 %v602
        %612 = vmatmul.bf16.gmra.mxu0 %v599
        %v613 = vpop.f32.mrf.mxu0
        %v614 = vadd.f32 0.0, %v613
        %v615 = vpop.f32.mrf.mxu0
        %616 = vdwg.mxu0
        %v618 = vunpack.c.l.b16 %v543
        %v619 = vpack.c.b16 %v618, %v618
        %620 = vrot.lane.b32.xlu0 %v619, 96
        %v621 = vpop.permute.xlu0 %620
        %v623 = vsel %vm549, %v529, 0
        %v626 = vsel %vm549, %v621, 0
        %628 = vmatpush.bf16.xpose.msra.mxu0 0
        %629 = vmatpush.bf16.xpose.msra.mxu0 0
        %630 = vmatpush.bf16.xpose.msra.mxu0 0
        %631 = vmatpush.bf16.xpose.msra.mxu0 0
        %632 = vmatpush.bf16.xpose.msra.mxu0 0
        %633 = vmatpush.bf16.xpose.msra.mxu0 0
        %634 = vmatpush.bf16.xpose.msra.mxu0 0
        %635 = vmatpush.bf16.xpose.msra.mxu0 %v626
        %636 = vmatmul.bf16.gmra.mxu0 %v623
        %v637 = vpop.f32.mrf.mxu0
        %v638 = vadd.f32 0.0, %v637
        %v639 = vpop.f32.mrf.mxu0
        %640 = vdwg.mxu0
        %v641 = vsel %vm549, %v566, -inf
        %642 = vmax.xlane.f32.xlu0 %v641
        %v643 = vpop.xlane.xlu0 %642
        %v644 = vsel %vm549, %v590, -inf
        %645 = vmax.xlane.f32.xlu0 %v644
        %v646 = vpop.xlane.xlu0 %645
        %v647 = vsel %vm549, %v614, -inf
        %648 = vmax.xlane.f32.xlu0 %v647
        %v649 = vpop.xlane.xlu0 %648
        %v650 = vsel %vm549, %v638, -inf
        %651 = vmax.xlane.f32.xlu0 %v650
        %v652 = vpop.xlane.xlu0 %651
        %v653 = vsub.f32 -inf, %v643
        %v654 = vsub.f32 -inf, %v646
        %v655 = vsub.f32 -inf, %v649
        %v656 = vsub.f32 -inf, %v652
        %v657 = vmul.f32 %v653, 1.442695
        %v658 = vpow.pop %v657
        %v659 = vmul.f32 %v654, 1.442695
        %v660 = vpow.pop %v659
        %v661 = vmul.f32 %v655, 1.442695
        %v662 = vpow.pop %v661
        %v663 = vmul.f32 %v656, 1.442695
        %v664 = vpow.pop %v663
        %v665 = vsub.f32 %v566, %v643
        %v666 = vsub.f32 %v590, %v646
        %v667 = vsub.f32 %v614, %v649
        %v668 = vsub.f32 %v638, %v652
        %v669 = vmul.f32 %v665, 1.442695
        %v670 = vpow.pop %v669
        %v671 = vmul.f32 %v666, 1.442695
        %v672 = vpow.pop %v671
        %v673 = vmul.f32 %v667, 1.442695
        %v674 = vpow.pop %v673
        %v675 = vmul.f32 %v668, 1.442695
        %v676 = vpow.pop %v675
        %v677 = vmul.f32 %v658, 0.0
        %v678 = vmul.f32 %v660, 0.0
        %v679 = vmul.f32 %v662, 0.0
        %v680 = vmul.f32 %v664, 0.0
        %v681 = vsel %vm549, %v670, 0.0
        %682 = vadd.xlane.f32.xlu0 %v681
        %v683 = vpop.xlane.xlu0 %682
        %v684 = vsel %vm549, %v672, 0.0
        %685 = vadd.xlane.f32.xlu0 %v684
        %v686 = vpop.xlane.xlu0 %685
        %v687 = vsel %vm549, %v674, 0.0
        %688 = vadd.xlane.f32.xlu0 %v687
        %v689 = vpop.xlane.xlu0 %688
        %v690 = vsel %vm549, %v676, 0.0
        %691 = vadd.xlane.f32.xlu0 %v690
        %v692 = vpop.xlane.xlu0 %691
        %v693 = vadd.f32 %v677, %v683
        %v694 = vadd.f32 %v678, %v686
        %v695 = vadd.f32 %v679, %v689
        %v696 = vadd.f32 %v680, %v692
        %v697 = vpack.c.bf16 %v670, %v670
        %v698 = vpack.c.bf16 %v672, %v672
        %v699 = vpack.c.bf16 %v674, %v674
        %v700 = vpack.c.bf16 %v676, %v676
        %701 = vrot.lane.b32.xlu0 %v546, 64
        %v702 = vpop.permute.xlu0 %701
        %v704 = vsel %vm549, %v697, 0
        %vm706 = vcmask 1043456
        %v708 = vsel %vm706, %v702, 0
        %710 = vmatpush.bf16.msra.mxu0 0
        %711 = vmatpush.bf16.msra.mxu0 0
        %712 = vmatpush.bf16.msra.mxu0 0
        %713 = vmatpush.bf16.msra.mxu0 0
        %714 = vmatpush.bf16.msra.mxu0 0
        %715 = vmatpush.bf16.msra.mxu0 0
        %716 = vmatpush.bf16.msra.mxu0 0
        %717 = vmatpush.bf16.msra.mxu0 %v708
        %718 = vmatmul.bf16.gmra.mxu0 %v704
        %v719 = vpop.f32.mrf.mxu0
        %v720 = vadd.f32 0.0, %v719
        %v721 = vpop.f32.mrf.mxu0
        %722 = vdwg.mxu0
        %723 = vrot.lane.b32.xlu0 %v571, 64
        %v724 = vpop.permute.xlu0 %723
        %v726 = vsel %vm549, %v698, 0
        %v729 = vsel %vm706, %v724, 0
        %731 = vmatpush.bf16.msra.mxu0 0
        %732 = vmatpush.bf16.msra.mxu0 0
        %733 = vmatpush.bf16.msra.mxu0 0
        %734 = vmatpush.bf16.msra.mxu0 0
        %735 = vmatpush.bf16.msra.mxu0 0
        %736 = vmatpush.bf16.msra.mxu0 0
        %737 = vmatpush.bf16.msra.mxu0 0
        %738 = vmatpush.bf16.msra.mxu0 %v729
        %739 = vmatmul.bf16.gmra.mxu0 %v726
        %v740 = vpop.f32.mrf.mxu0
        %v741 = vadd.f32 0.0, %v740
        %v742 = vpop.f32.mrf.mxu0
        %743 = vdwg.mxu0
        %744 = vrot.lane.b32.xlu0 %v595, 64
        %v745 = vpop.permute.xlu0 %744
        %v747 = vsel %vm549, %v699, 0
        %v750 = vsel %vm706, %v745, 0
        %752 = vmatpush.bf16.msra.mxu0 0
        %753 = vmatpush.bf16.msra.mxu0 0
        %754 = vmatpush.bf16.msra.mxu0 0
        %755 = vmatpush.bf16.msra.mxu0 0
        %756 = vmatpush.bf16.msra.mxu0 0
        %757 = vmatpush.bf16.msra.mxu0 0
        %758 = vmatpush.bf16.msra.mxu0 0
        %759 = vmatpush.bf16.msra.mxu0 %v750
        %760 = vmatmul.bf16.gmra.mxu0 %v747
        %v761 = vpop.f32.mrf.mxu0
        %v762 = vadd.f32 0.0, %v761
        %v763 = vpop.f32.mrf.mxu0
        %764 = vdwg.mxu0
        %765 = vrot.lane.b32.xlu0 %v619, 64
        %v766 = vpop.permute.xlu0 %765
        %v768 = vsel %vm549, %v700, 0
        %v771 = vsel %vm706, %v766, 0
        %773 = vmatpush.bf16.msra.mxu0 0
        %774 = vmatpush.bf16.msra.mxu0 0
        %775 = vmatpush.bf16.msra.mxu0 0
        %776 = vmatpush.bf16.msra.mxu0 0
        %777 = vmatpush.bf16.msra.mxu0 0
        %778 = vmatpush.bf16.msra.mxu0 0
        %779 = vmatpush.bf16.msra.mxu0 0
        %780 = vmatpush.bf16.msra.mxu0 %v771
        %781 = vmatmul.bf16.gmra.mxu0 %v768
        %v782 = vpop.f32.mrf.mxu0
        %v783 = vadd.f32 0.0, %v782
        %v784 = vpop.f32.mrf.mxu0
        %785 = vdwg.mxu0
        %v786 = vadd.f32 %v677, %v720
        %v787 = vadd.f32 %v678, %v741
        %v788 = vadd.f32 %v679, %v762
        %v789 = vadd.f32 %v680, %v783
        %v790 = vrcp.pop %v693
        %v791 = vmul.f32 %v693, %v790
        %v792 = vsub.f32 1.0, %v791
        %v793 = vmul.f32 %v790, %v792
        %v794 = vadd.f32 %v790, %v793
        %vm795 = vweird.f32 %v693
        %vm796 = vweird.f32 %v790
        %vm797 = vmor %vm795, %vm796
        %v798 = vsel %vm797, %v790, %v794
        %v799 = vand.u32 2147483647, %v693
        %vm800 = vcmp.eq.f32.partialorder %v799, 8.507059e+37
        %v801 = vand.u32 %v693, 2147483648
        %v802 = vor.u32 1.1754944e-38, %v801
        %v803 = vsel %vm800, %v802, %v798
        %v804 = vrcp.pop %v694
        %v805 = vmul.f32 %v694, %v804
        %v806 = vsub.f32 1.0, %v805
        %v807 = vmul.f32 %v804, %v806
        %v808 = vadd.f32 %v804, %v807
        %vm809 = vweird.f32 %v694
        %vm810 = vweird.f32 %v804
        %vm811 = vmor %vm809, %vm810
        %v812 = vsel %vm811, %v804, %v808
        %v813 = vand.u32 2147483647, %v694
        %vm814 = vcmp.eq.f32.partialorder %v813, 8.507059e+37
        %v815 = vand.u32 %v694, 2147483648
        %v816 = vor.u32 1.1754944e-38, %v815
        %v817 = vsel %vm814, %v816, %v812
        %v818 = vrcp.pop %v695
        %v819 = vmul.f32 %v695, %v818
        %v820 = vsub.f32 1.0, %v819
        %v821 = vmul.f32 %v818, %v820
        %v822 = vadd.f32 %v818, %v821
        %vm823 = vweird.f32 %v695
        %vm824 = vweird.f32 %v818
        %vm825 = vmor %vm823, %vm824
        %v826 = vsel %vm825, %v818, %v822
        %v827 = vand.u32 2147483647, %v695
        %vm828 = vcmp.eq.f32.partialorder %v827, 8.507059e+37
        %v829 = vand.u32 %v695, 2147483648
        %v830 = vor.u32 1.1754944e-38, %v829
        %v831 = vsel %vm828, %v830, %v826
        %v832 = vrcp.pop %v696
        %v833 = vmul.f32 %v696, %v832
        %v834 = vsub.f32 1.0, %v833
        %v835 = vmul.f32 %v832, %v834
        %v836 = vadd.f32 %v832, %v835
        %vm837 = vweird.f32 %v696
        %vm838 = vweird.f32 %v832
        %vm839 = vmor %vm837, %vm838
        %v840 = vsel %vm839, %v832, %v836
        %v841 = vand.u32 2147483647, %v696
        %vm842 = vcmp.eq.f32.partialorder %v841, 8.507059e+37
        %v843 = vand.u32 %v696, 2147483648
        %v844 = vor.u32 1.1754944e-38, %v843
        %v845 = vsel %vm842, %v844, %v840
        %v846 = vmul.f32 %v786, %v803
        %v847 = vmul.f32 %v787, %v817
        %v848 = vmul.f32 %v788, %v831
        %v849 = vmul.f32 %v789, %v845
        %v850 = vpack.c.bf16 %v846, %v846
        %v851 = vpack.c.bf16 %v847, %v847
        %v852 = vpack.c.bf16 %v848, %v848
        %v853 = vpack.c.bf16 %v849, %v849
        %v854 = vld [vmem:[%s5] sm:$0xf]
        %v855 = vld [vmem:[%s5 + $0x4] sm:$0xf]
        %v856 = vld [vmem:[%s5 + $0x8] sm:$0xf]
        %v857 = vld [vmem:[%s5 + $0xc] sm:$0xf]
        %v859 = vsel %vm549, %v850, 0
        %v862 = vsel %vm706, %v854, 0
        %864 = vmatpush.bf16.msra.mxu0 0
        %865 = vmatpush.bf16.msra.mxu0 0
        %866 = vmatpush.bf16.msra.mxu0 0
        %867 = vmatpush.bf16.msra.mxu0 0
        %868 = vmatpush.bf16.msra.mxu0 0
        %869 = vmatpush.bf16.msra.mxu0 0
        %870 = vmatpush.bf16.msra.mxu0 0
        %871 = vmatpush.bf16.msra.mxu0 %v862
        %872 = vmatmul.bf16.gmra.mxu0 %v859
        %v873 = vpop.f32.mrf.mxu0
        %v874 = vadd.f32 0.0, %v873
        %v875 = vpop.f32.mrf.mxu0
        %876 = vdwg.mxu0
        %v878 = vsel %vm549, %v851, 0
        %v881 = vsel %vm706, %v855, 0
        %883 = vmatpush.bf16.msra.mxu0 0
        %884 = vmatpush.bf16.msra.mxu0 0
        %885 = vmatpush.bf16.msra.mxu0 0
        %886 = vmatpush.bf16.msra.mxu0 0
        %887 = vmatpush.bf16.msra.mxu0 0
        %888 = vmatpush.bf16.msra.mxu0 0
        %889 = vmatpush.bf16.msra.mxu0 0
        %890 = vmatpush.bf16.msra.mxu0 %v881
        %891 = vmatmul.bf16.gmra.mxu0 %v878
        %v892 = vpop.f32.mrf.mxu0
        %v893 = vadd.f32 0.0, %v892
        %v894 = vpop.f32.mrf.mxu0
        %895 = vdwg.mxu0
        %v897 = vsel %vm549, %v852, 0
        %v900 = vsel %vm706, %v856, 0
        %902 = vmatpush.bf16.msra.mxu0 0
        %903 = vmatpush.bf16.msra.mxu0 0
        %904 = vmatpush.bf16.msra.mxu0 0
        %905 = vmatpush.bf16.msra.mxu0 0
        %906 = vmatpush.bf16.msra.mxu0 0
        %907 = vmatpush.bf16.msra.mxu0 0
        %908 = vmatpush.bf16.msra.mxu0 0
        %909 = vmatpush.bf16.msra.mxu0 %v900
        %910 = vmatmul.bf16.gmra.mxu0 %v897
        %v911 = vpop.f32.mrf.mxu0
        %v912 = vadd.f32 0.0, %v911
        %v913 = vpop.f32.mrf.mxu0
        %914 = vdwg.mxu0
        %v916 = vsel %vm549, %v853, 0
        %v919 = vsel %vm706, %v857, 0
        %921 = vmatpush.bf16.msra.mxu0 0
        %922 = vmatpush.bf16.msra.mxu0 0
        %923 = vmatpush.bf16.msra.mxu0 0
        %924 = vmatpush.bf16.msra.mxu0 0
        %925 = vmatpush.bf16.msra.mxu0 0
        %926 = vmatpush.bf16.msra.mxu0 0
        %927 = vmatpush.bf16.msra.mxu0 0
        %928 = vmatpush.bf16.msra.mxu0 %v919
        %929 = vmatmul.bf16.gmra.mxu0 %v916
        %v930 = vpop.f32.mrf.mxu0
        %v931 = vadd.f32 0.0, %v930
        %v932 = vpop.f32.mrf.mxu0
        %933 = vdwg.mxu0
        %v934 = vsel %vm440, %v874, 0.0
        %v935 = vsel %vm440, %v893, 0.0
        %v936 = vadd.f32 %v934, %v935
        %v937 = vsel %vm440, %v912, 0.0
        %v938 = vadd.f32 %v936, %v937
        %v939 = vsel %vm440, %v931, 0.0
        %v940 = vadd.f32 %v938, %v939
        %v941 = vld [vmem:[%s6] sm:$0x1]
        %v943 = vperm.slane %v941, 0
        %v945 = vadd.f32 %v940, %v943
        %v946 = vadd.f32 %v437, %v945
        %v947 = vld [vmem:[%s7] sm:$0x1]
        %v948 = vld [vmem:[%s8] sm:$0x1]
        %v949 = vsel %vm440, %v946, 0.0
        %950 = vadd.xlane.f32.xlu0 %v949
        %v951 = vpop.xlane.xlu0 %950
        %v952 = vmul.f32 %v951, %v450
        %v953 = vsub.f32 %v946, %v952
        %v954 = vmul.f32 %v953, %v953
        %v955 = vsel %vm440, %v954, 0.0
        %956 = vadd.xlane.f32.xlu0 %v955
        %v957 = vpop.xlane.xlu0 %956
        %v958 = vmul.f32 %v957, %v450
        %v959 = vadd.f32 %v958, 1e-05
        %v960 = vrsqrt.pop %v959
        %v961 = vmul.f32 %v960, %v959
        %v962 = vmul.f32 %v961, %v960
        %v963 = vmul.f32 0.5, %v962
        %v964 = vsub.f32 1.5, %v963
        %v965 = vmul.f32 %v960, %v964
        %vm966 = vweird.f32 %v959
        %vm967 = vweird.f32 %v960
        %vm968 = vmor %vm966, %vm967
        %v969 = vsel %vm968, %v960, %v965
        %v970 = vmul.f32 %v953, %v969
        %v972 = vperm.slane %v947, 0
        %v974 = vmul.f32 %v970, %v972
        %v976 = vperm.slane %v948, 0
        %v978 = vadd.f32 %v974, %v976
        %v979 = vpack.c.bf16 %v978, %v978
        %v980 = vld [vmem:[%s9] sm:$0xf]
        %v981 = vld [vmem:[%s9 + $0x4] sm:$0xf]
        %v982 = vld [vmem:[%s9 + $0x8] sm:$0xf]
        %v983 = vld [vmem:[%s9 + $0xc] sm:$0xf]
        %v984 = vld [vmem:[%s10] sm:$0x1]
        %v986 = vperm.slane %v984, 0
        %v992 = vunpack.c.l.b16 %v980
        %v993 = vunpack.c.l.b16 %v981
        %v994 = vunpack.c.l.b16 %v982
        %v995 = vunpack.c.l.b16 %v983
        %v996 = vpack.c.b16 %v993, %v992
        %v997 = vpack.c.b16 %v995, %v994
        %v1001 = vsel %vm440, %v979, 0
        %1003 = vmatpush.bf16.msra.mxu0 0
        %1004 = vmatpush.bf16.msra.mxu0 0
        %1005 = vmatpush.bf16.msra.mxu0 0
        %1006 = vmatpush.bf16.msra.mxu0 0
        %1007 = vmatpush.bf16.msra.mxu0 0
        %1008 = vmatpush.bf16.msra.mxu0 0
        %1009 = vmatpush.bf16.msra.mxu0 %v997
        %1010 = vmatpush.bf16.msra.mxu0 %v996
        %1011 = vmatmul.bf16.gmra.mxu0 %v1001
        %v1012 = vpop.f32.mrf.mxu0
        %v1013 = vadd.f32 %v986, %v1012
        %v1014 = vpop.f32.mrf.mxu0
        %1015 = vdwg.mxu0
        %v1016 = vmul.f32 %v1013, 0.5
        %v1017 = vrcp.pop 1.4142135
        %v1018 = vmul.f32 1.4142135, %v1017
        %v1019 = vsub.f32 1.0, %v1018
        %v1020 = vmul.f32 %v1017, %v1019
        %v1021 = vadd.f32 %v1017, %v1020
        %vm1022 = vweird.f32 %v1017
        %v1023 = vsel %vm1022, %v1017, %v1021
        %v1024 = vmul.f32 %v1013, %v1023
        %v1025 = vmul.f32 %v1024, %v1024
        %v1026 = vmin.f32 16.0, %v1025
        %v1027 = vmul.f32 %v1026, 2.1237322e-06
        %v1028 = vadd.f32 %v1027, 0.00028619796
        %v1029 = vmul.f32 %v1026, %v1028
        %v1030 = vadd.f32 %v1029, 0.0036580483
        %v1031 = vmul.f32 %v1026, %v1030
        %v1032 = vadd.f32 %v1031, 0.05243302
        %v1033 = vmul.f32 %v1026, %v1032
        %v1034 = vadd.f32 %v1033, 0.18741608
        %v1035 = vmul.f32 %v1026, %v1034
        %v1036 = vadd.f32 %v1035, 1.1283791
        %v1037 = vmul.f32 %v1024, %v1036
        %v1038 = vmul.f32 %v1026, 3.8918573e-05
        %v1039 = vadd.f32 %v1038, 0.001143296
        %v1040 = vmul.f32 %v1026, %v1039
        %v1041 = vadd.f32 %v1040, 0.014752088
        %v1042 = vmul.f32 %v1026, %v1041
        %v1043 = vadd.f32 %v1042, 0.112945676
        %v1044 = vmul.f32 %v1026, %v1043
        %v1045 = vadd.f32 %v1044, 0.4994258
        %v1046 = vmul.f32 %v1026, %v1045
        %v1047 = vadd.f32 %v1046, 1.0
        %v1048 = vrcp.pop %v1047
        %v1049 = vmul.f32 %v1047, %v1048
        %v1050 = vsub.f32 1.0, %v1049
        %v1051 = vmul.f32 %v1048, %v1050
        %v1052 = vadd.f32 %v1048, %v1051
        %vm1053 = vweird.f32 %v1047
        %vm1054 = vweird.f32 %v1048
        %vm1055 = vmor %vm1053, %vm1054
        %v1056 = vsel %vm1055, %v1048, %v1052
        %v1057 = vand.u32 2147483647, %v1047
        %vm1058 = vcmp.eq.f32.partialorder %v1057, 8.507059e+37
        %v1059 = vand.u32 %v1047, 2147483648
        %v1060 = vor.u32 1.1754944e-38, %v1059
        %v1061 = vsel %vm1058, %v1060, %v1056
        %v1062 = vmul.f32 %v1037, %v1061
        %v1063 = vmin.f32 %v1062, 1.0
        %v1064 = vmax.f32 %v1063, -1.0
        %v1065 = vadd.f32 %v1064, 1.0
        %v1066 = vmul.f32 %v1016, %v1065
        %v1067 = vpack.c.bf16 %v1066, %v1066
        %v1068 = vld [vmem:[%s11] sm:$0xf]
        %v1069 = vld [vmem:[%s11 + $0x4] sm:$0xf]
        %v1070 = vld [vmem:[%s11 + $0x8] sm:$0xf]
        %v1071 = vld [vmem:[%s11 + $0xc] sm:$0xf]
        %v1072 = vld [vmem:[%s11 + $0x10] sm:$0xf]
        %v1073 = vld [vmem:[%s11 + $0x14] sm:$0xf]
        %v1074 = vld [vmem:[%s11 + $0x18] sm:$0xf]
        %v1075 = vld [vmem:[%s11 + $0x1c] sm:$0xf]
        %v1076 = vld [vmem:[%s11 + $0x20] sm:$0xf]
        %v1077 = vld [vmem:[%s11 + $0x24] sm:$0xf]
        %v1078 = vld [vmem:[%s11 + $0x28] sm:$0xf]
        %v1079 = vld [vmem:[%s11 + $0x2c] sm:$0xf]
        %v1080 = vld [vmem:[%s11 + $0x30] sm:$0xf]
        %v1081 = vld [vmem:[%s11 + $0x34] sm:$0xf]
        %v1082 = vld [vmem:[%s11 + $0x38] sm:$0xf]
        %v1083 = vld [vmem:[%s11 + $0x3c] sm:$0xf]
        %v1084 = vld [vmem:[%s12] sm:$0x1]
        %v1086 = vperm.slane %v1084, 0
        %v1104 = vunpack.c.l.b16 %v1068
        %v1105 = vunpack.c.l.b16 %v1069
        %v1106 = vunpack.c.l.b16 %v1070
        %v1107 = vunpack.c.l.b16 %v1071
        %v1108 = vunpack.c.l.b16 %v1072
        %v1109 = vunpack.c.l.b16 %v1073
        %v1110 = vunpack.c.l.b16 %v1074
        %v1111 = vunpack.c.l.b16 %v1075
        %v1112 = vunpack.c.l.b16 %v1076
        %v1113 = vunpack.c.l.b16 %v1077
        %v1114 = vunpack.c.l.b16 %v1078
        %v1115 = vunpack.c.l.b16 %v1079
        %v1116 = vunpack.c.l.b16 %v1080
        %v1117 = vunpack.c.l.b16 %v1081
        %v1118 = vunpack.c.l.b16 %v1082
        %v1119 = vunpack.c.l.b16 %v1083
        %v1120 = vpack.c.b16 %v1105, %v1104
        %v1121 = vpack.c.b16 %v1107, %v1106
        %v1122 = vpack.c.b16 %v1109, %v1108
        %v1123 = vpack.c.b16 %v1111, %v1110
        %v1124 = vpack.c.b16 %v1113, %v1112
        %v1125 = vpack.c.b16 %v1115, %v1114
        %v1126 = vpack.c.b16 %v1117, %v1116
        %v1127 = vpack.c.b16 %v1119, %v1118
        %1136 = vmatpush.bf16.msra.mxu0 %v1127
        %1137 = vmatpush.bf16.msra.mxu0 %v1126
        %1138 = vmatpush.bf16.msra.mxu0 %v1125
        %1139 = vmatpush.bf16.msra.mxu0 %v1124
        %1140 = vmatpush.bf16.msra.mxu0 %v1123
        %1141 = vmatpush.bf16.msra.mxu0 %v1122
        %1142 = vmatpush.bf16.msra.mxu0 %v1121
        %1143 = vmatpush.bf16.msra.mxu0 %v1120
        %1144 = vmatmul.bf16.gmra.mxu0 %v1067
        %v1145 = vpop.f32.mrf.mxu0
        %v1146 = vadd.f32 %v1086, %v1145
        %v1147 = vpop.f32.mrf.mxu0
        %1148 = vdwg.mxu0
        %v1149 = vadd.f32 %v946, %v1146
        %1150 = vst.msk [vmem:[%s431] sm:$0xff] %vm440, %v1149
        %s1151 = sand.u32 %s313, 1
        %s1152 = scalar_lea.sflag [#allocation3], %s1151
        %s1153 = sand.u32 %s313, 1
        %s1154 = smul.addr %s1153, 8
        %s1155 = scalar_lea.vmem [#allocation2], %s1154
        // Predicated region
        $region73: #{tpu_custom_call.1} parent=71 // pred_check
          %p1156 = pneg %p323
        $region74: #{tpu_custom_call.1} parent=71 // pred_check_branch
          %1158 = sbr.rel (%p1156) target = $region76
        $region75: #{tpu_custom_call.1} parent=71 // pred_region
          %1160 = vsyncadd %s1152, 0
          %s1161 = smul.addr %s27, 8
          %s1162 = scalar_lea.hbm %s13, %s1161
          %s1164 = sshll.u32 %s1155, 4
          %s1165 = int_to_ptr.vmem [resolvable:$true] %s1164
          %s1166 = sshll.u32 %s1162, 4
          %s1167 = int_to_ptr.hbm [resolvable:$true] %s1166
          %1169 = dma.vmem_to_hbm [thread:$0]  %s1165, 128, %s1167, %s1152
        $region76: #{tpu_custom_call.1} parent=71 // pred_fallthru
          _
      $region72: #{tpu_custom_call.1} parent=5 // pred_fallthru
        _
      %p1170 = scmp.le.s32.totalorder 2, %s22
      // Predicated region
      $region77: #{tpu_custom_call.1} parent=5 // pred_check
        %p1171 = pneg %p1170
      $region78: #{tpu_custom_call.1} parent=5 // pred_check_branch
        %1173 = sbr.rel (%p1171) target = $region80
      $region79: #{tpu_custom_call.1} parent=5 // pred_region
        %s1174 = ssub.s32 %s22, 2
        // Predicated region
        $region81: #{tpu_custom_call.1} parent=79 // pred_check
          %p1175 = pneg %p329
        $region82: #{tpu_custom_call.1} parent=79 // pred_check_branch
          %1177 = sbr.rel (%p1175) target = $region84
        $region83: #{tpu_custom_call.1} parent=79 // pred_region
          %s1178 = sand.u32 %s314, 1
          %s1179 = scalar_lea.sflag [#allocation3], %s1178
          %s1180 = sand.u32 %s314, 1
          %s1181 = smul.addr %s1180, 8
          %s1182 = scalar_lea.vmem [#allocation2], %s1181
          %1184 = dma.done %s1179, 128
        $region84: #{tpu_custom_call.1} parent=79 // pred_fallthru
          _
      $region80: #{tpu_custom_call.1} parent=5 // pred_fallthru
        _
    $region6: #{tpu_custom_call.1} parent=1 // loop_footer
      %s26 = sadd.s32 1, %s22
    $region7: #{tpu_custom_call.1} parent=1 // loop_footer_branch
      %21 = sbr.rel target = $region3
    $region8: #{tpu_custom_call.1} parent=1 // loop_exit
      _
    %1185 = vsyncpa [#allocation3], 1
    %s1186 = scalar_lea.sflag [#allocation3], 1
    %1187 = vsyncpa %s1186, 1

// kernel: tpu_custom_call.1
$region0: #{tpu_custom_call.1}
  #allocation0 [shape = 'u32[]', space=smem, size = 0x4, offset = 0x4, fixed_abs, tag = 'smem constant byte address 0x4 - core index']
  #allocation1 [shape = 'u32[72,128]{1,0:T(1,128)}', space=vmem, size = 0x9000, scoped, tag = 'internal scratch']
  %s0 = inlined_call_operand.vmem [shape: f32[16,32], index: 0, kind: input, shape index: {}]
  %s1 = inlined_call_operand.vmem [shape: f32[1,32], index: 1, kind: input, shape index: {}]
  %s2 = inlined_call_operand.vmem [shape: f32[1,32], index: 2, kind: input, shape index: {}]
  %s3 = inlined_call_operand.vmem [shape: bf16[32,96], index: 3, kind: input, shape index: {}]
  %s4 = inlined_call_operand.vmem [shape: f32[1,96], index: 4, kind: input, shape index: {}]
  %s5 = inlined_call_operand.vmem [shape: bf16[4,8,32], index: 5, kind: input, shape index: {}]
  %s6 = inlined_call_operand.vmem [shape: f32[1,32], index: 6, kind: input, shape index: {}]
  %s7 = inlined_call_operand.vmem [shape: f32[1,32], index: 7, kind: input, shape index: {}]
  %s8 = inlined_call_operand.vmem [shape: f32[1,32], index: 8, kind: input, shape index: {}]
  %s9 = inlined_call_operand.vmem [shape: bf16[32,128], index: 9, kind: input, shape index: {}]
  %s10 = inlined_call_operand.vmem [shape: f32[1,128], index: 10, kind: input, shape index: {}]
  %s11 = inlined_call_operand.vmem [shape: bf16[128,32], index: 11, kind: input, shape index: {}]
  %s12 = inlined_call_operand.vmem [shape: f32[1,32], index: 12, kind: input, shape index: {}]
  %s13 = inlined_call_operand.hbm [shape: f32[16,32], index: 13, kind: output, shape index: {}]
  %s14 = sld [smem:[#allocation0]]
  $region85: #{tpu_custom_call.1} parent=0
    _
  %s16 = ssub.s32 1, %s14
  %s17 = scalar_select 0, %s16, %s14
  $region1: #{tpu_custom_call.1} parent=0
    #allocation2 [shape = 'u8[8192]{0}', space=vmem, size = 0x2000, scoped, tag = 'output window, operand 0']
    #allocation3 [shape = 's32[2]{0}', space=sflag, size = 0x8, scoped, tag = 'scoped memory for tpu_custom_call.1']
    %18 = vsyncpa [#allocation3], 0
    %s19 = scalar_lea.sflag [#allocation3], 1
    %20 = vsyncpa %s19, 0
    loop: start=0, step=1, limit=4
    $region2: #{tpu_custom_call.1} parent=1 // loop_pre_header
      _
    $region3: #{tpu_custom_call.1} parent=1 // loop_header
      %s22 = sphi 0, %s26
      %p23 = scmp.ge.s32.totalorder %s22, 4
      %s32 = sphi 0, %s34
      %s35 = sphi 0, %s32
      %s36 = sphi 0, %s35
      %s52 = sphi 0, %s36
      %s56 = sphi 0, %s56
      %s58 = sphi 0, %s56
      %s59 = sphi 0, %s58
      %s73 = sphi 0, %s59
      %s77 = sphi 0, %s77
      %s79 = sphi 0, %s77
      %s80 = sphi 0, %s79
      %s94 = sphi 0, %s80
      %s98 = sphi 0, %s98
      %s100 = sphi 0, %s98
      %s101 = sphi 0, %s100
      %s115 = sphi 0, %s101
      %s119 = sphi 0, %s119
      %s121 = sphi 0, %s119
      %s122 = sphi 0, %s121
      %s136 = sphi 0, %s122
      %s140 = sphi 0, %s140
      %s142 = sphi 0, %s140
      %s143 = sphi 0, %s142
      %s157 = sphi 0, %s143
      %s161 = sphi 0, %s161
      %s163 = sphi 0, %s161
      %s164 = sphi 0, %s163
      %s178 = sphi 0, %s164
      %s182 = sphi 0, %s182
      %s184 = sphi 0, %s182
      %s185 = sphi 0, %s184
      %s199 = sphi 0, %s185
      %s203 = sphi 0, %s203
      %s205 = sphi 0, %s203
      %s206 = sphi 0, %s205
      %s220 = sphi 0, %s206
      %s224 = sphi 0, %s224
      %s226 = sphi 0, %s224
      %s227 = sphi 0, %s226
      %s241 = sphi 0, %s227
      %s245 = sphi 0, %s245
      %s247 = sphi 0, %s245
      %s248 = sphi 0, %s247
      %s262 = sphi 0, %s248
      %s266 = sphi 0, %s266
      %s268 = sphi 0, %s266
      %s269 = sphi 0, %s268
      %s283 = sphi 0, %s269
      %s287 = sphi 0, %s287
      %s289 = sphi 0, %s287
      %s290 = sphi 0, %s289
      %s304 = sphi 0, %s290
      %s310 = sphi 0, %s312
      %s313 = sphi 0, %s310
      %s314 = sphi 0, %s313
      %s330 = sphi 0, %s314
    $region4: #{tpu_custom_call.1} parent=1 // loop_header_branch
      %25 = sbr.rel (%p23) target = $region8
    $region5: #{tpu_custom_call.1} parent=1 // loop_body
      %s27 = ssub.s32 %s22, 1
      %s28 = ssub.s32 %s22, 2
      %s29 = sadd.s32 %s22, 1
      %s30 = ssub.s32 %s22, %s29
      %p31 = scmp.eq.s32.totalorder %s30, 0
      %s33 = sadd.s32 %s32, 1
      %s34 = scalar_select %p31, %s32, %s33
      %p37 = pneg %p31
      %p38 = scmp.eq.s32.totalorder %s22, 1
      %p39 = por %p37, %p38
      %p40 = scmp.ne.s32.totalorder %s32, %s35
      %p41 = scmp.eq.s32.totalorder %s22, 0
      %p42 = por %p40, %p41
      %p43 = scmp.ne.s32.totalorder %s32, %s35
      %p44 = scmp.eq.s32.totalorder %s27, 1
      %p45 = por %p43, %p44
      %p46 = scmp.ne.s32.totalorder %s35, %s36
      %p47 = scmp.eq.s32.totalorder %s27, 0
      %p48 = por %p46, %p47
      %p49 = scmp.ne.s32.totalorder %s35, %s36
      %p50 = scmp.eq.s32.totalorder %s28, 1
      %p51 = por %p49, %p50
      %p53 = scmp.ne.s32.totalorder %s36, %s52
      %p54 = scmp.eq.s32.totalorder %s28, 0
      %p55 = por %p53, %p54
      %s57 = sadd.s32 %s56, 1
      %p60 = scmp.eq.s32.totalorder %s22, 1
      %p61 = scmp.ne.s32.totalorder %s56, %s58
      %p62 = scmp.eq.s32.totalorder %s22, 0
      %p63 = por %p61, %p62
      %p64 = scmp.ne.s32.totalorder %s56, %s58
      %p65 = scmp.eq.s32.totalorder %s27, 1
      %p66 = por %p64, %p65
      %p67 = scmp.ne.s32.totalorder %s58, %s59
      %p68 = scmp.eq.s32.totalorder %s27, 0
      %p69 = por %p67, %p68
      %p70 = scmp.ne.s32.totalorder %s58, %s59
      %p71 = scmp.eq.s32.totalorder %s28, 1
      %p72 = por %p70, %p71
      %p74 = scmp.ne.s32.totalorder %s59, %s73
      %p75 = scmp.eq.s32.totalorder %s28, 0
      %p76 = por %p74, %p75
      %s78 = sadd.s32 %s77, 1
      %p81 = scmp.eq.s32.totalorder %s22, 1
      %p82 = scmp.ne.s32.totalorder %s77, %s79
      %p83 = scmp.eq.s32.totalorder %s22, 0
      %p84 = por %p82, %p83
      %p85 = scmp.ne.s32.totalorder %s77, %s79
      %p86 = scmp.eq.s32.totalorder %s27, 1
      %p87 = por %p85, %p86
      %p88 = scmp.ne.s32.totalorder %s79, %s80
      %p89 = scmp.eq.s32.totalorder %s27, 0
      %p90 = por %p88, %p89
      %p91 = scmp.ne.s32.totalorder %s79, %s80
      %p92 = scmp.eq.s32.totalorder %s28, 1
      %p93 = por %p91, %p92
      %p95 = scmp.ne.s32.totalorder %s80, %s94
      %p96 = scmp.eq.s32.totalorder %s28, 0
      %p97 = por %p95, %p96
      %s99 = sadd.s32 %s98, 1
      %p102 = scmp.eq.s32.totalorder %s22, 1
      %p103 = scmp.ne.s32.totalorder %s98, %s100
      %p104 = scmp.eq.s32.totalorder %s22, 0
      %p105 = por %p103, %p104
      %p106 = scmp.ne.s32.totalorder %s98, %s100
      %p107 = scmp.eq.s32.totalorder %s27, 1
      %p108 = por %p106, %p107
      %p109 = scmp.ne.s32.totalorder %s100, %s101
      %p110 = scmp.eq.s32.totalorder %s27, 0
      %p111 = por %p109, %p110
      %p112 = scmp.ne.s32.totalorder %s100, %s101
      %p113 = scmp.eq.s32.totalorder %s28, 1
      %p114 = por %p112, %p113
      %p116 = scmp.ne.s32.totalorder %s101, %s115
      %p117 = scmp.eq.s32.totalorder %s28, 0
      %p118 = por %p116, %p117
      %s120 = sadd.s32 %s119, 1
      %p123 = scmp.eq.s32.totalorder %s22, 1
      %p124 = scmp.ne.s32.totalorder %s119, %s121
      %p125 = scmp.eq.s32.totalorder %s22, 0
      %p126 = por %p124, %p125
      %p127 = scmp.ne.s32.totalorder %s119, %s121
      %p128 = scmp.eq.s32.totalorder %s27, 1
      %p129 = por %p127, %p128
      %p130 = scmp.ne.s32.totalorder %s121, %s122
      %p131 = scmp.eq.s32.totalorder %s27, 0
      %p132 = por %p130, %p131
      %p133 = scmp.ne.s32.totalorder %s121, %s122
      %p134 = scmp.eq.s32.totalorder %s28, 1
      %p135 = por %p133, %p134
      %p137 = scmp.ne.s32.totalorder %s122, %s136
      %p138 = scmp.eq.s32.totalorder %s28, 0
      %p139 = por %p137, %p138
      %s141 = sadd.s32 %s140, 1
      %p144 = scmp.eq.s32.totalorder %s22, 1
      %p145 = scmp.ne.s32.totalorder %s140, %s142
      %p146 = scmp.eq.s32.totalorder %s22, 0
      %p147 = por %p145, %p146
      %p148 = scmp.ne.s32.totalorder %s140, %s142
      %p149 = scmp.eq.s32.totalorder %s27, 1
      %p150 = por %p148, %p149
      %p151 = scmp.ne.s32.totalorder %s142, %s143
      %p152 = scmp.eq.s32.totalorder %s27, 0
      %p153 = por %p151, %p152
      %p154 = scmp.ne.s32.totalorder %s142, %s143
      %p155 = scmp.eq.s32.totalorder %s28, 1
      %p156 = por %p154, %p155
      %p158 = scmp.ne.s32.totalorder %s143, %s157
      %p159 = scmp.eq.s32.totalorder %s28, 0
      %p160 = por %p158, %p159
      %s162 = sadd.s32 %s161, 1
      %p165 = scmp.eq.s32.totalorder %s22, 1
      %p166 = scmp.ne.s32.totalorder %s161, %s163
      %p167 = scmp.eq.s32.totalorder %s22, 0
      %p168 = por %p166, %p167
      %p169 = scmp.ne.s32.totalorder %s161, %s163
      %p170 = scmp.eq.s32.totalorder %s27, 1
      %p171 = por %p169, %p170
      %p172 = scmp.ne.s32.totalorder %s163, %s164
      %p173 = scmp.eq.s32.totalorder %s27, 0
      %p174 = por %p172, %p173
      %p175 = scmp.ne.s32.totalorder %s163, %s164
      %p176 = scmp.eq.s32.totalorder %s28, 1
      %p177 = por %p175, %p176
      %p179 = scmp.ne.s32.totalorder %s164, %s178
      %p180 = scmp.eq.s32.totalorder %s28, 0
      %p181 = por %p179, %p180
      %s183 = sadd.s32 %s182, 1
      %p186 = scmp.eq.s32.totalorder %s22, 1
      %p187 = scmp.ne.s32.totalorder %s182, %s184
      %p188 = scmp.eq.s32.totalorder %s22, 0
      %p189 = por %p187, %p188
      %p190 = scmp.ne.s32.totalorder %s182, %s184
      %p191 = scmp.eq.s32.totalorder %s27, 1
      %p192 = por %p190, %p191
      %p193 = scmp.ne.s32.totalorder %s184, %s185
      %p194 = scmp.eq.s32.totalorder %s27, 0
      %p195 = por %p193, %p194
      %p196 = scmp.ne.s32.totalorder %s184, %s185
      %p197 = scmp.eq.s32.totalorder %s28, 1
      %p198 = por %p196, %p197
      %p200 = scmp.ne.s32.totalorder %s185, %s199
      %p201 = scmp.eq.s32.totalorder %s28, 0
      %p202 = por %p200, %p201
      %s204 = sadd.s32 %s203, 1
      %p207 = scmp.eq.s32.totalorder %s22, 1
      %p208 = scmp.ne.s32.totalorder %s203, %s205
      %p209 = scmp.eq.s32.totalorder %s22, 0
      %p210 = por %p208, %p209
      %p211 = scmp.ne.s32.totalorder %s203, %s205
      %p212 = scmp.eq.s32.totalorder %s27, 1
      %p213 = por %p211, %p212
      %p214 = scmp.ne.s32.totalorder %s205, %s206
      %p215 = scmp.eq.s32.totalorder %s27, 0
      %p216 = por %p214, %p215
      %p217 = scmp.ne.s32.totalorder %s205, %s206
      %p218 = scmp.eq.s32.totalorder %s28, 1
      %p219 = por %p217, %p218
      %p221 = scmp.ne.s32.totalorder %s206, %s220
      %p222 = scmp.eq.s32.totalorder %s28, 0
      %p223 = por %p221, %p222
      %s225 = sadd.s32 %s224, 1
      %p228 = scmp.eq.s32.totalorder %s22, 1
      %p229 = scmp.ne.s32.totalorder %s224, %s226
      %p230 = scmp.eq.s32.totalorder %s22, 0
      %p231 = por %p229, %p230
      %p232 = scmp.ne.s32.totalorder %s224, %s226
      %p233 = scmp.eq.s32.totalorder %s27, 1
      %p234 = por %p232, %p233
      %p235 = scmp.ne.s32.totalorder %s226, %s227
      %p236 = scmp.eq.s32.totalorder %s27, 0
      %p237 = por %p235, %p236
      %p238 = scmp.ne.s32.totalorder %s226, %s227
      %p239 = scmp.eq.s32.totalorder %s28, 1
      %p240 = por %p238, %p239
      %p242 = scmp.ne.s32.totalorder %s227, %s241
      %p243 = scmp.eq.s32.totalorder %s28, 0
      %p244 = por %p242, %p243
      %s246 = sadd.s32 %s245, 1
      %p249 = scmp.eq.s32.totalorder %s22, 1
      %p250 = scmp.ne.s32.totalorder %s245, %s247
      %p251 = scmp.eq.s32.totalorder %s22, 0
      %p252 = por %p250, %p251
      %p253 = scmp.ne.s32.totalorder %s245, %s247
      %p254 = scmp.eq.s32.totalorder %s27, 1
      %p255 = por %p253, %p254
      %p256 = scmp.ne.s32.totalorder %s247, %s248
      %p257 = scmp.eq.s32.totalorder %s27, 0
      %p258 = por %p256, %p257
      %p259 = scmp.ne.s32.totalorder %s247, %s248
      %p260 = scmp.eq.s32.totalorder %s28, 1
      %p261 = por %p259, %p260
      %p263 = scmp.ne.s32.totalorder %s248, %s262
      %p264 = scmp.eq.s32.totalorder %s28, 0
      %p265 = por %p263, %p264
      %s267 = sadd.s32 %s266, 1
      %p270 = scmp.eq.s32.totalorder %s22, 1
      %p271 = scmp.ne.s32.totalorder %s266, %s268
      %p272 = scmp.eq.s32.totalorder %s22, 0
      %p273 = por %p271, %p272
      %p274 = scmp.ne.s32.totalorder %s266, %s268
      %p275 = scmp.eq.s32.totalorder %s27, 1
      %p276 = por %p274, %p275
      %p277 = scmp.ne.s32.totalorder %s268, %s269
      %p278 = scmp.eq.s32.totalorder %s27, 0
      %p279 = por %p277, %p278
      %p280 = scmp.ne.s32.totalorder %s268, %s269
      %p281 = scmp.eq.s32.totalorder %s28, 1
      %p282 = por %p280, %p281
      %p284 = scmp.ne.s32.totalorder %s269, %s283
      %p285 = scmp.eq.s32.totalorder %s28, 0
      %p286 = por %p284, %p285
      %s288 = sadd.s32 %s287, 1
      %p291 = scmp.eq.s32.totalorder %s22, 1
      %p292 = scmp.ne.s32.totalorder %s287, %s289
      %p293 = scmp.eq.s32.totalorder %s22, 0
      %p294 = por %p292, %p293
      %p295 = scmp.ne.s32.totalorder %s287, %s289
      %p296 = scmp.eq.s32.totalorder %s27, 1
      %p297 = por %p295, %p296
      %p298 = scmp.ne.s32.totalorder %s289, %s290
      %p299 = scmp.eq.s32.totalorder %s27, 0
      %p300 = por %p298, %p299
      %p301 = scmp.ne.s32.totalorder %s289, %s290
      %p302 = scmp.eq.s32.totalorder %s28, 1
      %p303 = por %p301, %p302
      %p305 = scmp.ne.s32.totalorder %s290, %s304
      %p306 = scmp.eq.s32.totalorder %s28, 0
      %p307 = por %p305, %p306
      %s308 = ssub.s32 %s22, %s29
      %p309 = scmp.eq.s32.totalorder %s308, 0
      %s311 = sadd.s32 %s310, 1
      %s312 = scalar_select %p309, %s310, %s311
      %p315 = pneg %p309
      %p316 = scmp.eq.s32.totalorder %s22, 1
      %p317 = por %p315, %p316
      %p318 = scmp.ne.s32.totalorder %s310, %s313
      %p319 = scmp.eq.s32.totalorder %s22, 0
      %p320 = por %p318, %p319
      %p321 = scmp.ne.s32.totalorder %s310, %s313
      %p322 = scmp.eq.s32.totalorder %s27, 1
      %p323 = por %p321, %p322
      %p324 = scmp.ne.s32.totalorder %s313, %s314
      %p325 = scmp.eq.s32.totalorder %s27, 0
      %p326 = por %p324, %p325
      %p327 = scmp.ne.s32.totalorder %s313, %s314
      %p328 = scmp.eq.s32.totalorder %s28, 1
      %p329 = por %p327, %p328
      %p331 = scmp.ne.s32.totalorder %s314, %s330
      %p332 = scmp.eq.s32.totalorder %s28, 0
      %p333 = por %p331, %p332
      %p334 = scmp.le.s32.totalorder 1, %s22
      %p335 = scmp.lt.s32.totalorder %s22, 3
      %p336 = pnand %p334, %p335
      %p337 = pneg %p336
      // Predicated region
      $region9: #{tpu_custom_call.1} parent=5 // pred_check
        _
      $region10: #{tpu_custom_call.1} parent=5 // pred_check_branch
        %339 = sbr.rel (%p336) target = $region12
      $region11: #{tpu_custom_call.1} parent=5 // pred_region
        %s340 = ssub.s32 %s22, 1
        // Predicated region
        $region13: #{tpu_custom_call.1} parent=11 // pred_check
          %p341 = pneg %p69
        $region14: #{tpu_custom_call.1} parent=11 // pred_check_branch
          %343 = sbr.rel (%p341) target = $region16
        $region15: #{tpu_custom_call.1} parent=11 // pred_region
          _
        $region16: #{tpu_custom_call.1} parent=11 // pred_fallthru
          _
        // Predicated region
        $region17: #{tpu_custom_call.1} parent=11 // pred_check
          %p344 = pneg %p90
        $region18: #{tpu_custom_call.1} parent=11 // pred_check_branch
          %346 = sbr.rel (%p344) target = $region20
        $region19: #{tpu_custom_call.1} parent=11 // pred_region
          _
        $region20: #{tpu_custom_call.1} parent=11 // pred_fallthru
          _
        // Predicated region
        $region21: #{tpu_custom_call.1} parent=11 // pred_check
          %p347 = pneg %p111
        $region22: #{tpu_custom_call.1} parent=11 // pred_check_branch
          %349 = sbr.rel (%p347) target = $region24
        $region23: #{tpu_custom_call.1} parent=11 // pred_region
          _
        $region24: #{tpu_custom_call.1} parent=11 // pred_fallthru
          _
        // Predicated region
        $region25: #{tpu_custom_call.1} parent=11 // pred_check
          %p350 = pneg %p132
        $region26: #{tpu_custom_call.1} parent=11 // pred_check_branch
          %352 = sbr.rel (%p350) target = $region28
        $region27: #{tpu_custom_call.1} parent=11 // pred_region
          _
        $region28: #{tpu_custom_call.1} parent=11 // pred_fallthru
          _
        // Predicated region
        $region29: #{tpu_custom_call.1} parent=11 // pred_check
          %p353 = pneg %p153
        $region30: #{tpu_custom_call.1} parent=11 // pred_check_branch
          %355 = sbr.rel (%p353) target = $region32
        $region31: #{tpu_custom_call.1} parent=11 // pred_region
          _
        $region32: #{tpu_custom_call.1} parent=11 // pred_fallthru
          _
        // Predicated region
        $region33: #{tpu_custom_call.1} parent=11 // pred_check
          %p356 = pneg %p174
        $region34: #{tpu_custom_call.1} parent=11 // pred_check_branch
          %358 = sbr.rel (%p356) target = $region36
        $region35: #{tpu_custom_call.1} parent=11 // pred_region
          _
        $region36: #{tpu_custom_call.1} parent=11 // pred_fallthru
          _
        // Predicated region
        $region37: #{tpu_custom_call.1} parent=11 // pred_check
          %p359 = pneg %p195
        $region38: #{tpu_custom_call.1} parent=11 // pred_check_branch
          %361 = sbr.rel (%p359) target = $region40
        $region39: #{tpu_custom_call.1} parent=11 // pred_region
          _
        $region40: #{tpu_custom_call.1} parent=11 // pred_fallthru
          _
        // Predicated region
        $region41: #{tpu_custom_call.1} parent=11 // pred_check
          %p362 = pneg %p216
        $region42: #{tpu_custom_call.1} parent=11 // pred_check_branch
          %364 = sbr.rel (%p362) target = $region44
        $region43: #{tpu_custom_call.1} parent=11 // pred_region
          _
        $region44: #{tpu_custom_call.1} parent=11 // pred_fallthru
          _
        // Predicated region
        $region45: #{tpu_custom_call.1} parent=11 // pred_check
          %p365 = pneg %p237
        $region46: #{tpu_custom_call.1} parent=11 // pred_check_branch
          %367 = sbr.rel (%p365) target = $region48
        $region47: #{tpu_custom_call.1} parent=11 // pred_region
          _
        $region48: #{tpu_custom_call.1} parent=11 // pred_fallthru
          _
        // Predicated region
        $region49: #{tpu_custom_call.1} parent=11 // pred_check
          %p368 = pneg %p258
        $region50: #{tpu_custom_call.1} parent=11 // pred_check_branch
          %370 = sbr.rel (%p368) target = $region52
        $region51: #{tpu_custom_call.1} parent=11 // pred_region
          _
        $region52: #{tpu_custom_call.1} parent=11 // pred_fallthru
          _
        // Predicated region
        $region53: #{tpu_custom_call.1} parent=11 // pred_check
          %p371 = pneg %p279
        $region54: #{tpu_custom_call.1} parent=11 // pred_check_branch
          %373 = sbr.rel (%p371) target = $region56
        $region55: #{tpu_custom_call.1} parent=11 // pred_region
          _
        $region56: #{tpu_custom_call.1} parent=11 // pred_fallthru
          _
        // Predicated region
        $region57: #{tpu_custom_call.1} parent=11 // pred_check
          %p374 = pneg %p300
        $region58: #{tpu_custom_call.1} parent=11 // pred_check_branch
          %376 = sbr.rel (%p374) target = $region60
        $region59: #{tpu_custom_call.1} parent=11 // pred_region
          _
        $region60: #{tpu_custom_call.1} parent=11 // pred_fallthru
          _
      $region12: #{tpu_custom_call.1} parent=5 // pred_fallthru
        _
      %p377 = scmp.lt.s32.totalorder %s22, 2
      // Predicated region
      $region61: #{tpu_custom_call.1} parent=5 // pred_check
        %p378 = pneg %p377
      $region62: #{tpu_custom_call.1} parent=5 // pred_check_branch
        %380 = sbr.rel (%p378) target = $region64
      $region63: #{tpu_custom_call.1} parent=5 // pred_region
        // Predicated region
        $region65: #{tpu_custom_call.1} parent=63 // pred_check
          %p381 = pneg %p42
        $region66: #{tpu_custom_call.1} parent=63 // pred_check_branch
          %383 = sbr.rel (%p381) target = $region68
        $region67: #{tpu_custom_call.1} parent=63 // pred_region
          %p384 = scmp.lt.s32.totalorder %s22, 1
          %s385 = scalar_select %p384, %s22, 1
          %s386 = smul.addr %s385, 8
          %s387 = scalar_lea.vmem %s0, %s386
        $region68: #{tpu_custom_call.1} parent=63 // pred_fallthru
          _
      $region64: #{tpu_custom_call.1} parent=5 // pred_fallthru
        _
      %p388 = scmp.le.s32.totalorder 1, %s22
      %p389 = scmp.lt.s32.totalorder %s22, 3
      %p390 = pnand %p388, %p389
      %p391 = pneg %p390
      // Predicated region
      $region69: #{tpu_custom_call.1} parent=5 // pred_check
        _
      $region70: #{tpu_custom_call.1} parent=5 // pred_check_branch
        %393 = sbr.rel (%p390) target = $region72
      $region71: #{tpu_custom_call.1} parent=5 // pred_region
        %s394 = ssub.s32 %s22, 1
        %p395 = scmp.lt.s32.totalorder %s27, 1
        %s396 = scalar_select %p395, %s27, 1
        %s397 = smul.addr %s396, 8
        %s398 = scalar_lea.vmem %s0, %s397
        %p399 = pneg %p48
        %p400 = pneg %p45
        %p401 = pneg %p69
        %p402 = pneg %p66
        %p403 = pneg %p90
        %p404 = pneg %p87
        %p405 = pneg %p111
        %p406 = pneg %p108
        %p407 = pneg %p132
        %p408 = pneg %p129
        %p409 = pneg %p153
        %p410 = pneg %p150
        %p411 = pneg %p174
        %p412 = pneg %p171
        %p413 = pneg %p195
        %p414 = pneg %p192
        %p415 = pneg %p216
        %p416 = pneg %p213
        %p417 = pneg %p237
        %p418 = pneg %p234
        %p419 = pneg %p258
        %p420 = pneg %p255
        %p421 = pneg %p279
        %p422 = pneg %p276
        %p423 = pneg %p300
        %p424 = pneg %p297
        %p425 = pneg %p326
        %p426 = pneg %p323
        %s427 = sand.u32 %s313, 1
        %s428 = scalar_lea.sflag [#allocation3], %s427
        %s429 = sand.u32 %s313, 1
        %s430 = smul.addr %s429, 8
        %s431 = scalar_lea.vmem [#allocation2], %s430
        %p432 = scmp.lt.s32.totalorder %s27, 1
        %s433 = scalar_select %p432, %s27, 1
        %s434 = smul.addr %s433, 8
        %s435 = scalar_lea.vmem %s0, %s434
        %v437 = vld [vmem:[%s435] sm:$0xff]
        %v438 = vld [vmem:[%s1] sm:$0x1]
        %v439 = vld [vmem:[%s2] sm:$0x1]
        %vm440 = vcmask 261120
        %v441 = vsel %vm440, %v437, 0.0
        %442 = vadd.xlane.f32.xlu0 %v441
        %v443 = vpop.xlane.xlu0 %442
        %v444 = vrcp.pop 32.0
        %v445 = vmul.f32 32.0, %v444
        %v446 = vsub.f32 1.0, %v445
        %v447 = vmul.f32 %v444, %v446
        %v448 = vadd.f32 %v444, %v447
        %vm449 = vweird.f32 %v444
        %v450 = vsel %vm449, %v444, %v448
        %v451 = vmul.f32 %v443, %v450
        %v452 = vsub.f32 %v437, %v451
        %v453 = vmul.f32 %v452, %v452
        %v454 = vsel %vm440, %v453, 0.0
        %455 = vadd.xlane.f32.xlu0 %v454
        %v456 = vpop.xlane.xlu0 %455
        %v457 = vmul.f32 %v456, %v450
        %v458 = vadd.f32 %v457, 1e-05
        %v459 = vrsqrt.pop %v458
        %v460 = vmul.f32 %v459, %v458
        %v461 = vmul.f32 %v460, %v459
        %v462 = vmul.f32 0.5, %v461
        %v463 = vsub.f32 1.5, %v462
        %v464 = vmul.f32 %v459, %v463
        %vm465 = vweird.f32 %v458
        %vm466 = vweird.f32 %v459
        %vm467 = vmor %vm465, %vm466
        %v468 = vsel %vm467, %v459, %v464
        %v469 = vmul.f32 %v452, %v468
        %v471 = vperm.slane %v438, 0
        %v473 = vmul.f32 %v469, %v471
        %v475 = vperm.slane %v439, 0
        %v477 = vadd.f32 %v473, %v475
        %v478 = vpack.c.bf16 %v477, %v477
        %v479 = vld [vmem:[%s3] sm:$0xf]
        %v480 = vld [vmem:[%s3 + $0x4] sm:$0xf]
        %v481 = vld [vmem:[%s3 + $0x8] sm:$0xf]
        %v482 = vld [vmem:[%s3 + $0xc] sm:$0xf]
        %v483 = vld [vmem:[%s4] sm:$0x1]
        %v485 = vperm.slane %v483, 0
        %v491 = vunpack.c.l.b16 %v479
        %v492 = vunpack.c.l.b16 %v480
        %v493 = vunpack.c.l.b16 %v481
        %v494 = vunpack.c.l.b16 %v482
        %v495 = vpack.c.b16 %v492, %v491
        %v496 = vpack.c.b16 %v494, %v493
        %v500 = vsel %vm440, %v478, 0
        %502 = vmatpush.bf16.msra.mxu0 0
        %503 = vmatpush.bf16.msra.mxu0 0
        %504 = vmatpush.bf16.msra.mxu0 0
        %505 = vmatpush.bf16.msra.mxu0 0
        %506 = vmatpush.bf16.msra.mxu0 0
        %507 = vmatpush.bf16.msra.mxu0 0
        %508 = vmatpush.bf16.msra.mxu0 %v496
        %509 = vmatpush.bf16.msra.mxu0 %v495
        %510 = vmatmul.bf16.gmra.mxu0 %v500
        %v511 = vpop.f32.mrf.mxu0
        %v512 = vadd.f32 %v485, %v511
        %v513 = vpop.f32.mrf.mxu0
        %514 = vdwg.mxu0
        %v515 = vmul.f32 %v512, 0.35355338
        %517 = vrot.lane.b32.xlu0 %v515, 120
        %v518 = vpop.permute.xlu0 %517
        %520 = vrot.lane.b32.xlu0 %v515, 112
        %v521 = vpop.permute.xlu0 %520
        %523 = vrot.lane.b32.xlu0 %v515, 104
        %v524 = vpop.permute.xlu0 %523
        %v526 = vpack.c.bf16 %v515, %v515
        %v527 = vpack.c.bf16 %v518, %v518
        %v528 = vpack.c.bf16 %v521, %v521
        %v529 = vpack.c.bf16 %v524, %v524
        %531 = vrot.lane.b32.xlu0 %v512, 120
        %v532 = vpop.permute.xlu0 %531
        %534 = vrot.lane.b32.xlu0 %v512, 112
        %v535 = vpop.permute.xlu0 %534
        %537 = vrot.lane.b32.xlu0 %v512, 104
        %v538 = vpop.permute.xlu0 %537
        %v540 = vpack.c.bf16 %v512, %v512
        %v541 = vpack.c.bf16 %v532, %v532
        %v542 = vpack.c.bf16 %v535, %v535
        %v543 = vpack.c.bf16 %v538, %v538
        %v545 = vunpack.c.l.b16 %v540
        %v546 = vpack.c.b16 %v545, %v545
        %547 = vrot.lane.b32.xlu0 %v546, 96
        %v548 = vpop.permute.xlu0 %547
        %vm549 = vcmask 64512
        %v551 = vsel %vm549, %v526, 0
        %v554 = vsel %vm549, %v548, 0
        %556 = vmatpush.bf16.xpose.msra.mxu0 0
        %557 = vmatpush.bf16.xpose.msra.mxu0 0
        %558 = vmatpush.bf16.xpose.msra.mxu0 0
        %559 = vmatpush.bf16.xpose.msra.mxu0 0
        %560 = vmatpush.bf16.xpose.msra.mxu0 0
        %561 = vmatpush.bf16.xpose.msra.mxu0 0
        %562 = vmatpush.bf16.xpose.msra.mxu0 0
        %563 = vmatpush.bf16.xpose.msra.mxu0 %v554
        %564 = vmatmul.bf16.gmra.mxu0 %v551
        %v565 = vpop.f32.mrf.mxu0
        %v566 = vadd.f32 0.0, %v565
        %v567 = vpop.f32.mrf.mxu0
        %568 = vdwg.mxu0
        %v570 = vunpack.c.l.b16 %v541
        %v571 = vpack.c.b16 %v570, %v570
        %572 = vrot.lane.b32.xlu0 %v571, 96
        %v573 = vpop.permute.xlu0 %572
        %v575 = vsel %vm549, %v527, 0
        %v578 = vsel %vm549, %v573, 0
        %580 = vmatpush.bf16.xpose.msra.mxu0 0
        %581 = vmatpush.bf16.xpose.msra.mxu0 0
        %582 = vmatpush.bf16.xpose.msra.mxu0 0
        %583 = vmatpush.bf16.xpose.msra.mxu0 0
        %584 = vmatpush.bf16.xpose.msra.mxu0 0
        %585 = vmatpush.bf16.xpose.msra.mxu0 0
        %586 = vmatpush.bf16.xpose.msra.mxu0 0
        %587 = vmatpush.bf16.xpose.msra.mxu0 %v578
        %588 = vmatmul.bf16.gmra.mxu0 %v575
        %v589 = vpop.f32.mrf.mxu0
        %v590 = vadd.f32 0.0, %v589
        %v591 = vpop.f32.mrf.mxu0
        %592 = vdwg.mxu0
        %v594 = vunpack.c.l.b16 %v542
        %v595 = vpack.c.b16 %v594, %v594
        %596 = vrot.lane.b32.xlu0 %v595, 96
        %v597 = vpop.permute.xlu0 %596
        %v599 = vsel %vm549, %v528, 0
        %v602 = vsel %vm549, %v597, 0
        %604 = vmatpush.bf16.xpose.msra.mxu0 0
        %605 = vmatpush.bf16.xpose.msra.mxu0 0
        %606 = vmatpush.bf16.xpose.msra.mxu0 0
        %607 = vmatpush.bf16.xpose.msra.mxu0 0
        %608 = vmatpush.bf16.xpose.msra.mxu0 0
        %609 = vmatpush.bf16.xpose.msra.mxu0 0
        %610 = vmatpush.bf16.xpose.msra.mxu0 0
        %611 = vmatpush.bf16.xpose.msra.mxu0 %v602
        %612 = vmatmul.bf16.gmra.mxu0 %v599
        %v613 = vpop.f32.mrf.mxu0
        %v614 = vadd.f32 0.0, %v613
        %v615 = vpop.f32.mrf.mxu0
        %616 = vdwg.mxu0
        %v618 = vunpack.c.l.b16 %v543
        %v619 = vpack.c.b16 %v618, %v618
        %620 = vrot.lane.b32.xlu0 %v619, 96
        %v621 = vpop.permute.xlu0 %620
        %v623 = vsel %vm549, %v529, 0
        %v626 = vsel %vm549, %v621, 0
        %628 = vmatpush.bf16.xpose.msra.mxu0 0
        %629 = vmatpush.bf16.xpose.msra.mxu0 0
        %630 = vmatpush.bf16.xpose.msra.mxu0 0
        %631 = vmatpush.bf16.xpose.msra.mxu0 0
        %632 = vmatpush.bf16.xpose.msra.mxu0 0
        %633 = vmatpush.bf16.xpose.msra.mxu0 0
        %634 = vmatpush.bf16.xpose.msra.mxu0 0
        %635 = vmatpush.bf16.xpose.msra.mxu0 %v626
        %636 = vmatmul.bf16.gmra.mxu0 %v623
        %v637 = vpop.f32.mrf.mxu0
        %v638 = vadd.f32 0.0, %v637
        %v639 = vpop.f32.mrf.mxu0
        %640 = vdwg.mxu0
        %v641 = vsel %vm549, %v566, -inf
        %642 = vmax.xlane.f32.xlu0 %v641
        %v643 = vpop.xlane.xlu0 %642
        %v644 = vsel %vm549, %v590, -inf
        %645 = vmax.xlane.f32.xlu0 %v644
        %v646 = vpop.xlane.xlu0 %645
        %v647 = vsel %vm549, %v614, -inf
        %648 = vmax.xlane.f32.xlu0 %v647
        %v649 = vpop.xlane.xlu0 %648
        %v650 = vsel %vm549, %v638, -inf
        %651 = vmax.xlane.f32.xlu0 %v650
        %v652 = vpop.xlane.xlu0 %651
        %v653 = vsub.f32 -inf, %v643
        %v654 = vsub.f32 -inf, %v646
        %v655 = vsub.f32 -inf, %v649
        %v656 = vsub.f32 -inf, %v652
        %v657 = vmul.f32 %v653, 1.442695
        %v658 = vpow.pop %v657
        %v659 = vmul.f32 %v654, 1.442695
        %v660 = vpow.pop %v659
        %v661 = vmul.f32 %v655, 1.442695
        %v662 = vpow.pop %v661
        %v663 = vmul.f32 %v656, 1.442695
        %v664 = vpow.pop %v663
        %v665 = vsub.f32 %v566, %v643
        %v666 = vsub.f32 %v590, %v646
        %v667 = vsub.f32 %v614, %v649
        %v668 = vsub.f32 %v638, %v652
        %v669 = vmul.f32 %v665, 1.442695
        %v670 = vpow.pop %v669
        %v671 = vmul.f32 %v666, 1.442695
        %v672 = vpow.pop %v671
        %v673 = vmul.f32 %v667, 1.442695
        %v674 = vpow.pop %v673
        %v675 = vmul.f32 %v668, 1.442695
        %v676 = vpow.pop %v675
        %v677 = vmul.f32 %v658, 0.0
        %v678 = vmul.f32 %v660, 0.0
        %v679 = vmul.f32 %v662, 0.0
        %v680 = vmul.f32 %v664, 0.0
        %v681 = vsel %vm549, %v670, 0.0
        %682 = vadd.xlane.f32.xlu0 %v681
        %v683 = vpop.xlane.xlu0 %682
        %v684 = vsel %vm549, %v672, 0.0
        %685 = vadd.xlane.f32.xlu0 %v684
        %v686 = vpop.xlane.xlu0 %685
        %v687 = vsel %vm549, %v674, 0.0
        %688 = vadd.xlane.f32.xlu0 %v687
        %v689 = vpop.xlane.xlu0 %688
        %v690 = vsel %vm549, %v676, 0.0
        %691 = vadd.xlane.f32.xlu0 %v690
        %v692 = vpop.xlane.xlu0 %691
        %v693 = vadd.f32 %v677, %v683
        %v694 = vadd.f32 %v678, %v686
        %v695 = vadd.f32 %v679, %v689
        %v696 = vadd.f32 %v680, %v692
        %v697 = vpack.c.bf16 %v670, %v670
        %v698 = vpack.c.bf16 %v672, %v672
        %v699 = vpack.c.bf16 %v674, %v674
        %v700 = vpack.c.bf16 %v676, %v676
        %701 = vrot.lane.b32.xlu0 %v546, 64
        %v702 = vpop.permute.xlu0 %701
        %v704 = vsel %vm549, %v697, 0
        %vm706 = vcmask 1043456
        %v708 = vsel %vm706, %v702, 0
        %710 = vmatpush.bf16.msra.mxu0 0
        %711 = vmatpush.bf16.msra.mxu0 0
        %712 = vmatpush.bf16.msra.mxu0 0
        %713 = vmatpush.bf16.msra.mxu0 0
        %714 = vmatpush.bf16.msra.mxu0 0
        %715 = vmatpush.bf16.msra.mxu0 0
        %716 = vmatpush.bf16.msra.mxu0 0
        %717 = vmatpush.bf16.msra.mxu0 %v708
        %718 = vmatmul.bf16.gmra.mxu0 %v704
        %v719 = vpop.f32.mrf.mxu0
        %v720 = vadd.f32 0.0, %v719
        %v721 = vpop.f32.mrf.mxu0
        %722 = vdwg.mxu0
        %723 = vrot.lane.b32.xlu0 %v571, 64
        %v724 = vpop.permute.xlu0 %723
        %v726 = vsel %vm549, %v698, 0
        %v729 = vsel %vm706, %v724, 0
        %731 = vmatpush.bf16.msra.mxu0 0
        %732 = vmatpush.bf16.msra.mxu0 0
        %733 = vmatpush.bf16.msra.mxu0 0
        %734 = vmatpush.bf16.msra.mxu0 0
        %735 = vmatpush.bf16.msra.mxu0 0
        %736 = vmatpush.bf16.msra.mxu0 0
        %737 = vmatpush.bf16.msra.mxu0 0
        %738 = vmatpush.bf16.msra.mxu0 %v729
        %739 = vmatmul.bf16.gmra.mxu0 %v726
        %v740 = vpop.f32.mrf.mxu0
        %v741 = vadd.f32 0.0, %v740
        %v742 = vpop.f32.mrf.mxu0
        %743 = vdwg.mxu0
        %744 = vrot.lane.b32.xlu0 %v595, 64
        %v745 = vpop.permute.xlu0 %744
        %v747 = vsel %vm549, %v699, 0
        %v750 = vsel %vm706, %v745, 0
        %752 = vmatpush.bf16.msra.mxu0 0
        %753 = vmatpush.bf16.msra.mxu0 0
        %754 = vmatpush.bf16.msra.mxu0 0
        %755 = vmatpush.bf16.msra.mxu0 0
        %756 = vmatpush.bf16.msra.mxu0 0
        %757 = vmatpush.bf16.msra.mxu0 0
        %758 = vmatpush.bf16.msra.mxu0 0
        %759 = vmatpush.bf16.msra.mxu0 %v750
        %760 = vmatmul.bf16.gmra.mxu0 %v747
        %v761 = vpop.f32.mrf.mxu0
        %v762 = vadd.f32 0.0, %v761
        %v763 = vpop.f32.mrf.mxu0
        %764 = vdwg.mxu0
        %765 = vrot.lane.b32.xlu0 %v619, 64
        %v766 = vpop.permute.xlu0 %765
        %v768 = vsel %vm549, %v700, 0
        %v771 = vsel %vm706, %v766, 0
        %773 = vmatpush.bf16.msra.mxu0 0
        %774 = vmatpush.bf16.msra.mxu0 0
        %775 = vmatpush.bf16.msra.mxu0 0
        %776 = vmatpush.bf16.msra.mxu0 0
        %777 = vmatpush.bf16.msra.mxu0 0
        %778 = vmatpush.bf16.msra.mxu0 0
        %779 = vmatpush.bf16.msra.mxu0 0
        %780 = vmatpush.bf16.msra.mxu0 %v771
        %781 = vmatmul.bf16.gmra.mxu0 %v768
        %v782 = vpop.f32.mrf.mxu0
        %v783 = vadd.f32 0.0, %v782
        %v784 = vpop.f32.mrf.mxu0
        %785 = vdwg.mxu0
        %v786 = vadd.f32 %v677, %v720
        %v787 = vadd.f32 %v678, %v741
        %v788 = vadd.f32 %v679, %v762
        %v789 = vadd.f32 %v680, %v783
        %v790 = vrcp.pop %v693
        %v791 = vmul.f32 %v693, %v790
        %v792 = vsub.f32 1.0, %v791
        %v793 = vmul.f32 %v790, %v792
        %v794 = vadd.f32 %v790, %v793
        %vm795 = vweird.f32 %v693
        %vm796 = vweird.f32 %v790
        %vm797 = vmor %vm795, %vm796
        %v798 = vsel %vm797, %v790, %v794
        %v799 = vand.u32 2147483647, %v693
        %vm800 = vcmp.eq.f32.partialorder %v799, 8.507059e+37
        %v801 = vand.u32 %v693, 2147483648
        %v802 = vor.u32 1.1754944e-38, %v801
        %v803 = vsel %vm800, %v802, %v798
        %v804 = vrcp.pop %v694
        %v805 = vmul.f32 %v694, %v804
        %v806 = vsub.f32 1.0, %v805
        %v807 = vmul.f32 %v804, %v806
        %v808 = vadd.f32 %v804, %v807
        %vm809 = vweird.f32 %v694
        %vm810 = vweird.f32 %v804
        %vm811 = vmor %vm809, %vm810
        %v812 = vsel %vm811, %v804, %v808
        %v813 = vand.u32 2147483647, %v694
        %vm814 = vcmp.eq.f32.partialorder %v813, 8.507059e+37
        %v815 = vand.u32 %v694, 2147483648
        %v816 = vor.u32 1.1754944e-38, %v815
        %v817 = vsel %vm814, %v816, %v812
        %v818 = vrcp.pop %v695
        %v819 = vmul.f32 %v695, %v818
        %v820 = vsub.f32 1.0, %v819
        %v821 = vmul.f32 %v818, %v820
        %v822 = vadd.f32 %v818, %v821
        %vm823 = vweird.f32 %v695
        %vm824 = vweird.f32 %v818
        %vm825 = vmor %vm823, %vm824
        %v826 = vsel %vm825, %v818, %v822
        %v827 = vand.u32 2147483647, %v695
        %vm828 = vcmp.eq.f32.partialorder %v827, 8.507059e+37
        %v829 = vand.u32 %v695, 2147483648
        %v830 = vor.u32 1.1754944e-38, %v829
        %v831 = vsel %vm828, %v830, %v826
        %v832 = vrcp.pop %v696
        %v833 = vmul.f32 %v696, %v832
        %v834 = vsub.f32 1.0, %v833
        %v835 = vmul.f32 %v832, %v834
        %v836 = vadd.f32 %v832, %v835
        %vm837 = vweird.f32 %v696
        %vm838 = vweird.f32 %v832
        %vm839 = vmor %vm837, %vm838
        %v840 = vsel %vm839, %v832, %v836
        %v841 = vand.u32 2147483647, %v696
        %vm842 = vcmp.eq.f32.partialorder %v841, 8.507059e+37
        %v843 = vand.u32 %v696, 2147483648
        %v844 = vor.u32 1.1754944e-38, %v843
        %v845 = vsel %vm842, %v844, %v840
        %v846 = vmul.f32 %v786, %v803
        %v847 = vmul.f32 %v787, %v817
        %v848 = vmul.f32 %v788, %v831
        %v849 = vmul.f32 %v789, %v845
        %v850 = vpack.c.bf16 %v846, %v846
        %v851 = vpack.c.bf16 %v847, %v847
        %v852 = vpack.c.bf16 %v848, %v848
        %v853 = vpack.c.bf16 %v849, %v849
        %v854 = vld [vmem:[%s5] sm:$0xf]
        %v855 = vld [vmem:[%s5 + $0x4] sm:$0xf]
        %v856 = vld [vmem:[%s5 + $0x8] sm:$0xf]
        %v857 = vld [vmem:[%s5 + $0xc] sm:$0xf]
        %v859 = vsel %vm549, %v850, 0
        %v862 = vsel %vm706, %v854, 0
        %864 = vmatpush.bf16.msra.mxu0 0
        %865 = vmatpush.bf16.msra.mxu0 0
        %866 = vmatpush.bf16.msra.mxu0 0
        %867 = vmatpush.bf16.msra.mxu0 0
        %868 = vmatpush.bf16.msra.mxu0 0
        %869 = vmatpush.bf16.msra.mxu0 0
        %870 = vmatpush.bf16.msra.mxu0 0
        %871 = vmatpush.bf16.msra.mxu0 %v862
        %872 = vmatmul.bf16.gmra.mxu0 %v859
        %v873 = vpop.f32.mrf.mxu0
        %v874 = vadd.f32 0.0, %v873
        %v875 = vpop.f32.mrf.mxu0
        %876 = vdwg.mxu0
        %v878 = vsel %vm549, %v851, 0
        %v881 = vsel %vm706, %v855, 0
        %883 = vmatpush.bf16.msra.mxu0 0
        %884 = vmatpush.bf16.msra.mxu0 0
        %885 = vmatpush.bf16.msra.mxu0 0
        %886 = vmatpush.bf16.msra.mxu0 0
        %887 = vmatpush.bf16.msra.mxu0 0
        %888 = vmatpush.bf16.msra.mxu0 0
        %889 = vmatpush.bf16.msra.mxu0 0
        %890 = vmatpush.bf16.msra.mxu0 %v881
        %891 = vmatmul.bf16.gmra.mxu0 %v878
        %v892 = vpop.f32.mrf.mxu0
        %v893 = vadd.f32 0.0, %v892
        %v894 = vpop.f32.mrf.mxu0
        %895 = vdwg.mxu0
        %v897 = vsel %vm549, %v852, 0
        %v900 = vsel %vm706, %v856, 0
        %902 = vmatpush.bf16.msra.mxu0 0
        %903 = vmatpush.bf16.msra.mxu0 0
        %904 = vmatpush.bf16.msra.mxu0 0
        %905 = vmatpush.bf16.msra.mxu0 0
        %906 = vmatpush.bf16.msra.mxu0 0
        %907 = vmatpush.bf16.msra.mxu0 0
        %908 = vmatpush.bf16.msra.mxu0 0
        %909 = vmatpush.bf16.msra.mxu0 %v900
        %910 = vmatmul.bf16.gmra.mxu0 %v897
        %v911 = vpop.f32.mrf.mxu0
        %v912 = vadd.f32 0.0, %v911
        %v913 = vpop.f32.mrf.mxu0
        %914 = vdwg.mxu0
        %v916 = vsel %vm549, %v853, 0
        %v919 = vsel %vm706, %v857, 0
        %921 = vmatpush.bf16.msra.mxu0 0
        %922 = vmatpush.bf16.msra.mxu0 0
        %923 = vmatpush.bf16.msra.mxu0 0
        %924 = vmatpush.bf16.msra.mxu0 0
        %925 = vmatpush.bf16.msra.mxu0 0
        %926 = vmatpush.bf16.msra.mxu0 0
        %927 = vmatpush.bf16.msra.mxu0 0
        %928 = vmatpush.bf16.msra.mxu0 %v919
        %929 = vmatmul.bf16.gmra.mxu0 %v916
        %v930 = vpop.f32.mrf.mxu0
        %v931 = vadd.f32 0.0, %v930
        %v932 = vpop.f32.mrf.mxu0
        %933 = vdwg.mxu0
        %v934 = vsel %vm440, %v874, 0.0
        %v935 = vsel %vm440, %v893, 0.0
        %v936 = vadd.f32 %v934, %v935
        %v937 = vsel %vm440, %v912, 0.0
        %v938 = vadd.f32 %v936, %v937
        %v939 = vsel %vm440, %v931, 0.0
        %v940 = vadd.f32 %v938, %v939
        %v941 = vld [vmem:[%s6] sm:$0x1]
        %v943 = vperm.slane %v941, 0
        %v945 = vadd.f32 %v940, %v943
        %v946 = vadd.f32 %v437, %v945
        %v947 = vld [vmem:[%s7] sm:$0x1]
        %v948 = vld [vmem:[%s8] sm:$0x1]
        %v949 = vsel %vm440, %v946, 0.0
        %950 = vadd.xlane.f32.xlu0 %v949
        %v951 = vpop.xlane.xlu0 %950
        %v952 = vmul.f32 %v951, %v450
        %v953 = vsub.f32 %v946, %v952
        %v954 = vmul.f32 %v953, %v953
        %v955 = vsel %vm440, %v954, 0.0
        %956 = vadd.xlane.f32.xlu0 %v955
        %v957 = vpop.xlane.xlu0 %956
        %v958 = vmul.f32 %v957, %v450
        %v959 = vadd.f32 %v958, 1e-05
        %v960 = vrsqrt.pop %v959
        %v961 = vmul.f32 %v960, %v959
        %v962 = vmul.f32 %v961, %v960
        %v963 = vmul.f32 0.5, %v962
        %v964 = vsub.f32 1.5, %v963
        %v965 = vmul.f32 %v960, %v964
        %vm966 = vweird.f32 %v959
        %vm967 = vweird.f32 %v960
        %vm968 = vmor %vm966, %vm967
        %v969 = vsel %vm968, %v960, %v965
        %v970 = vmul.f32 %v953, %v969
        %v972 = vperm.slane %v947, 0
        %v974 = vmul.f32 %v970, %v972
        %v976 = vperm.slane %v948, 0
        %v978 = vadd.f32 %v974, %v976
        %v979 = vpack.c.bf16 %v978, %v978
        %v980 = vld [vmem:[%s9] sm:$0xf]
        %v981 = vld [vmem:[%s9 + $0x4] sm:$0xf]
        %v982 = vld [vmem:[%s9 + $0x8] sm:$0xf]
        %v983 = vld [vmem:[%s9 + $0xc] sm:$0xf]
        %v984 = vld [vmem:[%s10] sm:$0x1]
        %v986 = vperm.slane %v984, 0
        %v992 = vunpack.c.l.b16 %v980
        %v993 = vunpack.c.l.b16 %v981
        %v994 = vunpack.c.l.b16 %v982
        %v995 = vunpack.c.l.b16 %v983
        %v996 = vpack.c.b16 %v993, %v992
        %v997 = vpack.c.b16 %v995, %v994
        %v1001 = vsel %vm440, %v979, 0
        %1003 = vmatpush.bf16.msra.mxu0 0
        %1004 = vmatpush.bf16.msra.mxu0 0
        %1005 = vmatpush.bf16.msra.mxu0 0
        %1006 = vmatpush.bf16.msra.mxu0 0
        %1007 = vmatpush.bf16.msra.mxu0 0
        %1008 = vmatpush.bf16.msra.mxu0 0
        %1009 = vmatpush.bf16.msra.mxu0 %v997
        %1010 = vmatpush.bf16.msra.mxu0 %v996
        %1011 = vmatmul.bf16.gmra.mxu0 %v1001
        %v1012 = vpop.f32.mrf.mxu0
        %v1013 = vadd.f32 %v986, %v1012
        %v1014 = vpop.f32.mrf.mxu0
        %1015 = vdwg.mxu0
        %v1016 = vmul.f32 %v1013, 0.5
        %v1017 = vrcp.pop 1.4142135
        %v1018 = vmul.f32 1.4142135, %v1017
        %v1019 = vsub.f32 1.0, %v1018
        %v1020 = vmul.f32 %v1017, %v1019
        %v1021 = vadd.f32 %v1017, %v1020
        %vm1022 = vweird.f32 %v1017
        %v1023 = vsel %vm1022, %v1017, %v1021
        %v1024 = vmul.f32 %v1013, %v1023
        %v1025 = vmul.f32 %v1024, %v1024
        %v1026 = vmin.f32 16.0, %v1025
        %v1027 = vmul.f32 %v1026, 2.1237322e-06
        %v1028 = vadd.f32 %v1027, 0.00028619796
        %v1029 = vmul.f32 %v1026, %v1028
        %v1030 = vadd.f32 %v1029, 0.0036580483
        %v1031 = vmul.f32 %v1026, %v1030
        %v1032 = vadd.f32 %v1031, 0.05243302
        %v1033 = vmul.f32 %v1026, %v1032
        %v1034 = vadd.f32 %v1033, 0.18741608
        %v1035 = vmul.f32 %v1026, %v1034
        %v1036 = vadd.f32 %v1035, 1.1283791
        %v1037 = vmul.f32 %v1024, %v1036
        %v1038 = vmul.f32 %v1026, 3.8918573e-05
        %v1039 = vadd.f32 %v1038, 0.001143296
        %v1040 = vmul.f32 %v1026, %v1039
        %v1041 = vadd.f32 %v1040, 0.014752088
        %v1042 = vmul.f32 %v1026, %v1041
        %v1043 = vadd.f32 %v1042, 0.112945676
        %v1044 = vmul.f32 %v1026, %v1043
        %v1045 = vadd.f32 %v1044, 0.4994258
        %v1046 = vmul.f32 %v1026, %v1045
        %v1047 = vadd.f32 %v1046, 1.0
        %v1048 = vrcp.pop %v1047
        %v1049 = vmul.f32 %v1047, %v1048
        %v1050 = vsub.f32 1.0, %v1049
        %v1051 = vmul.f32 %v1048, %v1050
        %v1052 = vadd.f32 %v1048, %v1051
        %vm1053 = vweird.f32 %v1047
        %vm1054 = vweird.f32 %v1048
        %vm1055 = vmor %vm1053, %vm1054
        %v1056 = vsel %vm1055, %v1048, %v1052
        %v1057 = vand.u32 2147483647, %v1047
        %vm1058 = vcmp.eq.f32.partialorder %v1057, 8.507059e+37
        %v1059 = vand.u32 %v1047, 2147483648
        %v1060 = vor.u32 1.1754944e-38, %v1059
        %v1061 = vsel %vm1058, %v1060, %v1056
        %v1062 = vmul.f32 %v1037, %v1061
        %v1063 = vmin.f32 %v1062, 1.0
        %v1064 = vmax.f32 %v1063, -1.0
        %v1065 = vadd.f32 %v1064, 1.0
        %v1066 = vmul.f32 %v1016, %v1065
        %v1067 = vpack.c.bf16 %v1066, %v1066
        %v1068 = vld [vmem:[%s11] sm:$0xf]
        %v1069 = vld [vmem:[%s11 + $0x4] sm:$0xf]
        %v1070 = vld [vmem:[%s11 + $0x8] sm:$0xf]
        %v1071 = vld [vmem:[%s11 + $0xc] sm:$0xf]
        %v1072 = vld [vmem:[%s11 + $0x10] sm:$0xf]
        %v1073 = vld [vmem:[%s11 + $0x14] sm:$0xf]
        %v1074 = vld [vmem:[%s11 + $0x18] sm:$0xf]
        %v1075 = vld [vmem:[%s11 + $0x1c] sm:$0xf]
        %v1076 = vld [vmem:[%s11 + $0x20] sm:$0xf]
        %v1077 = vld [vmem:[%s11 + $0x24] sm:$0xf]
        %v1078 = vld [vmem:[%s11 + $0x28] sm:$0xf]
        %v1079 = vld [vmem:[%s11 + $0x2c] sm:$0xf]
        %v1080 = vld [vmem:[%s11 + $0x30] sm:$0xf]
        %v1081 = vld [vmem:[%s11 + $0x34] sm:$0xf]
        %v1082 = vld [vmem:[%s11 + $0x38] sm:$0xf]
        %v1083 = vld [vmem:[%s11 + $0x3c] sm:$0xf]
        %v1084 = vld [vmem:[%s12] sm:$0x1]
        %v1086 = vperm.slane %v1084, 0
        %v1104 = vunpack.c.l.b16 %v1068
        %v1105 = vunpack.c.l.b16 %v1069
        %v1106 = vunpack.c.l.b16 %v1070
        %v1107 = vunpack.c.l.b16 %v1071
        %v1108 = vunpack.c.l.b16 %v1072
        %v1109 = vunpack.c.l.b16 %v1073
        %v1110 = vunpack.c.l.b16 %v1074
        %v1111 = vunpack.c.l.b16 %v1075
        %v1112 = vunpack.c.l.b16 %v1076
        %v1113 = vunpack.c.l.b16 %v1077
        %v1114 = vunpack.c.l.b16 %v1078
        %v1115 = vunpack.c.l.b16 %v1079
        %v1116 = vunpack.c.l.b16 %v1080
        %v1117 = vunpack.c.l.b16 %v1081
        %v1118 = vunpack.c.l.b16 %v1082
        %v1119 = vunpack.c.l.b16 %v1083
        %v1120 = vpack.c.b16 %v1105, %v1104
        %v1121 = vpack.c.b16 %v1107, %v1106
        %v1122 = vpack.c.b16 %v1109, %v1108
        %v1123 = vpack.c.b16 %v1111, %v1110
        %v1124 = vpack.c.b16 %v1113, %v1112
        %v1125 = vpack.c.b16 %v1115, %v1114
        %v1126 = vpack.c.b16 %v1117, %v1116
        %v1127 = vpack.c.b16 %v1119, %v1118
        %1136 = vmatpush.bf16.msra.mxu0 %v1127
        %1137 = vmatpush.bf16.msra.mxu0 %v1126
        %1138 = vmatpush.bf16.msra.mxu0 %v1125
        %1139 = vmatpush.bf16.msra.mxu0 %v1124
        %1140 = vmatpush.bf16.msra.mxu0 %v1123
        %1141 = vmatpush.bf16.msra.mxu0 %v1122
        %1142 = vmatpush.bf16.msra.mxu0 %v1121
        %1143 = vmatpush.bf16.msra.mxu0 %v1120
        %1144 = vmatmul.bf16.gmra.mxu0 %v1067
        %v1145 = vpop.f32.mrf.mxu0
        %v1146 = vadd.f32 %v1086, %v1145
        %v1147 = vpop.f32.mrf.mxu0
        %1148 = vdwg.mxu0
        %v1149 = vadd.f32 %v946, %v1146
        %1150 = vst.msk [vmem:[%s431] sm:$0xff] %vm440, %v1149
        %s1151 = sand.u32 %s313, 1
        %s1152 = scalar_lea.sflag [#allocation3], %s1151
        %s1153 = sand.u32 %s313, 1
        %s1154 = smul.addr %s1153, 8
        %s1155 = scalar_lea.vmem [#allocation2], %s1154
        // Predicated region
        $region73: #{tpu_custom_call.1} parent=71 // pred_check
          %p1156 = pneg %p323
        $region74: #{tpu_custom_call.1} parent=71 // pred_check_branch
          %1158 = sbr.rel (%p1156) target = $region76
        $region75: #{tpu_custom_call.1} parent=71 // pred_region
          %1160 = vsyncadd %s1152, 0
          %s1161 = smul.addr %s27, 8
          %s1162 = scalar_lea.hbm %s13, %s1161
          %s1164 = sshll.u32 %s1155, 4
          %s1165 = int_to_ptr.vmem [resolvable:$true] %s1164
          %s1166 = sshll.u32 %s1162, 4
          %s1167 = int_to_ptr.hbm [resolvable:$true] %s1166
          %1169 = dma.vmem_to_hbm [thread:$0]  %s1165, 128, %s1167, %s1152
        $region76: #{tpu_custom_call.1} parent=71 // pred_fallthru
          _
      $region72: #{tpu_custom_call.1} parent=5 // pred_fallthru
        _
      %p1170 = scmp.le.s32.totalorder 2, %s22
      // Predicated region
      $region77: #{tpu_custom_call.1} parent=5 // pred_check
        %p1171 = pneg %p1170
      $region78: #{tpu_custom_call.1} parent=5 // pred_check_branch
        %1173 = sbr.rel (%p1171) target = $region80
      $region79: #{tpu_custom_call.1} parent=5 // pred_region
        %s1174 = ssub.s32 %s22, 2
        // Predicated region
        $region81: #{tpu_custom_call.1} parent=79 // pred_check
          %p1175 = pneg %p329
        $region82: #{tpu_custom_call.1} parent=79 // pred_check_branch
          %1177 = sbr.rel (%p1175) target = $region84
        $region83: #{tpu_custom_call.1} parent=79 // pred_region
          %s1178 = sand.u32 %s314, 1
          %s1179 = scalar_lea.sflag [#allocation3], %s1178
          %s1180 = sand.u32 %s314, 1
          %s1181 = smul.addr %s1180, 8
          %s1182 = scalar_lea.vmem [#allocation2], %s1181
          %1184 = dma.done %s1179, 128
        $region84: #{tpu_custom_call.1} parent=79 // pred_fallthru
          _
      $region80: #{tpu_custom_call.1} parent=5 // pred_fallthru
        _
    $region6: #{tpu_custom_call.1} parent=1 // loop_footer
      %s26 = sadd.s32 1, %s22
    $region7: #{tpu_custom_call.1} parent=1 // loop_footer_branch
      %21 = sbr.rel target = $region3
    $region8: #{tpu_custom_call.1} parent=1 // loop_exit
      _
    %1185 = vsyncpa [#allocation3], 1
    %s1186 = scalar_lea.sflag [#allocation3], 1
    %1187 = vsyncpa %s1186, 1

</llo_original>
